<compile_context>
chip_gen: v7x
topology: tpu7x:2x2x1
jax: 0.10.0
libtpu: 0.0.40
codegen_flags: <defaults>
</compile_context>

<pallas_src>
import numpy as np
import jax
import jax.numpy as jnp
from jax.experimental import pallas as pl
from jax.experimental.pallas import tpu as pltpu

_LANE = 128      # vreg lane width
_SUBLANE = 8     # vreg sublane count


def _ceil_to(x, m):
    return ((x + m - 1) // m) * m


# ----------------------------- Pallas kernel --------------------------------

def _make_decoder_kernel(num_layers, T, B_pad, H_pad, compute_dtype):
    """Fused: [x@W_ih+b hoisted] -> L-layer LSTM recurrence -> output linear.

    Ref order: x, (w_ih, w_hh, b) * num_layers, w_out, b_out, out_ref,
               seq_scratch (T*B_pad, H_pad) f32, gate_scratch (T*B_pad, 4H_pad) f32.
    """

    def kernel(*refs):
        x_ref = refs[0]
        layer_refs = [(refs[1 + 3 * l], refs[2 + 3 * l], refs[3 + 3 * l])
                      for l in range(num_layers)]
        w_out_ref = refs[1 + 3 * num_layers]
        b_out_ref = refs[2 + 3 * num_layers]
        out_ref = refs[3 + 3 * num_layers]
        seq_scr = refs[4 + 3 * num_layers]
        gate_scr = refs[5 + 3 * num_layers]

        layer_in = x_ref[...]                            # (T*B_pad, IN_pad) bf16
        for w_ih_ref, w_hh_ref, b_ref in layer_refs:
            # (1) Hoisted input projection + bias for ALL timesteps at once:
            #     one big MXU-friendly matmul outside the serial recurrence.
            gate_scr[...] = (
                jnp.dot(layer_in, w_ih_ref[...],
                        preferred_element_type=jnp.float32)
                + b_ref[...])

            # (2) Serial recurrence: only h @ W_hh plus gate elementwise.
            #     h/c live in vregs in f32; only dot operands are bf16.
            h = jnp.zeros((B_pad, H_pad), jnp.float32)
            c = jnp.zeros((B_pad, H_pad), jnp.float32)
            for t in range(T):               # small T: fully unrolled, static slices
                r0 = t * B_pad
                gates = (gate_scr[r0:r0 + B_pad, :]
                         + jnp.dot(h.astype(compute_dtype), w_hh_ref[...],
                                   preferred_element_type=jnp.float32))
                # Each gate occupies its own lane-tile-aligned 128-wide block.
                i = jax.nn.sigmoid(gates[:, 0 * H_pad:1 * H_pad])
                f = jax.nn.sigmoid(gates[:, 1 * H_pad:2 * H_pad])
                g = jnp.tanh(gates[:, 2 * H_pad:3 * H_pad])
                o = jax.nn.sigmoid(gates[:, 3 * H_pad:4 * H_pad])
                c = f * c + i * g
                h = o * jnp.tanh(c)
                seq_scr[r0:r0 + B_pad, :] = h            # lane-dense (8,128) store
            layer_in = seq_scr[...].astype(compute_dtype)

        # (3) Fused output linear over all T*B rows; single lane-dense store.
        out_ref[...] = (
            jnp.dot(layer_in, w_out_ref[...], preferred_element_type=jnp.float32)
            + b_out_ref[...])

    return kernel


# -------------------------- parameter preparation ---------------------------

def _pad_gate_axis(w, H, H_pad):
    """(..., 4H) -> (..., 4*H_pad); gate k's real cols land at [k*H_pad, k*H_pad+H)."""
    blocks = []
    for k in range(4):
        blk = w[..., k * H:(k + 1) * H]
        blk = jnp.pad(blk, [(0, 0)] * (w.ndim - 1) + [(0, H_pad - H)])
        blocks.append(blk)
    return jnp.concatenate(blocks, axis=-1)


def _pad_axis0(w, n_pad):
    return jnp.pad(w, [(0, n_pad - w.shape[0])] + [(0, 0)] * (w.ndim - 1))


def prepare_decoder_params(params, compute_dtype=jnp.bfloat16):
    """Pad + lane-align gates + cast matmul weights to the MXU compute dtype.

    In production this would be done once at load time, not per call.
    """
    H = params["lstm"][0][1].shape[0]            # w_hh_t: (H, 4H)
    V = params["w_out_t"].shape[1]
    IN0 = params["lstm"][0][0].shape[0]
    H_pad = _ceil_to(H, _LANE)
    V_pad = _ceil_to(V, _LANE)
    IN0_pad = _ceil_to(IN0, _LANE)

    lstm = []
    for l, (w_ih_t, w_hh_t, b) in enumerate(params["lstm"]):
        in_pad = IN0_pad if l == 0 else H_pad
        w_ih = _pad_axis0(_pad_gate_axis(w_ih_t, H, H_pad), in_pad).astype(compute_dtype)
        w_hh = _pad_axis0(_pad_gate_axis(w_hh_t, H, H_pad), H_pad).astype(compute_dtype)
        b_p = _pad_gate_axis(b.reshape(1, -1), H, H_pad).astype(jnp.float32)
        lstm.append((w_ih, w_hh, b_p))

    w_out = jnp.pad(params["w_out_t"],
                    [(0, H_pad - H), (0, V_pad - V)]).astype(compute_dtype)
    b_out = jnp.pad(params["b_out"].reshape(1, -1),
                    [(0, 0), (0, V_pad - V)]).astype(jnp.float32)

    dims = dict(H=H, H_pad=H_pad, V=V, V_pad=V_pad, IN0=IN0, IN0_pad=IN0_pad)
    return {"lstm": lstm, "w_out": w_out, "b_out": b_out, "dims": dims}


# ------------------------------ Model wrapper --------------------------------

def packed_indices(lengths):
    """Row order produced by pack_padded_sequence(batch_first=True).

    Assumes lengths sorted descending (PyTorch default enforce_sorted=True).
    """
    t_idx, b_idx = [], []
    for t in range(max(lengths)):
        for b, L in enumerate(lengths):
            if L > t:
                t_idx.append(t)
                b_idx.append(b)
    return np.asarray(t_idx, np.int32), np.asarray(b_idx, np.int32)


def decoder_forward(params, features, poses_ids, homography, poses2, lengths,
                    compute_dtype=jnp.bfloat16):
    prep = prepare_decoder_params(params, compute_dtype)
    dims = prep["dims"]
    H_pad, V_pad, V = dims["H_pad"], dims["V_pad"], dims["V"]
    IN0_pad = dims["IN0_pad"]

    B, T = poses_ids.shape
    B_pad = _ceil_to(max(B, _SUBLANE), _SUBLANE)

    # ---- glue (plain JAX): embedding gather, t=0 zeroing, concatenation ----
    emb = params["embed"][poses_ids]                       # (B, T, E)
    emb = emb.at[:, 0, :].set(0.0)                         # poses[:, 0, :] = 0
    embeddings = jnp.concatenate([emb, features, homography, poses2], axis=2)
    assert embeddings.shape[2] == dims["IN0"]

    # time-major, pad batch -> sublane multiple, features -> lane multiple
    x = jnp.transpose(embeddings, (1, 0, 2)).astype(jnp.float32)   # (T, B, IN)
    x = jnp.pad(x, [(0, 0), (0, B_pad - B), (0, IN0_pad - embeddings.shape[2])])
    x = x.reshape(T * B_pad, IN0_pad).astype(compute_dtype)

    # --------------------------- fused Pallas kernel -------------------------
    num_layers = len(prep["lstm"])
    kernel = _make_decoder_kernel(num_layers, T, B_pad, H_pad, compute_dtype)
    args = [x]
    for (w_ih, w_hh, b) in prep["lstm"]:
        args += [w_ih, w_hh, b]
    args += [prep["w_out"], prep["b_out"]]

    logits = pl.pallas_call(
        kernel,
        out_shape=jax.ShapeDtypeStruct((T * B_pad, V_pad), jnp.float32),
        scratch_shapes=[
            pltpu.VMEM((T * B_pad, H_pad), jnp.float32),       # per-layer hidden seq
            pltpu.VMEM((T * B_pad, 4 * H_pad), jnp.float32),   # hoisted x@W_ih + b
        ],
        compiler_params=pltpu.CompilerParams(
            vmem_limit_bytes=32 * 1024 * 1024),
    )(*args)

    # ------- pack_padded_sequence row ordering + drop padding (glue) ---------
    t_idx, b_idx = packed_indices(lengths)
    flat = jnp.asarray(t_idx, jnp.int32) * B_pad + jnp.asarray(b_idx, jnp.int32)
    return logits[flat][:, :V]


# ------------------------------ Pure-JAX reference ---------------------------

def _lstm_layer_ref(x_seq, w_ih_t, w_hh_t, b):
    T, B, _ = x_seq.shape
    H = w_hh_t.shape[0]

    def step(carry, xt):
        h, c = carry
        gates = xt @ w_ih_t + h @ w_hh_t + b
        i = jax.nn.sigmoid(gates[:, :H])
        f = jax.nn.sigmoid(gates[:, H:2 * H])
        g = jnp.tanh(gates[:, 2 * H:3 * H])
        o = jax.nn.sigmoid(gates[:, 3 * H:])
        c = f * c + i * g
        h = o * jnp.tanh(c)
        return (h, c), h

    init = (jnp.zeros((B, H), jnp.float32), jnp.zeros((B, H), jnp.float32))
    _, hs = jax.lax.scan(step, init, x_seq)
    return hs


def decoder_forward_ref(params, features, poses_ids, homography, poses2, lengths):
    emb = params["embed"][poses_ids]
    emb = emb.at[:, 0, :].set(0.0)
    embeddings = jnp.concatenate([emb, features, homography, poses2], axis=2)
    x = jnp.transpose(embeddings, (1, 0, 2)).astype(jnp.float32)
    for (w_ih_t, w_hh_t, b) in params["lstm"]:
        x = _lstm_layer_ref(x, w_ih_t, w_hh_t, b)
    t_idx, b_idx = packed_indices(lengths)
    packed_h = x[t_idx, b_idx]
    return packed_h @ params["w_out_t"] + params["b_out"]


# ----------------------------------- Main ------------------------------------

if __name__ == "__main__":
    # Small but shape-consistent config.
    embed_size = 16
    hidden_size = 32
    vocab_size = 48
    num_layers = 2
    num_homog = 3
    homog_size = 3         # homography feature dim = 9
    pose2_size = 7
    lstm_in = embed_size * 2 + homog_size * num_homog + pose2_size   # 48

    B, T = 2, 8
    lengths = [8, 5]       # descending, as pack_padded_sequence requires

    key = jax.random.PRNGKey(0)
    keys = jax.random.split(key, 16)

    scale = 0.1
    params = {
        "embed": scale * jax.random.normal(keys[0], (vocab_size, embed_size), jnp.float32),
        "lstm": [],
        "w_out_t": scale * jax.random.normal(keys[1], (hidden_size, vocab_size), jnp.float32),
        "b_out": scale * jax.random.normal(keys[2], (vocab_size,), jnp.float32),
    }
    for layer in range(num_layers):
        in_sz = lstm_in if layer == 0 else hidden_size
        k0, k1, k2, k3 = jax.random.split(keys[3 + layer], 4)
        w_ih_t = scale * jax.random.normal(k0, (in_sz, 4 * hidden_size), jnp.float32)
        w_hh_t = scale * jax.random.normal(k1, (hidden_size, 4 * hidden_size), jnp.float32)
        # PyTorch has separate b_ih / b_hh; always summed -> fold together.
        b = scale * (jax.random.normal(k2, (1, 4 * hidden_size), jnp.float32)
                     + jax.random.normal(k3, (1, 4 * hidden_size), jnp.float32))
        params["lstm"].append((w_ih_t, w_hh_t, b))

    features = jax.random.normal(keys[8], (B, T, embed_size), jnp.float32)
    poses_ids = jax.random.randint(keys[9], (B, T), 0, vocab_size)
    homography = jax.random.normal(keys[10], (B, T, homog_size * num_homog), jnp.float32)
    poses2 = jax.random.normal(keys[11], (B, T, pose2_size), jnp.float32)

    out = decoder_forward(params, features, poses_ids, homography, poses2, lengths)
    out = jax.block_until_ready(out)

    ref = decoder_forward_ref(params, features, poses_ids, homography, poses2, lengths)
    ref = jax.block_until_ready(ref)

    assert out.shape == (sum(lengths), vocab_size), out.shape
    # bf16 MXU operands vs f32 reference -> slightly relaxed tolerance.
    np.testing.assert_allclose(np.asarray(out), np.asarray(ref), rtol=2e-2, atol=2e-2)

    print("KERNEL_OK")
</pallas_src>

<mosaic_0001>
module attributes {stable_mosaic.version = 11 : i64} {
  func.func @kernel(%arg0: memref<64x128xbf16, #tpu.memory_space<vmem>>, %arg1: memref<128x512xbf16, #tpu.memory_space<vmem>>, %arg2: memref<128x512xbf16, #tpu.memory_space<vmem>>, %arg3: memref<1x512xf32, #tpu.memory_space<vmem>>, %arg4: memref<128x512xbf16, #tpu.memory_space<vmem>>, %arg5: memref<128x512xbf16, #tpu.memory_space<vmem>>, %arg6: memref<1x512xf32, #tpu.memory_space<vmem>>, %arg7: memref<128x128xbf16, #tpu.memory_space<vmem>>, %arg8: memref<1x128xf32, #tpu.memory_space<vmem>>, %arg9: memref<64x128xf32, #tpu.memory_space<vmem>>, %arg10: memref<64x128xf32, #tpu.memory_space<vmem>>, %arg11: memref<64x512xf32, #tpu.memory_space<vmem>>) attributes {dimension_semantics = [], scalar_prefetch = 0 : i64, scratch_operands = 2 : i64, tpu.core_type = #tpu.core_type<tc>} {
    %c0 = arith.constant 0 : index
    %c0_0 = arith.constant 0 : index
    %0 = vector.load %arg0[%c0, %c0_0] : memref<64x128xbf16, #tpu.memory_space<vmem>>, vector<64x128xbf16>
    %c0_1 = arith.constant 0 : index
    %c0_2 = arith.constant 0 : index
    %1 = vector.load %arg1[%c0_1, %c0_2] : memref<128x512xbf16, #tpu.memory_space<vmem>>, vector<128x512xbf16>
    %cst = arith.constant dense<0.000000e+00> : vector<64x512xf32>
    %2 = tpu.matmul %0, %1, %cst {dimension_numbers = #tpu.dot_dimension_numbers<[1], [0], [0], [1], [0, 0, 1, 1], [], []>} : vector<64x128xbf16>, vector<128x512xbf16>, vector<64x512xf32> -> vector<64x512xf32>
    %c0_3 = arith.constant 0 : index
    %c0_4 = arith.constant 0 : index
    %3 = vector.load %arg3[%c0_3, %c0_4] : memref<1x512xf32, #tpu.memory_space<vmem>>, vector<1x512xf32>
    %4 = vector.broadcast %3 : vector<1x512xf32> to vector<64x512xf32>
    %5 = arith.addf %2, %4 : vector<64x512xf32>
    %c0_5 = arith.constant 0 : index
    %c0_6 = arith.constant 0 : index
    %6 = vector.load %arg11[%c0_5, %c0_6] : memref<64x512xf32, #tpu.memory_space<vmem>>, vector<64x512xf32>
    tpu.vector_store %arg11[%c0_5, %c0_6], %5 {strides = array<i32>} : memref<64x512xf32, #tpu.memory_space<vmem>>, vector<64x512xf32>,
    %cst_7 = arith.constant 0.000000e+00 : f32
    %7 = vector.broadcast %cst_7 : f32 to vector<8x128xf32>
    %cst_8 = arith.constant 0.000000e+00 : f32
    %8 = vector.broadcast %cst_8 : f32 to vector<8x128xf32>
    %c0_9 = arith.constant 0 : index
    %c0_10 = arith.constant 0 : index
    %9 = vector.load %arg11[%c0_9, %c0_10] : memref<64x512xf32, #tpu.memory_space<vmem>>, vector<8x512xf32>
    %10 = arith.truncf %7 : vector<8x128xf32> to vector<8x128xbf16>
    %c0_11 = arith.constant 0 : index
    %c0_12 = arith.constant 0 : index
    %11 = vector.load %arg2[%c0_11, %c0_12] : memref<128x512xbf16, #tpu.memory_space<vmem>>, vector<128x512xbf16>
    %cst_13 = arith.constant dense<0.000000e+00> : vector<8x512xf32>
    %12 = tpu.matmul %10, %11, %cst_13 {dimension_numbers = #tpu.dot_dimension_numbers<[1], [0], [0], [1], [0, 0, 1, 1], [], []>} : vector<8x128xbf16>, vector<128x512xbf16>, vector<8x512xf32> -> vector<8x512xf32>
    %13 = arith.addf %9, %12 : vector<8x512xf32>
    %14 = vector.extract_strided_slice %13 {offsets = [0, 0], sizes = [8, 128], strides = [1, 1]} : vector<8x512xf32> to vector<8x128xf32>
    %15 = arith.negf %14 : vector<8x128xf32>
    %16 = math.exp %15 : vector<8x128xf32>
    %cst_14 = arith.constant 1.000000e+00 : f32
    %17 = vector.broadcast %cst_14 : f32 to vector<8x128xf32>
    %18 = arith.addf %17, %16 : vector<8x128xf32>
    %19 = arith.divf %17, %18 : vector<8x128xf32>
    %20 = vector.extract_strided_slice %13 {offsets = [0, 128], sizes = [8, 128], strides = [1, 1]} : vector<8x512xf32> to vector<8x128xf32>
    %21 = arith.negf %20 : vector<8x128xf32>
    %22 = math.exp %21 : vector<8x128xf32>
    %cst_15 = arith.constant 1.000000e+00 : f32
    %23 = vector.broadcast %cst_15 : f32 to vector<8x128xf32>
    %24 = arith.addf %23, %22 : vector<8x128xf32>
    %25 = arith.divf %23, %24 : vector<8x128xf32>
    %26 = vector.extract_strided_slice %13 {offsets = [0, 256], sizes = [8, 128], strides = [1, 1]} : vector<8x512xf32> to vector<8x128xf32>
    %27 = math.tanh %26 : vector<8x128xf32>
    %28 = vector.extract_strided_slice %13 {offsets = [0, 384], sizes = [8, 128], strides = [1, 1]} : vector<8x512xf32> to vector<8x128xf32>
    %29 = arith.negf %28 : vector<8x128xf32>
    %30 = math.exp %29 : vector<8x128xf32>
    %cst_16 = arith.constant 1.000000e+00 : f32
    %31 = vector.broadcast %cst_16 : f32 to vector<8x128xf32>
    %32 = arith.addf %31, %30 : vector<8x128xf32>
    %33 = arith.divf %31, %32 : vector<8x128xf32>
    %34 = arith.mulf %25, %8 : vector<8x128xf32>
    %35 = arith.mulf %19, %27 : vector<8x128xf32>
    %36 = arith.addf %34, %35 : vector<8x128xf32>
    %37 = math.tanh %36 : vector<8x128xf32>
    %38 = arith.mulf %33, %37 : vector<8x128xf32>
    %c0_17 = arith.constant 0 : index
    %c0_18 = arith.constant 0 : index
    %39 = vector.load %arg10[%c0_17, %c0_18] : memref<64x128xf32, #tpu.memory_space<vmem>>, vector<8x128xf32>
    tpu.vector_store %arg10[%c0_17, %c0_18], %38 {strides = array<i32>} : memref<64x128xf32, #tpu.memory_space<vmem>>, vector<8x128xf32>,
    %c8 = arith.constant 8 : index
    %c0_19 = arith.constant 0 : index
    %40 = vector.load %arg11[%c8, %c0_19] : memref<64x512xf32, #tpu.memory_space<vmem>>, vector<8x512xf32>
    %41 = arith.truncf %38 : vector<8x128xf32> to vector<8x128xbf16>
    %c0_20 = arith.constant 0 : index
    %c0_21 = arith.constant 0 : index
    %42 = vector.load %arg2[%c0_20, %c0_21] : memref<128x512xbf16, #tpu.memory_space<vmem>>, vector<128x512xbf16>
    %cst_22 = arith.constant dense<0.000000e+00> : vector<8x512xf32>
    %43 = tpu.matmul %41, %42, %cst_22 {dimension_numbers = #tpu.dot_dimension_numbers<[1], [0], [0], [1], [0, 0, 1, 1], [], []>} : vector<8x128xbf16>, vector<128x512xbf16>, vector<8x512xf32> -> vector<8x512xf32>
    %44 = arith.addf %40, %43 : vector<8x512xf32>
    %45 = vector.extract_strided_slice %44 {offsets = [0, 0], sizes = [8, 128], strides = [1, 1]} : vector<8x512xf32> to vector<8x128xf32>
    %46 = arith.negf %45 : vector<8x128xf32>
    %47 = math.exp %46 : vector<8x128xf32>
    %cst_23 = arith.constant 1.000000e+00 : f32
    %48 = vector.broadcast %cst_23 : f32 to vector<8x128xf32>
    %49 = arith.addf %48, %47 : vector<8x128xf32>
    %50 = arith.divf %48, %49 : vector<8x128xf32>
    %51 = vector.extract_strided_slice %44 {offsets = [0, 128], sizes = [8, 128], strides = [1, 1]} : vector<8x512xf32> to vector<8x128xf32>
    %52 = arith.negf %51 : vector<8x128xf32>
    %53 = math.exp %52 : vector<8x128xf32>
    %cst_24 = arith.constant 1.000000e+00 : f32
    %54 = vector.broadcast %cst_24 : f32 to vector<8x128xf32>
    %55 = arith.addf %54, %53 : vector<8x128xf32>
    %56 = arith.divf %54, %55 : vector<8x128xf32>
    %57 = vector.extract_strided_slice %44 {offsets = [0, 256], sizes = [8, 128], strides = [1, 1]} : vector<8x512xf32> to vector<8x128xf32>
    %58 = math.tanh %57 : vector<8x128xf32>
    %59 = vector.extract_strided_slice %44 {offsets = [0, 384], sizes = [8, 128], strides = [1, 1]} : vector<8x512xf32> to vector<8x128xf32>
    %60 = arith.negf %59 : vector<8x128xf32>
    %61 = math.exp %60 : vector<8x128xf32>
    %cst_25 = arith.constant 1.000000e+00 : f32
    %62 = vector.broadcast %cst_25 : f32 to vector<8x128xf32>
    %63 = arith.addf %62, %61 : vector<8x128xf32>
    %64 = arith.divf %62, %63 : vector<8x128xf32>
    %65 = arith.mulf %56, %36 : vector<8x128xf32>
    %66 = arith.mulf %50, %58 : vector<8x128xf32>
    %67 = arith.addf %65, %66 : vector<8x128xf32>
    %68 = math.tanh %67 : vector<8x128xf32>
    %69 = arith.mulf %64, %68 : vector<8x128xf32>
    %c8_26 = arith.constant 8 : index
    %c0_27 = arith.constant 0 : index
    %70 = vector.load %arg10[%c8_26, %c0_27] : memref<64x128xf32, #tpu.memory_space<vmem>>, vector<8x128xf32>
    tpu.vector_store %arg10[%c8_26, %c0_27], %69 {strides = array<i32>} : memref<64x128xf32, #tpu.memory_space<vmem>>, vector<8x128xf32>,
    %c16 = arith.constant 16 : index
    %c0_28 = arith.constant 0 : index
    %71 = vector.load %arg11[%c16, %c0_28] : memref<64x512xf32, #tpu.memory_space<vmem>>, vector<8x512xf32>
    %72 = arith.truncf %69 : vector<8x128xf32> to vector<8x128xbf16>
    %c0_29 = arith.constant 0 : index
    %c0_30 = arith.constant 0 : index
    %73 = vector.load %arg2[%c0_29, %c0_30] : memref<128x512xbf16, #tpu.memory_space<vmem>>, vector<128x512xbf16>
    %cst_31 = arith.constant dense<0.000000e+00> : vector<8x512xf32>
    %74 = tpu.matmul %72, %73, %cst_31 {dimension_numbers = #tpu.dot_dimension_numbers<[1], [0], [0], [1], [0, 0, 1, 1], [], []>} : vector<8x128xbf16>, vector<128x512xbf16>, vector<8x512xf32> -> vector<8x512xf32>
    %75 = arith.addf %71, %74 : vector<8x512xf32>
    %76 = vector.extract_strided_slice %75 {offsets = [0, 0], sizes = [8, 128], strides = [1, 1]} : vector<8x512xf32> to vector<8x128xf32>
    %77 = arith.negf %76 : vector<8x128xf32>
    %78 = math.exp %77 : vector<8x128xf32>
    %cst_32 = arith.constant 1.000000e+00 : f32
    %79 = vector.broadcast %cst_32 : f32 to vector<8x128xf32>
    %80 = arith.addf %79, %78 : vector<8x128xf32>
    %81 = arith.divf %79, %80 : vector<8x128xf32>
    %82 = vector.extract_strided_slice %75 {offsets = [0, 128], sizes = [8, 128], strides = [1, 1]} : vector<8x512xf32> to vector<8x128xf32>
    %83 = arith.negf %82 : vector<8x128xf32>
    %84 = math.exp %83 : vector<8x128xf32>
    %cst_33 = arith.constant 1.000000e+00 : f32
    %85 = vector.broadcast %cst_33 : f32 to vector<8x128xf32>
    %86 = arith.addf %85, %84 : vector<8x128xf32>
    %87 = arith.divf %85, %86 : vector<8x128xf32>
    %88 = vector.extract_strided_slice %75 {offsets = [0, 256], sizes = [8, 128], strides = [1, 1]} : vector<8x512xf32> to vector<8x128xf32>
    %89 = math.tanh %88 : vector<8x128xf32>
    %90 = vector.extract_strided_slice %75 {offsets = [0, 384], sizes = [8, 128], strides = [1, 1]} : vector<8x512xf32> to vector<8x128xf32>
    %91 = arith.negf %90 : vector<8x128xf32>
    %92 = math.exp %91 : vector<8x128xf32>
    %cst_34 = arith.constant 1.000000e+00 : f32
    %93 = vector.broadcast %cst_34 : f32 to vector<8x128xf32>
    %94 = arith.addf %93, %92 : vector<8x128xf32>
    %95 = arith.divf %93, %94 : vector<8x128xf32>
    %96 = arith.mulf %87, %67 : vector<8x128xf32>
    %97 = arith.mulf %81, %89 : vector<8x128xf32>
    %98 = arith.addf %96, %97 : vector<8x128xf32>
    %99 = math.tanh %98 : vector<8x128xf32>
    %100 = arith.mulf %95, %99 : vector<8x128xf32>
    %c16_35 = arith.constant 16 : index
    %c0_36 = arith.constant 0 : index
    %101 = vector.load %arg10[%c16_35, %c0_36] : memref<64x128xf32, #tpu.memory_space<vmem>>, vector<8x128xf32>
    tpu.vector_store %arg10[%c16_35, %c0_36], %100 {strides = array<i32>} : memref<64x128xf32, #tpu.memory_space<vmem>>, vector<8x128xf32>,
    %c24 = arith.constant 24 : index
    %c0_37 = arith.constant 0 : index
    %102 = vector.load %arg11[%c24, %c0_37] : memref<64x512xf32, #tpu.memory_space<vmem>>, vector<8x512xf32>
    %103 = arith.truncf %100 : vector<8x128xf32> to vector<8x128xbf16>
    %c0_38 = arith.constant 0 : index
    %c0_39 = arith.constant 0 : index
    %104 = vector.load %arg2[%c0_38, %c0_39] : memref<128x512xbf16, #tpu.memory_space<vmem>>, vector<128x512xbf16>
    %cst_40 = arith.constant dense<0.000000e+00> : vector<8x512xf32>
    %105 = tpu.matmul %103, %104, %cst_40 {dimension_numbers = #tpu.dot_dimension_numbers<[1], [0], [0], [1], [0, 0, 1, 1], [], []>} : vector<8x128xbf16>, vector<128x512xbf16>, vector<8x512xf32> -> vector<8x512xf32>
    %106 = arith.addf %102, %105 : vector<8x512xf32>
    %107 = vector.extract_strided_slice %106 {offsets = [0, 0], sizes = [8, 128], strides = [1, 1]} : vector<8x512xf32> to vector<8x128xf32>
    %108 = arith.negf %107 : vector<8x128xf32>
    %109 = math.exp %108 : vector<8x128xf32>
    %cst_41 = arith.constant 1.000000e+00 : f32
    %110 = vector.broadcast %cst_41 : f32 to vector<8x128xf32>
    %111 = arith.addf %110, %109 : vector<8x128xf32>
    %112 = arith.divf %110, %111 : vector<8x128xf32>
    %113 = vector.extract_strided_slice %106 {offsets = [0, 128], sizes = [8, 128], strides = [1, 1]} : vector<8x512xf32> to vector<8x128xf32>
    %114 = arith.negf %113 : vector<8x128xf32>
    %115 = math.exp %114 : vector<8x128xf32>
    %cst_42 = arith.constant 1.000000e+00 : f32
    %116 = vector.broadcast %cst_42 : f32 to vector<8x128xf32>
    %117 = arith.addf %116, %115 : vector<8x128xf32>
    %118 = arith.divf %116, %117 : vector<8x128xf32>
    %119 = vector.extract_strided_slice %106 {offsets = [0, 256], sizes = [8, 128], strides = [1, 1]} : vector<8x512xf32> to vector<8x128xf32>
    %120 = math.tanh %119 : vector<8x128xf32>
    %121 = vector.extract_strided_slice %106 {offsets = [0, 384], sizes = [8, 128], strides = [1, 1]} : vector<8x512xf32> to vector<8x128xf32>
    %122 = arith.negf %121 : vector<8x128xf32>
    %123 = math.exp %122 : vector<8x128xf32>
    %cst_43 = arith.constant 1.000000e+00 : f32
    %124 = vector.broadcast %cst_43 : f32 to vector<8x128xf32>
    %125 = arith.addf %124, %123 : vector<8x128xf32>
    %126 = arith.divf %124, %125 : vector<8x128xf32>
    %127 = arith.mulf %118, %98 : vector<8x128xf32>
    %128 = arith.mulf %112, %120 : vector<8x128xf32>
    %129 = arith.addf %127, %128 : vector<8x128xf32>
    %130 = math.tanh %129 : vector<8x128xf32>
    %131 = arith.mulf %126, %130 : vector<8x128xf32>
    %c24_44 = arith.constant 24 : index
    %c0_45 = arith.constant 0 : index
    %132 = vector.load %arg10[%c24_44, %c0_45] : memref<64x128xf32, #tpu.memory_space<vmem>>, vector<8x128xf32>
    tpu.vector_store %arg10[%c24_44, %c0_45], %131 {strides = array<i32>} : memref<64x128xf32, #tpu.memory_space<vmem>>, vector<8x128xf32>,
    %c32 = arith.constant 32 : index
    %c0_46 = arith.constant 0 : index
    %133 = vector.load %arg11[%c32, %c0_46] : memref<64x512xf32, #tpu.memory_space<vmem>>, vector<8x512xf32>
    %134 = arith.truncf %131 : vector<8x128xf32> to vector<8x128xbf16>
    %c0_47 = arith.constant 0 : index
    %c0_48 = arith.constant 0 : index
    %135 = vector.load %arg2[%c0_47, %c0_48] : memref<128x512xbf16, #tpu.memory_space<vmem>>, vector<128x512xbf16>
    %cst_49 = arith.constant dense<0.000000e+00> : vector<8x512xf32>
    %136 = tpu.matmul %134, %135, %cst_49 {dimension_numbers = #tpu.dot_dimension_numbers<[1], [0], [0], [1], [0, 0, 1, 1], [], []>} : vector<8x128xbf16>, vector<128x512xbf16>, vector<8x512xf32> -> vector<8x512xf32>
    %137 = arith.addf %133, %136 : vector<8x512xf32>
    %138 = vector.extract_strided_slice %137 {offsets = [0, 0], sizes = [8, 128], strides = [1, 1]} : vector<8x512xf32> to vector<8x128xf32>
    %139 = arith.negf %138 : vector<8x128xf32>
    %140 = math.exp %139 : vector<8x128xf32>
    %cst_50 = arith.constant 1.000000e+00 : f32
    %141 = vector.broadcast %cst_50 : f32 to vector<8x128xf32>
    %142 = arith.addf %141, %140 : vector<8x128xf32>
    %143 = arith.divf %141, %142 : vector<8x128xf32>
    %144 = vector.extract_strided_slice %137 {offsets = [0, 128], sizes = [8, 128], strides = [1, 1]} : vector<8x512xf32> to vector<8x128xf32>
    %145 = arith.negf %144 : vector<8x128xf32>
    %146 = math.exp %145 : vector<8x128xf32>
    %cst_51 = arith.constant 1.000000e+00 : f32
    %147 = vector.broadcast %cst_51 : f32 to vector<8x128xf32>
    %148 = arith.addf %147, %146 : vector<8x128xf32>
    %149 = arith.divf %147, %148 : vector<8x128xf32>
    %150 = vector.extract_strided_slice %137 {offsets = [0, 256], sizes = [8, 128], strides = [1, 1]} : vector<8x512xf32> to vector<8x128xf32>
    %151 = math.tanh %150 : vector<8x128xf32>
    %152 = vector.extract_strided_slice %137 {offsets = [0, 384], sizes = [8, 128], strides = [1, 1]} : vector<8x512xf32> to vector<8x128xf32>
    %153 = arith.negf %152 : vector<8x128xf32>
    %154 = math.exp %153 : vector<8x128xf32>
    %cst_52 = arith.constant 1.000000e+00 : f32
    %155 = vector.broadcast %cst_52 : f32 to vector<8x128xf32>
    %156 = arith.addf %155, %154 : vector<8x128xf32>
    %157 = arith.divf %155, %156 : vector<8x128xf32>
    %158 = arith.mulf %149, %129 : vector<8x128xf32>
    %159 = arith.mulf %143, %151 : vector<8x128xf32>
    %160 = arith.addf %158, %159 : vector<8x128xf32>
    %161 = math.tanh %160 : vector<8x128xf32>
    %162 = arith.mulf %157, %161 : vector<8x128xf32>
    %c32_53 = arith.constant 32 : index
    %c0_54 = arith.constant 0 : index
    %163 = vector.load %arg10[%c32_53, %c0_54] : memref<64x128xf32, #tpu.memory_space<vmem>>, vector<8x128xf32>
    tpu.vector_store %arg10[%c32_53, %c0_54], %162 {strides = array<i32>} : memref<64x128xf32, #tpu.memory_space<vmem>>, vector<8x128xf32>,
    %c40 = arith.constant 40 : index
    %c0_55 = arith.constant 0 : index
    %164 = vector.load %arg11[%c40, %c0_55] : memref<64x512xf32, #tpu.memory_space<vmem>>, vector<8x512xf32>
    %165 = arith.truncf %162 : vector<8x128xf32> to vector<8x128xbf16>
    %c0_56 = arith.constant 0 : index
    %c0_57 = arith.constant 0 : index
    %166 = vector.load %arg2[%c0_56, %c0_57] : memref<128x512xbf16, #tpu.memory_space<vmem>>, vector<128x512xbf16>
    %cst_58 = arith.constant dense<0.000000e+00> : vector<8x512xf32>
    %167 = tpu.matmul %165, %166, %cst_58 {dimension_numbers = #tpu.dot_dimension_numbers<[1], [0], [0], [1], [0, 0, 1, 1], [], []>} : vector<8x128xbf16>, vector<128x512xbf16>, vector<8x512xf32> -> vector<8x512xf32>
    %168 = arith.addf %164, %167 : vector<8x512xf32>
    %169 = vector.extract_strided_slice %168 {offsets = [0, 0], sizes = [8, 128], strides = [1, 1]} : vector<8x512xf32> to vector<8x128xf32>
    %170 = arith.negf %169 : vector<8x128xf32>
    %171 = math.exp %170 : vector<8x128xf32>
    %cst_59 = arith.constant 1.000000e+00 : f32
    %172 = vector.broadcast %cst_59 : f32 to vector<8x128xf32>
    %173 = arith.addf %172, %171 : vector<8x128xf32>
    %174 = arith.divf %172, %173 : vector<8x128xf32>
    %175 = vector.extract_strided_slice %168 {offsets = [0, 128], sizes = [8, 128], strides = [1, 1]} : vector<8x512xf32> to vector<8x128xf32>
    %176 = arith.negf %175 : vector<8x128xf32>
    %177 = math.exp %176 : vector<8x128xf32>
    %cst_60 = arith.constant 1.000000e+00 : f32
    %178 = vector.broadcast %cst_60 : f32 to vector<8x128xf32>
    %179 = arith.addf %178, %177 : vector<8x128xf32>
    %180 = arith.divf %178, %179 : vector<8x128xf32>
    %181 = vector.extract_strided_slice %168 {offsets = [0, 256], sizes = [8, 128], strides = [1, 1]} : vector<8x512xf32> to vector<8x128xf32>
    %182 = math.tanh %181 : vector<8x128xf32>
    %183 = vector.extract_strided_slice %168 {offsets = [0, 384], sizes = [8, 128], strides = [1, 1]} : vector<8x512xf32> to vector<8x128xf32>
    %184 = arith.negf %183 : vector<8x128xf32>
    %185 = math.exp %184 : vector<8x128xf32>
    %cst_61 = arith.constant 1.000000e+00 : f32
    %186 = vector.broadcast %cst_61 : f32 to vector<8x128xf32>
    %187 = arith.addf %186, %185 : vector<8x128xf32>
    %188 = arith.divf %186, %187 : vector<8x128xf32>
    %189 = arith.mulf %180, %160 : vector<8x128xf32>
    %190 = arith.mulf %174, %182 : vector<8x128xf32>
    %191 = arith.addf %189, %190 : vector<8x128xf32>
    %192 = math.tanh %191 : vector<8x128xf32>
    %193 = arith.mulf %188, %192 : vector<8x128xf32>
    %c40_62 = arith.constant 40 : index
    %c0_63 = arith.constant 0 : index
    %194 = vector.load %arg10[%c40_62, %c0_63] : memref<64x128xf32, #tpu.memory_space<vmem>>, vector<8x128xf32>
    tpu.vector_store %arg10[%c40_62, %c0_63], %193 {strides = array<i32>} : memref<64x128xf32, #tpu.memory_space<vmem>>, vector<8x128xf32>,
    %c48 = arith.constant 48 : index
    %c0_64 = arith.constant 0 : index
    %195 = vector.load %arg11[%c48, %c0_64] : memref<64x512xf32, #tpu.memory_space<vmem>>, vector<8x512xf32>
    %196 = arith.truncf %193 : vector<8x128xf32> to vector<8x128xbf16>
    %c0_65 = arith.constant 0 : index
    %c0_66 = arith.constant 0 : index
    %197 = vector.load %arg2[%c0_65, %c0_66] : memref<128x512xbf16, #tpu.memory_space<vmem>>, vector<128x512xbf16>
    %cst_67 = arith.constant dense<0.000000e+00> : vector<8x512xf32>
    %198 = tpu.matmul %196, %197, %cst_67 {dimension_numbers = #tpu.dot_dimension_numbers<[1], [0], [0], [1], [0, 0, 1, 1], [], []>} : vector<8x128xbf16>, vector<128x512xbf16>, vector<8x512xf32> -> vector<8x512xf32>
    %199 = arith.addf %195, %198 : vector<8x512xf32>
    %200 = vector.extract_strided_slice %199 {offsets = [0, 0], sizes = [8, 128], strides = [1, 1]} : vector<8x512xf32> to vector<8x128xf32>
    %201 = arith.negf %200 : vector<8x128xf32>
    %202 = math.exp %201 : vector<8x128xf32>
    %cst_68 = arith.constant 1.000000e+00 : f32
    %203 = vector.broadcast %cst_68 : f32 to vector<8x128xf32>
    %204 = arith.addf %203, %202 : vector<8x128xf32>
    %205 = arith.divf %203, %204 : vector<8x128xf32>
    %206 = vector.extract_strided_slice %199 {offsets = [0, 128], sizes = [8, 128], strides = [1, 1]} : vector<8x512xf32> to vector<8x128xf32>
    %207 = arith.negf %206 : vector<8x128xf32>
    %208 = math.exp %207 : vector<8x128xf32>
    %cst_69 = arith.constant 1.000000e+00 : f32
    %209 = vector.broadcast %cst_69 : f32 to vector<8x128xf32>
    %210 = arith.addf %209, %208 : vector<8x128xf32>
    %211 = arith.divf %209, %210 : vector<8x128xf32>
    %212 = vector.extract_strided_slice %199 {offsets = [0, 256], sizes = [8, 128], strides = [1, 1]} : vector<8x512xf32> to vector<8x128xf32>
    %213 = math.tanh %212 : vector<8x128xf32>
    %214 = vector.extract_strided_slice %199 {offsets = [0, 384], sizes = [8, 128], strides = [1, 1]} : vector<8x512xf32> to vector<8x128xf32>
    %215 = arith.negf %214 : vector<8x128xf32>
    %216 = math.exp %215 : vector<8x128xf32>
    %cst_70 = arith.constant 1.000000e+00 : f32
    %217 = vector.broadcast %cst_70 : f32 to vector<8x128xf32>
    %218 = arith.addf %217, %216 : vector<8x128xf32>
    %219 = arith.divf %217, %218 : vector<8x128xf32>
    %220 = arith.mulf %211, %191 : vector<8x128xf32>
    %221 = arith.mulf %205, %213 : vector<8x128xf32>
    %222 = arith.addf %220, %221 : vector<8x128xf32>
    %223 = math.tanh %222 : vector<8x128xf32>
    %224 = arith.mulf %219, %223 : vector<8x128xf32>
    %c48_71 = arith.constant 48 : index
    %c0_72 = arith.constant 0 : index
    %225 = vector.load %arg10[%c48_71, %c0_72] : memref<64x128xf32, #tpu.memory_space<vmem>>, vector<8x128xf32>
    tpu.vector_store %arg10[%c48_71, %c0_72], %224 {strides = array<i32>} : memref<64x128xf32, #tpu.memory_space<vmem>>, vector<8x128xf32>,
    %c56 = arith.constant 56 : index
    %c0_73 = arith.constant 0 : index
    %226 = vector.load %arg11[%c56, %c0_73] : memref<64x512xf32, #tpu.memory_space<vmem>>, vector<8x512xf32>
    %227 = arith.truncf %224 : vector<8x128xf32> to vector<8x128xbf16>
    %c0_74 = arith.constant 0 : index
    %c0_75 = arith.constant 0 : index
    %228 = vector.load %arg2[%c0_74, %c0_75] : memref<128x512xbf16, #tpu.memory_space<vmem>>, vector<128x512xbf16>
    %cst_76 = arith.constant dense<0.000000e+00> : vector<8x512xf32>
    %229 = tpu.matmul %227, %228, %cst_76 {dimension_numbers = #tpu.dot_dimension_numbers<[1], [0], [0], [1], [0, 0, 1, 1], [], []>} : vector<8x128xbf16>, vector<128x512xbf16>, vector<8x512xf32> -> vector<8x512xf32>
    %230 = arith.addf %226, %229 : vector<8x512xf32>
    %231 = vector.extract_strided_slice %230 {offsets = [0, 0], sizes = [8, 128], strides = [1, 1]} : vector<8x512xf32> to vector<8x128xf32>
    %232 = arith.negf %231 : vector<8x128xf32>
    %233 = math.exp %232 : vector<8x128xf32>
    %cst_77 = arith.constant 1.000000e+00 : f32
    %234 = vector.broadcast %cst_77 : f32 to vector<8x128xf32>
    %235 = arith.addf %234, %233 : vector<8x128xf32>
    %236 = arith.divf %234, %235 : vector<8x128xf32>
    %237 = vector.extract_strided_slice %230 {offsets = [0, 128], sizes = [8, 128], strides = [1, 1]} : vector<8x512xf32> to vector<8x128xf32>
    %238 = arith.negf %237 : vector<8x128xf32>
    %239 = math.exp %238 : vector<8x128xf32>
    %cst_78 = arith.constant 1.000000e+00 : f32
    %240 = vector.broadcast %cst_78 : f32 to vector<8x128xf32>
    %241 = arith.addf %240, %239 : vector<8x128xf32>
    %242 = arith.divf %240, %241 : vector<8x128xf32>
    %243 = vector.extract_strided_slice %230 {offsets = [0, 256], sizes = [8, 128], strides = [1, 1]} : vector<8x512xf32> to vector<8x128xf32>
    %244 = math.tanh %243 : vector<8x128xf32>
    %245 = vector.extract_strided_slice %230 {offsets = [0, 384], sizes = [8, 128], strides = [1, 1]} : vector<8x512xf32> to vector<8x128xf32>
    %246 = arith.negf %245 : vector<8x128xf32>
    %247 = math.exp %246 : vector<8x128xf32>
    %cst_79 = arith.constant 1.000000e+00 : f32
    %248 = vector.broadcast %cst_79 : f32 to vector<8x128xf32>
    %249 = arith.addf %248, %247 : vector<8x128xf32>
    %250 = arith.divf %248, %249 : vector<8x128xf32>
    %251 = arith.mulf %242, %222 : vector<8x128xf32>
    %252 = arith.mulf %236, %244 : vector<8x128xf32>
    %253 = arith.addf %251, %252 : vector<8x128xf32>
    %254 = math.tanh %253 : vector<8x128xf32>
    %255 = arith.mulf %250, %254 : vector<8x128xf32>
    %c56_80 = arith.constant 56 : index
    %c0_81 = arith.constant 0 : index
    %256 = vector.load %arg10[%c56_80, %c0_81] : memref<64x128xf32, #tpu.memory_space<vmem>>, vector<8x128xf32>
    tpu.vector_store %arg10[%c56_80, %c0_81], %255 {strides = array<i32>} : memref<64x128xf32, #tpu.memory_space<vmem>>, vector<8x128xf32>,
    %c0_82 = arith.constant 0 : index
    %c0_83 = arith.constant 0 : index
    %257 = vector.load %arg10[%c0_82, %c0_83] : memref<64x128xf32, #tpu.memory_space<vmem>>, vector<64x128xf32>
    %258 = arith.truncf %257 : vector<64x128xf32> to vector<64x128xbf16>
    %c0_84 = arith.constant 0 : index
    %c0_85 = arith.constant 0 : index
    %259 = vector.load %arg4[%c0_84, %c0_85] : memref<128x512xbf16, #tpu.memory_space<vmem>>, vector<128x512xbf16>
    %cst_86 = arith.constant dense<0.000000e+00> : vector<64x512xf32>
    %260 = tpu.matmul %258, %259, %cst_86 {dimension_numbers = #tpu.dot_dimension_numbers<[1], [0], [0], [1], [0, 0, 1, 1], [], []>} : vector<64x128xbf16>, vector<128x512xbf16>, vector<64x512xf32> -> vector<64x512xf32>
    %c0_87 = arith.constant 0 : index
    %c0_88 = arith.constant 0 : index
    %261 = vector.load %arg6[%c0_87, %c0_88] : memref<1x512xf32, #tpu.memory_space<vmem>>, vector<1x512xf32>
    %262 = vector.broadcast %261 : vector<1x512xf32> to vector<64x512xf32>
    %263 = arith.addf %260, %262 : vector<64x512xf32>
    %c0_89 = arith.constant 0 : index
    %c0_90 = arith.constant 0 : index
    %264 = vector.load %arg11[%c0_89, %c0_90] : memref<64x512xf32, #tpu.memory_space<vmem>>, vector<64x512xf32>
    tpu.vector_store %arg11[%c0_89, %c0_90], %263 {strides = array<i32>} : memref<64x512xf32, #tpu.memory_space<vmem>>, vector<64x512xf32>,
    %cst_91 = arith.constant 0.000000e+00 : f32
    %265 = vector.broadcast %cst_91 : f32 to vector<8x128xf32>
    %cst_92 = arith.constant 0.000000e+00 : f32
    %266 = vector.broadcast %cst_92 : f32 to vector<8x128xf32>
    %c0_93 = arith.constant 0 : index
    %c0_94 = arith.constant 0 : index
    %267 = vector.load %arg11[%c0_93, %c0_94] : memref<64x512xf32, #tpu.memory_space<vmem>>, vector<8x512xf32>
    %268 = arith.truncf %265 : vector<8x128xf32> to vector<8x128xbf16>
    %c0_95 = arith.constant 0 : index
    %c0_96 = arith.constant 0 : index
    %269 = vector.load %arg5[%c0_95, %c0_96] : memref<128x512xbf16, #tpu.memory_space<vmem>>, vector<128x512xbf16>
    %cst_97 = arith.constant dense<0.000000e+00> : vector<8x512xf32>
    %270 = tpu.matmul %268, %269, %cst_97 {dimension_numbers = #tpu.dot_dimension_numbers<[1], [0], [0], [1], [0, 0, 1, 1], [], []>} : vector<8x128xbf16>, vector<128x512xbf16>, vector<8x512xf32> -> vector<8x512xf32>
    %271 = arith.addf %267, %270 : vector<8x512xf32>
    %272 = vector.extract_strided_slice %271 {offsets = [0, 0], sizes = [8, 128], strides = [1, 1]} : vector<8x512xf32> to vector<8x128xf32>
    %273 = arith.negf %272 : vector<8x128xf32>
    %274 = math.exp %273 : vector<8x128xf32>
    %cst_98 = arith.constant 1.000000e+00 : f32
    %275 = vector.broadcast %cst_98 : f32 to vector<8x128xf32>
    %276 = arith.addf %275, %274 : vector<8x128xf32>
    %277 = arith.divf %275, %276 : vector<8x128xf32>
    %278 = vector.extract_strided_slice %271 {offsets = [0, 128], sizes = [8, 128], strides = [1, 1]} : vector<8x512xf32> to vector<8x128xf32>
    %279 = arith.negf %278 : vector<8x128xf32>
    %280 = math.exp %279 : vector<8x128xf32>
    %cst_99 = arith.constant 1.000000e+00 : f32
    %281 = vector.broadcast %cst_99 : f32 to vector<8x128xf32>
    %282 = arith.addf %281, %280 : vector<8x128xf32>
    %283 = arith.divf %281, %282 : vector<8x128xf32>
    %284 = vector.extract_strided_slice %271 {offsets = [0, 256], sizes = [8, 128], strides = [1, 1]} : vector<8x512xf32> to vector<8x128xf32>
    %285 = math.tanh %284 : vector<8x128xf32>
    %286 = vector.extract_strided_slice %271 {offsets = [0, 384], sizes = [8, 128], strides = [1, 1]} : vector<8x512xf32> to vector<8x128xf32>
    %287 = arith.negf %286 : vector<8x128xf32>
    %288 = math.exp %287 : vector<8x128xf32>
    %cst_100 = arith.constant 1.000000e+00 : f32
    %289 = vector.broadcast %cst_100 : f32 to vector<8x128xf32>
    %290 = arith.addf %289, %288 : vector<8x128xf32>
    %291 = arith.divf %289, %290 : vector<8x128xf32>
    %292 = arith.mulf %283, %266 : vector<8x128xf32>
    %293 = arith.mulf %277, %285 : vector<8x128xf32>
    %294 = arith.addf %292, %293 : vector<8x128xf32>
    %295 = math.tanh %294 : vector<8x128xf32>
    %296 = arith.mulf %291, %295 : vector<8x128xf32>
    %c0_101 = arith.constant 0 : index
    %c0_102 = arith.constant 0 : index
    %297 = vector.load %arg10[%c0_101, %c0_102] : memref<64x128xf32, #tpu.memory_space<vmem>>, vector<8x128xf32>
    tpu.vector_store %arg10[%c0_101, %c0_102], %296 {strides = array<i32>} : memref<64x128xf32, #tpu.memory_space<vmem>>, vector<8x128xf32>,
    %c8_103 = arith.constant 8 : index
    %c0_104 = arith.constant 0 : index
    %298 = vector.load %arg11[%c8_103, %c0_104] : memref<64x512xf32, #tpu.memory_space<vmem>>, vector<8x512xf32>
    %299 = arith.truncf %296 : vector<8x128xf32> to vector<8x128xbf16>
    %c0_105 = arith.constant 0 : index
    %c0_106 = arith.constant 0 : index
    %300 = vector.load %arg5[%c0_105, %c0_106] : memref<128x512xbf16, #tpu.memory_space<vmem>>, vector<128x512xbf16>
    %cst_107 = arith.constant dense<0.000000e+00> : vector<8x512xf32>
    %301 = tpu.matmul %299, %300, %cst_107 {dimension_numbers = #tpu.dot_dimension_numbers<[1], [0], [0], [1], [0, 0, 1, 1], [], []>} : vector<8x128xbf16>, vector<128x512xbf16>, vector<8x512xf32> -> vector<8x512xf32>
    %302 = arith.addf %298, %301 : vector<8x512xf32>
    %303 = vector.extract_strided_slice %302 {offsets = [0, 0], sizes = [8, 128], strides = [1, 1]} : vector<8x512xf32> to vector<8x128xf32>
    %304 = arith.negf %303 : vector<8x128xf32>
    %305 = math.exp %304 : vector<8x128xf32>
    %cst_108 = arith.constant 1.000000e+00 : f32
    %306 = vector.broadcast %cst_108 : f32 to vector<8x128xf32>
    %307 = arith.addf %306, %305 : vector<8x128xf32>
    %308 = arith.divf %306, %307 : vector<8x128xf32>
    %309 = vector.extract_strided_slice %302 {offsets = [0, 128], sizes = [8, 128], strides = [1, 1]} : vector<8x512xf32> to vector<8x128xf32>
    %310 = arith.negf %309 : vector<8x128xf32>
    %311 = math.exp %310 : vector<8x128xf32>
    %cst_109 = arith.constant 1.000000e+00 : f32
    %312 = vector.broadcast %cst_109 : f32 to vector<8x128xf32>
    %313 = arith.addf %312, %311 : vector<8x128xf32>
    %314 = arith.divf %312, %313 : vector<8x128xf32>
    %315 = vector.extract_strided_slice %302 {offsets = [0, 256], sizes = [8, 128], strides = [1, 1]} : vector<8x512xf32> to vector<8x128xf32>
    %316 = math.tanh %315 : vector<8x128xf32>
    %317 = vector.extract_strided_slice %302 {offsets = [0, 384], sizes = [8, 128], strides = [1, 1]} : vector<8x512xf32> to vector<8x128xf32>
    %318 = arith.negf %317 : vector<8x128xf32>
    %319 = math.exp %318 : vector<8x128xf32>
    %cst_110 = arith.constant 1.000000e+00 : f32
    %320 = vector.broadcast %cst_110 : f32 to vector<8x128xf32>
    %321 = arith.addf %320, %319 : vector<8x128xf32>
    %322 = arith.divf %320, %321 : vector<8x128xf32>
    %323 = arith.mulf %314, %294 : vector<8x128xf32>
    %324 = arith.mulf %308, %316 : vector<8x128xf32>
    %325 = arith.addf %323, %324 : vector<8x128xf32>
    %326 = math.tanh %325 : vector<8x128xf32>
    %327 = arith.mulf %322, %326 : vector<8x128xf32>
    %c8_111 = arith.constant 8 : index
    %c0_112 = arith.constant 0 : index
    %328 = vector.load %arg10[%c8_111, %c0_112] : memref<64x128xf32, #tpu.memory_space<vmem>>, vector<8x128xf32>
    tpu.vector_store %arg10[%c8_111, %c0_112], %327 {strides = array<i32>} : memref<64x128xf32, #tpu.memory_space<vmem>>, vector<8x128xf32>,
    %c16_113 = arith.constant 16 : index
    %c0_114 = arith.constant 0 : index
    %329 = vector.load %arg11[%c16_113, %c0_114] : memref<64x512xf32, #tpu.memory_space<vmem>>, vector<8x512xf32>
    %330 = arith.truncf %327 : vector<8x128xf32> to vector<8x128xbf16>
    %c0_115 = arith.constant 0 : index
    %c0_116 = arith.constant 0 : index
    %331 = vector.load %arg5[%c0_115, %c0_116] : memref<128x512xbf16, #tpu.memory_space<vmem>>, vector<128x512xbf16>
    %cst_117 = arith.constant dense<0.000000e+00> : vector<8x512xf32>
    %332 = tpu.matmul %330, %331, %cst_117 {dimension_numbers = #tpu.dot_dimension_numbers<[1], [0], [0], [1], [0, 0, 1, 1], [], []>} : vector<8x128xbf16>, vector<128x512xbf16>, vector<8x512xf32> -> vector<8x512xf32>
    %333 = arith.addf %329, %332 : vector<8x512xf32>
    %334 = vector.extract_strided_slice %333 {offsets = [0, 0], sizes = [8, 128], strides = [1, 1]} : vector<8x512xf32> to vector<8x128xf32>
    %335 = arith.negf %334 : vector<8x128xf32>
    %336 = math.exp %335 : vector<8x128xf32>
    %cst_118 = arith.constant 1.000000e+00 : f32
    %337 = vector.broadcast %cst_118 : f32 to vector<8x128xf32>
    %338 = arith.addf %337, %336 : vector<8x128xf32>
    %339 = arith.divf %337, %338 : vector<8x128xf32>
    %340 = vector.extract_strided_slice %333 {offsets = [0, 128], sizes = [8, 128], strides = [1, 1]} : vector<8x512xf32> to vector<8x128xf32>
    %341 = arith.negf %340 : vector<8x128xf32>
    %342 = math.exp %341 : vector<8x128xf32>
    %cst_119 = arith.constant 1.000000e+00 : f32
    %343 = vector.broadcast %cst_119 : f32 to vector<8x128xf32>
    %344 = arith.addf %343, %342 : vector<8x128xf32>
    %345 = arith.divf %343, %344 : vector<8x128xf32>
    %346 = vector.extract_strided_slice %333 {offsets = [0, 256], sizes = [8, 128], strides = [1, 1]} : vector<8x512xf32> to vector<8x128xf32>
    %347 = math.tanh %346 : vector<8x128xf32>
    %348 = vector.extract_strided_slice %333 {offsets = [0, 384], sizes = [8, 128], strides = [1, 1]} : vector<8x512xf32> to vector<8x128xf32>
    %349 = arith.negf %348 : vector<8x128xf32>
    %350 = math.exp %349 : vector<8x128xf32>
    %cst_120 = arith.constant 1.000000e+00 : f32
    %351 = vector.broadcast %cst_120 : f32 to vector<8x128xf32>
    %352 = arith.addf %351, %350 : vector<8x128xf32>
    %353 = arith.divf %351, %352 : vector<8x128xf32>
    %354 = arith.mulf %345, %325 : vector<8x128xf32>
    %355 = arith.mulf %339, %347 : vector<8x128xf32>
    %356 = arith.addf %354, %355 : vector<8x128xf32>
    %357 = math.tanh %356 : vector<8x128xf32>
    %358 = arith.mulf %353, %357 : vector<8x128xf32>
    %c16_121 = arith.constant 16 : index
    %c0_122 = arith.constant 0 : index
    %359 = vector.load %arg10[%c16_121, %c0_122] : memref<64x128xf32, #tpu.memory_space<vmem>>, vector<8x128xf32>
    tpu.vector_store %arg10[%c16_121, %c0_122], %358 {strides = array<i32>} : memref<64x128xf32, #tpu.memory_space<vmem>>, vector<8x128xf32>,
    %c24_123 = arith.constant 24 : index
    %c0_124 = arith.constant 0 : index
    %360 = vector.load %arg11[%c24_123, %c0_124] : memref<64x512xf32, #tpu.memory_space<vmem>>, vector<8x512xf32>
    %361 = arith.truncf %358 : vector<8x128xf32> to vector<8x128xbf16>
    %c0_125 = arith.constant 0 : index
    %c0_126 = arith.constant 0 : index
    %362 = vector.load %arg5[%c0_125, %c0_126] : memref<128x512xbf16, #tpu.memory_space<vmem>>, vector<128x512xbf16>
    %cst_127 = arith.constant dense<0.000000e+00> : vector<8x512xf32>
    %363 = tpu.matmul %361, %362, %cst_127 {dimension_numbers = #tpu.dot_dimension_numbers<[1], [0], [0], [1], [0, 0, 1, 1], [], []>} : vector<8x128xbf16>, vector<128x512xbf16>, vector<8x512xf32> -> vector<8x512xf32>
    %364 = arith.addf %360, %363 : vector<8x512xf32>
    %365 = vector.extract_strided_slice %364 {offsets = [0, 0], sizes = [8, 128], strides = [1, 1]} : vector<8x512xf32> to vector<8x128xf32>
    %366 = arith.negf %365 : vector<8x128xf32>
    %367 = math.exp %366 : vector<8x128xf32>
    %cst_128 = arith.constant 1.000000e+00 : f32
    %368 = vector.broadcast %cst_128 : f32 to vector<8x128xf32>
    %369 = arith.addf %368, %367 : vector<8x128xf32>
    %370 = arith.divf %368, %369 : vector<8x128xf32>
    %371 = vector.extract_strided_slice %364 {offsets = [0, 128], sizes = [8, 128], strides = [1, 1]} : vector<8x512xf32> to vector<8x128xf32>
    %372 = arith.negf %371 : vector<8x128xf32>
    %373 = math.exp %372 : vector<8x128xf32>
    %cst_129 = arith.constant 1.000000e+00 : f32
    %374 = vector.broadcast %cst_129 : f32 to vector<8x128xf32>
    %375 = arith.addf %374, %373 : vector<8x128xf32>
    %376 = arith.divf %374, %375 : vector<8x128xf32>
    %377 = vector.extract_strided_slice %364 {offsets = [0, 256], sizes = [8, 128], strides = [1, 1]} : vector<8x512xf32> to vector<8x128xf32>
    %378 = math.tanh %377 : vector<8x128xf32>
    %379 = vector.extract_strided_slice %364 {offsets = [0, 384], sizes = [8, 128], strides = [1, 1]} : vector<8x512xf32> to vector<8x128xf32>
    %380 = arith.negf %379 : vector<8x128xf32>
    %381 = math.exp %380 : vector<8x128xf32>
    %cst_130 = arith.constant 1.000000e+00 : f32
    %382 = vector.broadcast %cst_130 : f32 to vector<8x128xf32>
    %383 = arith.addf %382, %381 : vector<8x128xf32>
    %384 = arith.divf %382, %383 : vector<8x128xf32>
    %385 = arith.mulf %376, %356 : vector<8x128xf32>
    %386 = arith.mulf %370, %378 : vector<8x128xf32>
    %387 = arith.addf %385, %386 : vector<8x128xf32>
    %388 = math.tanh %387 : vector<8x128xf32>
    %389 = arith.mulf %384, %388 : vector<8x128xf32>
    %c24_131 = arith.constant 24 : index
    %c0_132 = arith.constant 0 : index
    %390 = vector.load %arg10[%c24_131, %c0_132] : memref<64x128xf32, #tpu.memory_space<vmem>>, vector<8x128xf32>
    tpu.vector_store %arg10[%c24_131, %c0_132], %389 {strides = array<i32>} : memref<64x128xf32, #tpu.memory_space<vmem>>, vector<8x128xf32>,
    %c32_133 = arith.constant 32 : index
    %c0_134 = arith.constant 0 : index
    %391 = vector.load %arg11[%c32_133, %c0_134] : memref<64x512xf32, #tpu.memory_space<vmem>>, vector<8x512xf32>
    %392 = arith.truncf %389 : vector<8x128xf32> to vector<8x128xbf16>
    %c0_135 = arith.constant 0 : index
    %c0_136 = arith.constant 0 : index
    %393 = vector.load %arg5[%c0_135, %c0_136] : memref<128x512xbf16, #tpu.memory_space<vmem>>, vector<128x512xbf16>
    %cst_137 = arith.constant dense<0.000000e+00> : vector<8x512xf32>
    %394 = tpu.matmul %392, %393, %cst_137 {dimension_numbers = #tpu.dot_dimension_numbers<[1], [0], [0], [1], [0, 0, 1, 1], [], []>} : vector<8x128xbf16>, vector<128x512xbf16>, vector<8x512xf32> -> vector<8x512xf32>
    %395 = arith.addf %391, %394 : vector<8x512xf32>
    %396 = vector.extract_strided_slice %395 {offsets = [0, 0], sizes = [8, 128], strides = [1, 1]} : vector<8x512xf32> to vector<8x128xf32>
    %397 = arith.negf %396 : vector<8x128xf32>
    %398 = math.exp %397 : vector<8x128xf32>
    %cst_138 = arith.constant 1.000000e+00 : f32
    %399 = vector.broadcast %cst_138 : f32 to vector<8x128xf32>
    %400 = arith.addf %399, %398 : vector<8x128xf32>
    %401 = arith.divf %399, %400 : vector<8x128xf32>
    %402 = vector.extract_strided_slice %395 {offsets = [0, 128], sizes = [8, 128], strides = [1, 1]} : vector<8x512xf32> to vector<8x128xf32>
    %403 = arith.negf %402 : vector<8x128xf32>
    %404 = math.exp %403 : vector<8x128xf32>
    %cst_139 = arith.constant 1.000000e+00 : f32
    %405 = vector.broadcast %cst_139 : f32 to vector<8x128xf32>
    %406 = arith.addf %405, %404 : vector<8x128xf32>
    %407 = arith.divf %405, %406 : vector<8x128xf32>
    %408 = vector.extract_strided_slice %395 {offsets = [0, 256], sizes = [8, 128], strides = [1, 1]} : vector<8x512xf32> to vector<8x128xf32>
    %409 = math.tanh %408 : vector<8x128xf32>
    %410 = vector.extract_strided_slice %395 {offsets = [0, 384], sizes = [8, 128], strides = [1, 1]} : vector<8x512xf32> to vector<8x128xf32>
    %411 = arith.negf %410 : vector<8x128xf32>
    %412 = math.exp %411 : vector<8x128xf32>
    %cst_140 = arith.constant 1.000000e+00 : f32
    %413 = vector.broadcast %cst_140 : f32 to vector<8x128xf32>
    %414 = arith.addf %413, %412 : vector<8x128xf32>
    %415 = arith.divf %413, %414 : vector<8x128xf32>
    %416 = arith.mulf %407, %387 : vector<8x128xf32>
    %417 = arith.mulf %401, %409 : vector<8x128xf32>
    %418 = arith.addf %416, %417 : vector<8x128xf32>
    %419 = math.tanh %418 : vector<8x128xf32>
    %420 = arith.mulf %415, %419 : vector<8x128xf32>
    %c32_141 = arith.constant 32 : index
    %c0_142 = arith.constant 0 : index
    %421 = vector.load %arg10[%c32_141, %c0_142] : memref<64x128xf32, #tpu.memory_space<vmem>>, vector<8x128xf32>
    tpu.vector_store %arg10[%c32_141, %c0_142], %420 {strides = array<i32>} : memref<64x128xf32, #tpu.memory_space<vmem>>, vector<8x128xf32>,
    %c40_143 = arith.constant 40 : index
    %c0_144 = arith.constant 0 : index
    %422 = vector.load %arg11[%c40_143, %c0_144] : memref<64x512xf32, #tpu.memory_space<vmem>>, vector<8x512xf32>
    %423 = arith.truncf %420 : vector<8x128xf32> to vector<8x128xbf16>
    %c0_145 = arith.constant 0 : index
    %c0_146 = arith.constant 0 : index
    %424 = vector.load %arg5[%c0_145, %c0_146] : memref<128x512xbf16, #tpu.memory_space<vmem>>, vector<128x512xbf16>
    %cst_147 = arith.constant dense<0.000000e+00> : vector<8x512xf32>
    %425 = tpu.matmul %423, %424, %cst_147 {dimension_numbers = #tpu.dot_dimension_numbers<[1], [0], [0], [1], [0, 0, 1, 1], [], []>} : vector<8x128xbf16>, vector<128x512xbf16>, vector<8x512xf32> -> vector<8x512xf32>
    %426 = arith.addf %422, %425 : vector<8x512xf32>
    %427 = vector.extract_strided_slice %426 {offsets = [0, 0], sizes = [8, 128], strides = [1, 1]} : vector<8x512xf32> to vector<8x128xf32>
    %428 = arith.negf %427 : vector<8x128xf32>
    %429 = math.exp %428 : vector<8x128xf32>
    %cst_148 = arith.constant 1.000000e+00 : f32
    %430 = vector.broadcast %cst_148 : f32 to vector<8x128xf32>
    %431 = arith.addf %430, %429 : vector<8x128xf32>
    %432 = arith.divf %430, %431 : vector<8x128xf32>
    %433 = vector.extract_strided_slice %426 {offsets = [0, 128], sizes = [8, 128], strides = [1, 1]} : vector<8x512xf32> to vector<8x128xf32>
    %434 = arith.negf %433 : vector<8x128xf32>
    %435 = math.exp %434 : vector<8x128xf32>
    %cst_149 = arith.constant 1.000000e+00 : f32
    %436 = vector.broadcast %cst_149 : f32 to vector<8x128xf32>
    %437 = arith.addf %436, %435 : vector<8x128xf32>
    %438 = arith.divf %436, %437 : vector<8x128xf32>
    %439 = vector.extract_strided_slice %426 {offsets = [0, 256], sizes = [8, 128], strides = [1, 1]} : vector<8x512xf32> to vector<8x128xf32>
    %440 = math.tanh %439 : vector<8x128xf32>
    %441 = vector.extract_strided_slice %426 {offsets = [0, 384], sizes = [8, 128], strides = [1, 1]} : vector<8x512xf32> to vector<8x128xf32>
    %442 = arith.negf %441 : vector<8x128xf32>
    %443 = math.exp %442 : vector<8x128xf32>
    %cst_150 = arith.constant 1.000000e+00 : f32
    %444 = vector.broadcast %cst_150 : f32 to vector<8x128xf32>
    %445 = arith.addf %444, %443 : vector<8x128xf32>
    %446 = arith.divf %444, %445 : vector<8x128xf32>
    %447 = arith.mulf %438, %418 : vector<8x128xf32>
    %448 = arith.mulf %432, %440 : vector<8x128xf32>
    %449 = arith.addf %447, %448 : vector<8x128xf32>
    %450 = math.tanh %449 : vector<8x128xf32>
    %451 = arith.mulf %446, %450 : vector<8x128xf32>
    %c40_151 = arith.constant 40 : index
    %c0_152 = arith.constant 0 : index
    %452 = vector.load %arg10[%c40_151, %c0_152] : memref<64x128xf32, #tpu.memory_space<vmem>>, vector<8x128xf32>
    tpu.vector_store %arg10[%c40_151, %c0_152], %451 {strides = array<i32>} : memref<64x128xf32, #tpu.memory_space<vmem>>, vector<8x128xf32>,
    %c48_153 = arith.constant 48 : index
    %c0_154 = arith.constant 0 : index
    %453 = vector.load %arg11[%c48_153, %c0_154] : memref<64x512xf32, #tpu.memory_space<vmem>>, vector<8x512xf32>
    %454 = arith.truncf %451 : vector<8x128xf32> to vector<8x128xbf16>
    %c0_155 = arith.constant 0 : index
    %c0_156 = arith.constant 0 : index
    %455 = vector.load %arg5[%c0_155, %c0_156] : memref<128x512xbf16, #tpu.memory_space<vmem>>, vector<128x512xbf16>
    %cst_157 = arith.constant dense<0.000000e+00> : vector<8x512xf32>
    %456 = tpu.matmul %454, %455, %cst_157 {dimension_numbers = #tpu.dot_dimension_numbers<[1], [0], [0], [1], [0, 0, 1, 1], [], []>} : vector<8x128xbf16>, vector<128x512xbf16>, vector<8x512xf32> -> vector<8x512xf32>
    %457 = arith.addf %453, %456 : vector<8x512xf32>
    %458 = vector.extract_strided_slice %457 {offsets = [0, 0], sizes = [8, 128], strides = [1, 1]} : vector<8x512xf32> to vector<8x128xf32>
    %459 = arith.negf %458 : vector<8x128xf32>
    %460 = math.exp %459 : vector<8x128xf32>
    %cst_158 = arith.constant 1.000000e+00 : f32
    %461 = vector.broadcast %cst_158 : f32 to vector<8x128xf32>
    %462 = arith.addf %461, %460 : vector<8x128xf32>
    %463 = arith.divf %461, %462 : vector<8x128xf32>
    %464 = vector.extract_strided_slice %457 {offsets = [0, 128], sizes = [8, 128], strides = [1, 1]} : vector<8x512xf32> to vector<8x128xf32>
    %465 = arith.negf %464 : vector<8x128xf32>
    %466 = math.exp %465 : vector<8x128xf32>
    %cst_159 = arith.constant 1.000000e+00 : f32
    %467 = vector.broadcast %cst_159 : f32 to vector<8x128xf32>
    %468 = arith.addf %467, %466 : vector<8x128xf32>
    %469 = arith.divf %467, %468 : vector<8x128xf32>
    %470 = vector.extract_strided_slice %457 {offsets = [0, 256], sizes = [8, 128], strides = [1, 1]} : vector<8x512xf32> to vector<8x128xf32>
    %471 = math.tanh %470 : vector<8x128xf32>
    %472 = vector.extract_strided_slice %457 {offsets = [0, 384], sizes = [8, 128], strides = [1, 1]} : vector<8x512xf32> to vector<8x128xf32>
    %473 = arith.negf %472 : vector<8x128xf32>
    %474 = math.exp %473 : vector<8x128xf32>
    %cst_160 = arith.constant 1.000000e+00 : f32
    %475 = vector.broadcast %cst_160 : f32 to vector<8x128xf32>
    %476 = arith.addf %475, %474 : vector<8x128xf32>
    %477 = arith.divf %475, %476 : vector<8x128xf32>
    %478 = arith.mulf %469, %449 : vector<8x128xf32>
    %479 = arith.mulf %463, %471 : vector<8x128xf32>
    %480 = arith.addf %478, %479 : vector<8x128xf32>
    %481 = math.tanh %480 : vector<8x128xf32>
    %482 = arith.mulf %477, %481 : vector<8x128xf32>
    %c48_161 = arith.constant 48 : index
    %c0_162 = arith.constant 0 : index
    %483 = vector.load %arg10[%c48_161, %c0_162] : memref<64x128xf32, #tpu.memory_space<vmem>>, vector<8x128xf32>
    tpu.vector_store %arg10[%c48_161, %c0_162], %482 {strides = array<i32>} : memref<64x128xf32, #tpu.memory_space<vmem>>, vector<8x128xf32>,
    %c56_163 = arith.constant 56 : index
    %c0_164 = arith.constant 0 : index
    %484 = vector.load %arg11[%c56_163, %c0_164] : memref<64x512xf32, #tpu.memory_space<vmem>>, vector<8x512xf32>
    %485 = arith.truncf %482 : vector<8x128xf32> to vector<8x128xbf16>
    %c0_165 = arith.constant 0 : index
    %c0_166 = arith.constant 0 : index
    %486 = vector.load %arg5[%c0_165, %c0_166] : memref<128x512xbf16, #tpu.memory_space<vmem>>, vector<128x512xbf16>
    %cst_167 = arith.constant dense<0.000000e+00> : vector<8x512xf32>
    %487 = tpu.matmul %485, %486, %cst_167 {dimension_numbers = #tpu.dot_dimension_numbers<[1], [0], [0], [1], [0, 0, 1, 1], [], []>} : vector<8x128xbf16>, vector<128x512xbf16>, vector<8x512xf32> -> vector<8x512xf32>
    %488 = arith.addf %484, %487 : vector<8x512xf32>
    %489 = vector.extract_strided_slice %488 {offsets = [0, 0], sizes = [8, 128], strides = [1, 1]} : vector<8x512xf32> to vector<8x128xf32>
    %490 = arith.negf %489 : vector<8x128xf32>
    %491 = math.exp %490 : vector<8x128xf32>
    %cst_168 = arith.constant 1.000000e+00 : f32
    %492 = vector.broadcast %cst_168 : f32 to vector<8x128xf32>
    %493 = arith.addf %492, %491 : vector<8x128xf32>
    %494 = arith.divf %492, %493 : vector<8x128xf32>
    %495 = vector.extract_strided_slice %488 {offsets = [0, 128], sizes = [8, 128], strides = [1, 1]} : vector<8x512xf32> to vector<8x128xf32>
    %496 = arith.negf %495 : vector<8x128xf32>
    %497 = math.exp %496 : vector<8x128xf32>
    %cst_169 = arith.constant 1.000000e+00 : f32
    %498 = vector.broadcast %cst_169 : f32 to vector<8x128xf32>
    %499 = arith.addf %498, %497 : vector<8x128xf32>
    %500 = arith.divf %498, %499 : vector<8x128xf32>
    %501 = vector.extract_strided_slice %488 {offsets = [0, 256], sizes = [8, 128], strides = [1, 1]} : vector<8x512xf32> to vector<8x128xf32>
    %502 = math.tanh %501 : vector<8x128xf32>
    %503 = vector.extract_strided_slice %488 {offsets = [0, 384], sizes = [8, 128], strides = [1, 1]} : vector<8x512xf32> to vector<8x128xf32>
    %504 = arith.negf %503 : vector<8x128xf32>
    %505 = math.exp %504 : vector<8x128xf32>
    %cst_170 = arith.constant 1.000000e+00 : f32
    %506 = vector.broadcast %cst_170 : f32 to vector<8x128xf32>
    %507 = arith.addf %506, %505 : vector<8x128xf32>
    %508 = arith.divf %506, %507 : vector<8x128xf32>
    %509 = arith.mulf %500, %480 : vector<8x128xf32>
    %510 = arith.mulf %494, %502 : vector<8x128xf32>
    %511 = arith.addf %509, %510 : vector<8x128xf32>
    %512 = math.tanh %511 : vector<8x128xf32>
    %513 = arith.mulf %508, %512 : vector<8x128xf32>
    %c56_171 = arith.constant 56 : index
    %c0_172 = arith.constant 0 : index
    %514 = vector.load %arg10[%c56_171, %c0_172] : memref<64x128xf32, #tpu.memory_space<vmem>>, vector<8x128xf32>
    tpu.vector_store %arg10[%c56_171, %c0_172], %513 {strides = array<i32>} : memref<64x128xf32, #tpu.memory_space<vmem>>, vector<8x128xf32>,
    %c0_173 = arith.constant 0 : index
    %c0_174 = arith.constant 0 : index
    %515 = vector.load %arg10[%c0_173, %c0_174] : memref<64x128xf32, #tpu.memory_space<vmem>>, vector<64x128xf32>
    %516 = arith.truncf %515 : vector<64x128xf32> to vector<64x128xbf16>
    %c0_175 = arith.constant 0 : index
    %c0_176 = arith.constant 0 : index
    %517 = vector.load %arg7[%c0_175, %c0_176] : memref<128x128xbf16, #tpu.memory_space<vmem>>, vector<128x128xbf16>
    %cst_177 = arith.constant dense<0.000000e+00> : vector<64x128xf32>
    %518 = tpu.matmul %516, %517, %cst_177 {dimension_numbers = #tpu.dot_dimension_numbers<[1], [0], [0], [1], [0, 0, 1, 1], [], []>} : vector<64x128xbf16>, vector<128x128xbf16>, vector<64x128xf32> -> vector<64x128xf32>
    %c0_178 = arith.constant 0 : index
    %c0_179 = arith.constant 0 : index
    %519 = vector.load %arg8[%c0_178, %c0_179] : memref<1x128xf32, #tpu.memory_space<vmem>>, vector<1x128xf32>
    %520 = vector.broadcast %519 : vector<1x128xf32> to vector<64x128xf32>
    %521 = arith.addf %518, %520 : vector<64x128xf32>
    %c0_180 = arith.constant 0 : index
    %c0_181 = arith.constant 0 : index
    %522 = vector.load %arg9[%c0_180, %c0_181] : memref<64x128xf32, #tpu.memory_space<vmem>>, vector<64x128xf32>
    tpu.vector_store %arg9[%c0_180, %c0_181], %521 {strides = array<i32>} : memref<64x128xf32, #tpu.memory_space<vmem>>, vector<64x128xf32>,
    return
  }
}

</mosaic_0001>

<llo_original>
// kernel: tpu_custom_call.1
$region0: #{tpu_custom_call.1}
  #allocation0 [shape = 'u32[]', space=smem, size = 0x4, offset = 0x4, fixed_abs, tag = 'smem constant byte address 0x4 - core index']
  #allocation1 [shape = 'u32[144,128]{1,0:T(1,128)}', space=vmem, size = 0x12000, scoped, tag = 'internal scratch']
  #allocation2 [shape = 'f32[64,128]{1,0:T(8,128)}', space=vmem, size = 0x8000, scoped, tag = 'scratch operand']
  #allocation3 [shape = 'f32[64,512]{1,0:T(8,128)}', space=vmem, size = 0x20000, scoped, tag = 'scratch operand']
  %s0 = inlined_call_operand.hbm [shape: bf16[64,128], index: 0, kind: input, shape index: {}]
  %s1 = inlined_call_operand.hbm [shape: bf16[128,512], index: 1, kind: input, shape index: {}]
  %s2 = inlined_call_operand.hbm [shape: bf16[128,512], index: 2, kind: input, shape index: {}]
  %s3 = inlined_call_operand.vmem [shape: f32[1,512], index: 3, kind: input, shape index: {}]
  %s4 = inlined_call_operand.hbm [shape: bf16[128,512], index: 4, kind: input, shape index: {}]
  %s5 = inlined_call_operand.hbm [shape: bf16[128,512], index: 5, kind: input, shape index: {}]
  %s6 = inlined_call_operand.vmem [shape: f32[1,512], index: 6, kind: input, shape index: {}]
  %s7 = inlined_call_operand.hbm [shape: bf16[128,128], index: 7, kind: input, shape index: {}]
  %s8 = inlined_call_operand.vmem [shape: f32[1,128], index: 8, kind: input, shape index: {}]
  %s9 = inlined_call_operand.hbm [shape: f32[64,128], index: 9, kind: output, shape index: {}]
  %s10 = sld [smem:[#allocation0]]
  $region70: #{tpu_custom_call.1} parent=0
    _
  %s12 = ssub.s32 1, %s10
  %s13 = scalar_select 0, %s12, %s10
  $region1: #{tpu_custom_call.1} parent=0
    #allocation4 [shape = 'u8[16384]{0}', space=vmem, size = 0x4000, scoped, tag = 'input window, operand 0, single buffered']
    #allocation5 [shape = 's32[1]{0}', space=sflag, size = 0x4, scoped, tag = 'scoped memory for tpu_custom_call.1']
    #allocation6 [shape = 's32[1]{0}', space=sflag, size = 0x4, scoped, tag = 'scoped memory for tpu_custom_call.1']
    #allocation7 [shape = 'u8[131072]{0}', space=vmem, size = 0x20000, scoped, tag = 'input window, operand 1, single buffered']
    #allocation8 [shape = 's32[1]{0}', space=sflag, size = 0x4, scoped, tag = 'scoped memory for tpu_custom_call.1']
    #allocation9 [shape = 'u8[131072]{0}', space=vmem, size = 0x20000, scoped, tag = 'input window, operand 2, single buffered']
    #allocation10 [shape = 'u8[131072]{0}', space=vmem, size = 0x20000, scoped, tag = 'input window, operand 4, single buffered']
    #allocation11 [shape = 's32[1]{0}', space=sflag, size = 0x4, scoped, tag = 'scoped memory for tpu_custom_call.1']
    #allocation12 [shape = 'u8[131072]{0}', space=vmem, size = 0x20000, scoped, tag = 'input window, operand 5, single buffered']
    #allocation13 [shape = 'u8[32768]{0}', space=vmem, size = 0x8000, scoped, tag = 'input window, operand 7, single buffered']
    #allocation14 [shape = 's32[1]{0}', space=sflag, size = 0x4, scoped, tag = 'scoped memory for tpu_custom_call.1']
    #allocation15 [shape = 'u8[32768]{0}', space=vmem, size = 0x8000, scoped, tag = 'output window, operand 0, single buffered']
    %14 = vsyncpa [#allocation5], 0
    %15 = vsyncpa [#allocation8], 0
    %16 = vsyncpa [#allocation11], 0
    %17 = vsyncpa [#allocation14], 0
    %18 = vsyncpa [#allocation6], 0
    // Predicated region
    $region2: #{tpu_custom_call.1} parent=1 // pred_check
      _
    $region3: #{tpu_custom_call.1} parent=1 // pred_check_branch
      %20 = sbr.rel (0) target = $region5
    $region4: #{tpu_custom_call.1} parent=1 // pred_region
      %s22 = ssub.s32 512, 512
      %23 = vsyncadd [#allocation5], %s22
      %s24 = sshll.u32 [#allocation4], 4
      %s25 = int_to_ptr.vmem [resolvable:$true] %s24
      %30 = dma.hbm_to_vmem [thread:$0]  %s0, 512, %s25, [#allocation5], 64, 64, 4
    $region5: #{tpu_custom_call.1} parent=1 // pred_fallthru
      _
    // Predicated region
    $region6: #{tpu_custom_call.1} parent=1 // pred_check
      _
    $region7: #{tpu_custom_call.1} parent=1 // pred_check_branch
      %32 = sbr.rel (0) target = $region9
    $region8: #{tpu_custom_call.1} parent=1 // pred_region
      %s34 = ssub.s32 4096, 4096
      %35 = vsyncadd [#allocation8], %s34
      %s36 = sshll.u32 [#allocation7], 4
      %s37 = int_to_ptr.vmem [resolvable:$true] %s36
      %42 = dma.hbm_to_vmem [thread:$0]  %s1, 4096, %s37, [#allocation8], 256, 256, 16
    $region9: #{tpu_custom_call.1} parent=1 // pred_fallthru
      _
    // Predicated region
    $region10: #{tpu_custom_call.1} parent=1 // pred_check
      _
    $region11: #{tpu_custom_call.1} parent=1 // pred_check_branch
      %44 = sbr.rel (0) target = $region13
    $region12: #{tpu_custom_call.1} parent=1 // pred_region
      %s46 = ssub.s32 4096, 4096
      %47 = vsyncadd [#allocation8], %s46
      %s48 = sshll.u32 [#allocation9], 4
      %s49 = int_to_ptr.vmem [resolvable:$true] %s48
      %54 = dma.hbm_to_vmem [thread:$0]  %s2, 4096, %s49, [#allocation8], 256, 256, 16
    $region13: #{tpu_custom_call.1} parent=1 // pred_fallthru
      _
    // Predicated region
    $region14: #{tpu_custom_call.1} parent=1 // pred_check
      _
    $region15: #{tpu_custom_call.1} parent=1 // pred_check_branch
      %56 = sbr.rel (0) target = $region17
    $region16: #{tpu_custom_call.1} parent=1 // pred_region
      _
    $region17: #{tpu_custom_call.1} parent=1 // pred_fallthru
      _
    // Predicated region
    $region18: #{tpu_custom_call.1} parent=1 // pred_check
      _
    $region19: #{tpu_custom_call.1} parent=1 // pred_check_branch
      %58 = sbr.rel (0) target = $region21
    $region20: #{tpu_custom_call.1} parent=1 // pred_region
      %s60 = ssub.s32 4096, 4096
      %61 = vsyncadd [#allocation11], %s60
      %s62 = sshll.u32 [#allocation10], 4
      %s63 = int_to_ptr.vmem [resolvable:$true] %s62
      %68 = dma.hbm_to_vmem [thread:$0]  %s4, 4096, %s63, [#allocation11], 256, 256, 16
    $region21: #{tpu_custom_call.1} parent=1 // pred_fallthru
      _
    // Predicated region
    $region22: #{tpu_custom_call.1} parent=1 // pred_check
      _
    $region23: #{tpu_custom_call.1} parent=1 // pred_check_branch
      %70 = sbr.rel (0) target = $region25
    $region24: #{tpu_custom_call.1} parent=1 // pred_region
      %s72 = ssub.s32 4096, 4096
      %73 = vsyncadd [#allocation11], %s72
      %s74 = sshll.u32 [#allocation12], 4
      %s75 = int_to_ptr.vmem [resolvable:$true] %s74
      %80 = dma.hbm_to_vmem [thread:$0]  %s5, 4096, %s75, [#allocation11], 256, 256, 16
    $region25: #{tpu_custom_call.1} parent=1 // pred_fallthru
      _
    // Predicated region
    $region26: #{tpu_custom_call.1} parent=1 // pred_check
      _
    $region27: #{tpu_custom_call.1} parent=1 // pred_check_branch
      %82 = sbr.rel (0) target = $region29
    $region28: #{tpu_custom_call.1} parent=1 // pred_region
      _
    $region29: #{tpu_custom_call.1} parent=1 // pred_fallthru
      _
    // Predicated region
    $region30: #{tpu_custom_call.1} parent=1 // pred_check
      _
    $region31: #{tpu_custom_call.1} parent=1 // pred_check_branch
      %84 = sbr.rel (0) target = $region33
    $region32: #{tpu_custom_call.1} parent=1 // pred_region
      %s86 = ssub.s32 1024, 1024
      %87 = vsyncadd [#allocation14], %s86
      %s88 = sshll.u32 [#allocation13], 4
      %s89 = int_to_ptr.vmem [resolvable:$true] %s88
      %94 = dma.hbm_to_vmem [thread:$0]  %s7, 1024, %s89, [#allocation14], 64, 64, 4
    $region33: #{tpu_custom_call.1} parent=1 // pred_fallthru
      _
    // Predicated region
    $region34: #{tpu_custom_call.1} parent=1 // pred_check
      _
    $region35: #{tpu_custom_call.1} parent=1 // pred_check_branch
      %96 = sbr.rel (0) target = $region37
    $region36: #{tpu_custom_call.1} parent=1 // pred_region
      _
    $region37: #{tpu_custom_call.1} parent=1 // pred_fallthru
      _
    // Predicated region
    $region38: #{tpu_custom_call.1} parent=1 // pred_check
      _
    $region39: #{tpu_custom_call.1} parent=1 // pred_check_branch
      %98 = sbr.rel (0) target = $region41
    $region40: #{tpu_custom_call.1} parent=1 // pred_region
      %99 = dma.done [#allocation5], 512
    $region41: #{tpu_custom_call.1} parent=1 // pred_fallthru
      _
    // Predicated region
    $region42: #{tpu_custom_call.1} parent=1 // pred_check
      _
    $region43: #{tpu_custom_call.1} parent=1 // pred_check_branch
      %101 = sbr.rel (0) target = $region45
    $region44: #{tpu_custom_call.1} parent=1 // pred_region
      %102 = dma.done [#allocation8], 4096
    $region45: #{tpu_custom_call.1} parent=1 // pred_fallthru
      _
    // Predicated region
    $region46: #{tpu_custom_call.1} parent=1 // pred_check
      _
    $region47: #{tpu_custom_call.1} parent=1 // pred_check_branch
      %104 = sbr.rel (0) target = $region49
    $region48: #{tpu_custom_call.1} parent=1 // pred_region
      %105 = dma.done [#allocation8], 4096
    $region49: #{tpu_custom_call.1} parent=1 // pred_fallthru
      _
    // Predicated region
    $region50: #{tpu_custom_call.1} parent=1 // pred_check
      _
    $region51: #{tpu_custom_call.1} parent=1 // pred_check_branch
      %107 = sbr.rel (0) target = $region53
    $region52: #{tpu_custom_call.1} parent=1 // pred_region
      %108 = dma.done [#allocation11], 4096
    $region53: #{tpu_custom_call.1} parent=1 // pred_fallthru
      _
    // Predicated region
    $region54: #{tpu_custom_call.1} parent=1 // pred_check
      _
    $region55: #{tpu_custom_call.1} parent=1 // pred_check_branch
      %110 = sbr.rel (0) target = $region57
    $region56: #{tpu_custom_call.1} parent=1 // pred_region
      %111 = dma.done [#allocation11], 4096
    $region57: #{tpu_custom_call.1} parent=1 // pred_fallthru
      _
    // Predicated region
    $region58: #{tpu_custom_call.1} parent=1 // pred_check
      _
    $region59: #{tpu_custom_call.1} parent=1 // pred_check_branch
      %113 = sbr.rel (0) target = $region61
    $region60: #{tpu_custom_call.1} parent=1 // pred_region
      %114 = dma.done [#allocation14], 1024
    $region61: #{tpu_custom_call.1} parent=1 // pred_fallthru
      _
    %v116 = vld [vmem:[#allocation4] sm:$0xf]
    %v117 = vld [vmem:[#allocation4 + $0x4] sm:$0xf]
    %v118 = vld [vmem:[#allocation4 + $0x8] sm:$0xf]
    %v119 = vld [vmem:[#allocation4 + $0xc] sm:$0xf]
    %v120 = vld [vmem:[#allocation4 + $0x10] sm:$0xf]
    %v121 = vld [vmem:[#allocation4 + $0x14] sm:$0xf]
    %v122 = vld [vmem:[#allocation4 + $0x18] sm:$0xf]
    %v123 = vld [vmem:[#allocation4 + $0x1c] sm:$0xf]
    %v124 = vld [vmem:[#allocation7] sm:$0xff]
    %v125 = vld [vmem:[#allocation7 + $0x8] sm:$0xff]
    %v126 = vld [vmem:[#allocation7 + $0x10] sm:$0xff]
    %v127 = vld [vmem:[#allocation7 + $0x18] sm:$0xff]
    %v128 = vld [vmem:[#allocation7 + $0x20] sm:$0xff]
    %v129 = vld [vmem:[#allocation7 + $0x28] sm:$0xff]
    %v130 = vld [vmem:[#allocation7 + $0x30] sm:$0xff]
    %v131 = vld [vmem:[#allocation7 + $0x38] sm:$0xff]
    %v132 = vld [vmem:[#allocation7 + $0x40] sm:$0xff]
    %v133 = vld [vmem:[#allocation7 + $0x48] sm:$0xff]
    %v134 = vld [vmem:[#allocation7 + $0x50] sm:$0xff]
    %v135 = vld [vmem:[#allocation7 + $0x58] sm:$0xff]
    %v136 = vld [vmem:[#allocation7 + $0x60] sm:$0xff]
    %v137 = vld [vmem:[#allocation7 + $0x68] sm:$0xff]
    %v138 = vld [vmem:[#allocation7 + $0x70] sm:$0xff]
    %v139 = vld [vmem:[#allocation7 + $0x78] sm:$0xff]
    %v140 = vld [vmem:[#allocation7 + $0x80] sm:$0xff]
    %v141 = vld [vmem:[#allocation7 + $0x88] sm:$0xff]
    %v142 = vld [vmem:[#allocation7 + $0x90] sm:$0xff]
    %v143 = vld [vmem:[#allocation7 + $0x98] sm:$0xff]
    %v144 = vld [vmem:[#allocation7 + $0xa0] sm:$0xff]
    %v145 = vld [vmem:[#allocation7 + $0xa8] sm:$0xff]
    %v146 = vld [vmem:[#allocation7 + $0xb0] sm:$0xff]
    %v147 = vld [vmem:[#allocation7 + $0xb8] sm:$0xff]
    %v148 = vld [vmem:[#allocation7 + $0xc0] sm:$0xff]
    %v149 = vld [vmem:[#allocation7 + $0xc8] sm:$0xff]
    %v150 = vld [vmem:[#allocation7 + $0xd0] sm:$0xff]
    %v151 = vld [vmem:[#allocation7 + $0xd8] sm:$0xff]
    %v152 = vld [vmem:[#allocation7 + $0xe0] sm:$0xff]
    %v153 = vld [vmem:[#allocation7 + $0xe8] sm:$0xff]
    %v154 = vld [vmem:[#allocation7 + $0xf0] sm:$0xff]
    %v155 = vld [vmem:[#allocation7 + $0xf8] sm:$0xff]
    %v156 = vld [vmem:[%s3] sm:$0xf]
    %v158 = vlaneseq
    %v159 = vshrl.u32 %v158, 7
    %v160 = vsub.s32 0, %v159
    %v161 = vrot.slane %v156, %v160
    %v162 = vlaneseq
    %v163 = vshrl.u32 %v162, 7
    %v164 = vsub.s32 1, %v163
    %v165 = vrot.slane %v156, %v164
    %v166 = vlaneseq
    %v167 = vshrl.u32 %v166, 7
    %v168 = vsub.s32 2, %v167
    %v169 = vrot.slane %v156, %v168
    %v170 = vlaneseq
    %v171 = vshrl.u32 %v170, 7
    %v172 = vsub.s32 3, %v171
    %v173 = vrot.slane %v156, %v172
    %v186 = vunpack.c.l.b16 %v116
    %v187 = vunpack.c.l.b16 %v117
    %v188 = vunpack.c.l.b16 %v118
    %v189 = vunpack.c.l.b16 %v119
    %v190 = vunpack.c.l.b16 %v120
    %v191 = vunpack.c.l.b16 %v121
    %v192 = vunpack.c.l.b16 %v122
    %v193 = vunpack.c.l.b16 %v123
    %v194 = vpack.c.b16 %v187, %v186
    %v195 = vpack.c.b16 %v189, %v188
    %v196 = vpack.c.b16 %v191, %v190
    %v197 = vpack.c.b16 %v193, %v192
    %v234 = vunpack.c.l.b16 %v124
    %v235 = vunpack.c.h.b16 %v124
    %v236 = vunpack.c.l.b16 %v125
    %v237 = vunpack.c.h.b16 %v125
    %v238 = vunpack.c.l.b16 %v126
    %v239 = vunpack.c.h.b16 %v126
    %v240 = vunpack.c.l.b16 %v127
    %v241 = vunpack.c.h.b16 %v127
    %v242 = vunpack.c.l.b16 %v128
    %v243 = vunpack.c.h.b16 %v128
    %v244 = vunpack.c.l.b16 %v129
    %v245 = vunpack.c.h.b16 %v129
    %v246 = vunpack.c.l.b16 %v130
    %v247 = vunpack.c.h.b16 %v130
    %v248 = vunpack.c.l.b16 %v131
    %v249 = vunpack.c.h.b16 %v131
    %v250 = vunpack.c.l.b16 %v132
    %v251 = vunpack.c.h.b16 %v132
    %v252 = vunpack.c.l.b16 %v133
    %v253 = vunpack.c.h.b16 %v133
    %v254 = vunpack.c.l.b16 %v134
    %v255 = vunpack.c.h.b16 %v134
    %v256 = vunpack.c.l.b16 %v135
    %v257 = vunpack.c.h.b16 %v135
    %v258 = vunpack.c.l.b16 %v136
    %v259 = vunpack.c.h.b16 %v136
    %v260 = vunpack.c.l.b16 %v137
    %v261 = vunpack.c.h.b16 %v137
    %v262 = vunpack.c.l.b16 %v138
    %v263 = vunpack.c.h.b16 %v138
    %v264 = vunpack.c.l.b16 %v139
    %v265 = vunpack.c.h.b16 %v139
    %v266 = vunpack.c.l.b16 %v140
    %v267 = vunpack.c.h.b16 %v140
    %v268 = vunpack.c.l.b16 %v141
    %v269 = vunpack.c.h.b16 %v141
    %v270 = vunpack.c.l.b16 %v142
    %v271 = vunpack.c.h.b16 %v142
    %v272 = vunpack.c.l.b16 %v143
    %v273 = vunpack.c.h.b16 %v143
    %v274 = vunpack.c.l.b16 %v144
    %v275 = vunpack.c.h.b16 %v144
    %v276 = vunpack.c.l.b16 %v145
    %v277 = vunpack.c.h.b16 %v145
    %v278 = vunpack.c.l.b16 %v146
    %v279 = vunpack.c.h.b16 %v146
    %v280 = vunpack.c.l.b16 %v147
    %v281 = vunpack.c.h.b16 %v147
    %v282 = vunpack.c.l.b16 %v148
    %v283 = vunpack.c.h.b16 %v148
    %v284 = vunpack.c.l.b16 %v149
    %v285 = vunpack.c.h.b16 %v149
    %v286 = vunpack.c.l.b16 %v150
    %v287 = vunpack.c.h.b16 %v150
    %v288 = vunpack.c.l.b16 %v151
    %v289 = vunpack.c.h.b16 %v151
    %v290 = vunpack.c.l.b16 %v152
    %v291 = vunpack.c.h.b16 %v152
    %v292 = vunpack.c.l.b16 %v153
    %v293 = vunpack.c.h.b16 %v153
    %v294 = vunpack.c.l.b16 %v154
    %v295 = vunpack.c.h.b16 %v154
    %v296 = vunpack.c.l.b16 %v155
    %v297 = vunpack.c.h.b16 %v155
    %v298 = vpack.c.b16 %v238, %v234
    %v299 = vpack.c.b16 %v239, %v235
    %v300 = vpack.c.b16 %v240, %v236
    %v301 = vpack.c.b16 %v241, %v237
    %v302 = vpack.c.b16 %v246, %v242
    %v303 = vpack.c.b16 %v247, %v243
    %v304 = vpack.c.b16 %v248, %v244
    %v305 = vpack.c.b16 %v249, %v245
    %v306 = vpack.c.b16 %v254, %v250
    %v307 = vpack.c.b16 %v255, %v251
    %v308 = vpack.c.b16 %v256, %v252
    %v309 = vpack.c.b16 %v257, %v253
    %v310 = vpack.c.b16 %v262, %v258
    %v311 = vpack.c.b16 %v263, %v259
    %v312 = vpack.c.b16 %v264, %v260
    %v313 = vpack.c.b16 %v265, %v261
    %v314 = vpack.c.b16 %v270, %v266
    %v315 = vpack.c.b16 %v271, %v267
    %v316 = vpack.c.b16 %v272, %v268
    %v317 = vpack.c.b16 %v273, %v269
    %v318 = vpack.c.b16 %v278, %v274
    %v319 = vpack.c.b16 %v279, %v275
    %v320 = vpack.c.b16 %v280, %v276
    %v321 = vpack.c.b16 %v281, %v277
    %v322 = vpack.c.b16 %v286, %v282
    %v323 = vpack.c.b16 %v287, %v283
    %v324 = vpack.c.b16 %v288, %v284
    %v325 = vpack.c.b16 %v289, %v285
    %v326 = vpack.c.b16 %v294, %v290
    %v327 = vpack.c.b16 %v295, %v291
    %v328 = vpack.c.b16 %v296, %v292
    %v329 = vpack.c.b16 %v297, %v293
    %362 = vmatprep.subr.bf16.mxu0 %v299
    %363 = vmatpush1.bf16.msra.mxu0 %v298
    %364 = vmatprep.subr.bf16.mxu0 %v303
    %365 = vmatpush1.bf16.msra.mxu0 %v302
    %366 = vmatprep.subr.bf16.mxu0 %v307
    %367 = vmatpush1.bf16.msra.mxu0 %v306
    %368 = vmatprep.subr.bf16.mxu0 %v311
    %369 = vmatpush1.bf16.msra.mxu0 %v310
    %370 = vmatprep.subr.bf16.mxu0 %v315
    %371 = vmatpush1.bf16.msra.mxu0 %v314
    %372 = vmatprep.subr.bf16.mxu0 %v319
    %373 = vmatpush1.bf16.msra.mxu0 %v318
    %374 = vmatprep.subr.bf16.mxu0 %v323
    %375 = vmatpush1.bf16.msra.mxu0 %v322
    %376 = vmatprep.subr.bf16.mxu0 %v327
    %377 = vmatpush1.bf16.msra.mxu0 %v326
    %378 = vmatprep.subr.bf16.mxu0 0
    %379 = vmatpush1.bf16.msra.mxu0 0
    %380 = vmatprep.subr.bf16.mxu0 0
    %381 = vmatpush1.bf16.msra.mxu0 0
    %382 = vmatprep.subr.bf16.mxu0 0
    %383 = vmatpush1.bf16.msra.mxu0 0
    %384 = vmatprep.subr.bf16.mxu0 0
    %385 = vmatpush1.bf16.msra.mxu0 0
    %386 = vmatprep.subr.bf16.mxu0 0
    %387 = vmatpush1.bf16.msra.mxu0 0
    %388 = vmatprep.subr.bf16.mxu0 0
    %389 = vmatpush1.bf16.msra.mxu0 0
    %390 = vmatprep.subr.bf16.mxu0 0
    %391 = vmatpush1.bf16.msra.mxu0 0
    %392 = vmatprep.subr.bf16.mxu0 0
    %393 = vmatpush1.bf16.msra.mxu0 0
    %394 = vmatprep.mubr.bf16.mxu0 0
    %395 = vmatmul.mubr.bf16.gmra.mrb[0].mxu0 %v194
    %v396 = vpop.f32.mrb[0].mxu0
    %v397 = vadd.f32 %v161, %v396
    %v398 = vpop.f32.mrb[0].mxu0
    %v399 = vadd.f32 %v165, %v398
    %v400 = vpop.f32.mrb[0].mxu0
    %v401 = vadd.f32 %v161, %v400
    %v402 = vpop.f32.mrb[0].mxu0
    %v403 = vadd.f32 %v165, %v402
    %404 = vmatprep.mubr.bf16.mxu0 0
    %405 = vmatmul.mubr.bf16.gmra.mrb[0].mxu0 %v195
    %v406 = vpop.f32.mrb[0].mxu0
    %v407 = vadd.f32 %v161, %v406
    %v408 = vpop.f32.mrb[0].mxu0
    %v409 = vadd.f32 %v165, %v408
    %v410 = vpop.f32.mrb[0].mxu0
    %v411 = vadd.f32 %v161, %v410
    %v412 = vpop.f32.mrb[0].mxu0
    %v413 = vadd.f32 %v165, %v412
    %414 = vmatprep.mubr.bf16.mxu0 0
    %415 = vmatmul.mubr.bf16.gmra.mrb[0].mxu0 %v196
    %v416 = vpop.f32.mrb[0].mxu0
    %v417 = vadd.f32 %v161, %v416
    %v418 = vpop.f32.mrb[0].mxu0
    %v419 = vadd.f32 %v165, %v418
    %v420 = vpop.f32.mrb[0].mxu0
    %v421 = vadd.f32 %v161, %v420
    %v422 = vpop.f32.mrb[0].mxu0
    %v423 = vadd.f32 %v165, %v422
    %424 = vmatprep.mubr.bf16.mxu0 0
    %425 = vmatmul.mubr.bf16.gmra.mrb[0].mxu0 %v197
    %v426 = vpop.f32.mrb[0].mxu0
    %v427 = vadd.f32 %v161, %v426
    %v428 = vpop.f32.mrb[0].mxu0
    %v429 = vadd.f32 %v165, %v428
    %v430 = vpop.f32.mrb[0].mxu0
    %v431 = vadd.f32 %v161, %v430
    %v432 = vpop.f32.mrb[0].mxu0
    %v433 = vadd.f32 %v165, %v432
    %434 = vdwg.mxu0
    %435 = vmatprep.subr.bf16.mxu0 %v301
    %436 = vmatpush1.bf16.msra.mxu0 %v300
    %437 = vmatprep.subr.bf16.mxu0 %v305
    %438 = vmatpush1.bf16.msra.mxu0 %v304
    %439 = vmatprep.subr.bf16.mxu0 %v309
    %440 = vmatpush1.bf16.msra.mxu0 %v308
    %441 = vmatprep.subr.bf16.mxu0 %v313
    %442 = vmatpush1.bf16.msra.mxu0 %v312
    %443 = vmatprep.subr.bf16.mxu0 %v317
    %444 = vmatpush1.bf16.msra.mxu0 %v316
    %445 = vmatprep.subr.bf16.mxu0 %v321
    %446 = vmatpush1.bf16.msra.mxu0 %v320
    %447 = vmatprep.subr.bf16.mxu0 %v325
    %448 = vmatpush1.bf16.msra.mxu0 %v324
    %449 = vmatprep.subr.bf16.mxu0 %v329
    %450 = vmatpush1.bf16.msra.mxu0 %v328
    %451 = vmatprep.subr.bf16.mxu0 0
    %452 = vmatpush1.bf16.msra.mxu0 0
    %453 = vmatprep.subr.bf16.mxu0 0
    %454 = vmatpush1.bf16.msra.mxu0 0
    %455 = vmatprep.subr.bf16.mxu0 0
    %456 = vmatpush1.bf16.msra.mxu0 0
    %457 = vmatprep.subr.bf16.mxu0 0
    %458 = vmatpush1.bf16.msra.mxu0 0
    %459 = vmatprep.subr.bf16.mxu0 0
    %460 = vmatpush1.bf16.msra.mxu0 0
    %461 = vmatprep.subr.bf16.mxu0 0
    %462 = vmatpush1.bf16.msra.mxu0 0
    %463 = vmatprep.subr.bf16.mxu0 0
    %464 = vmatpush1.bf16.msra.mxu0 0
    %465 = vmatprep.subr.bf16.mxu0 0
    %466 = vmatpush1.bf16.msra.mxu0 0
    %467 = vmatprep.mubr.bf16.mxu0 0
    %468 = vmatmul.mubr.bf16.gmra.mrb[0].mxu0 %v194
    %v469 = vpop.f32.mrb[0].mxu0
    %v470 = vadd.f32 %v169, %v469
    %v471 = vpop.f32.mrb[0].mxu0
    %v472 = vadd.f32 %v173, %v471
    %v473 = vpop.f32.mrb[0].mxu0
    %v474 = vadd.f32 %v169, %v473
    %v475 = vpop.f32.mrb[0].mxu0
    %v476 = vadd.f32 %v173, %v475
    %477 = vmatprep.mubr.bf16.mxu0 0
    %478 = vmatmul.mubr.bf16.gmra.mrb[0].mxu0 %v195
    %v479 = vpop.f32.mrb[0].mxu0
    %v480 = vadd.f32 %v169, %v479
    %v481 = vpop.f32.mrb[0].mxu0
    %v482 = vadd.f32 %v173, %v481
    %v483 = vpop.f32.mrb[0].mxu0
    %v484 = vadd.f32 %v169, %v483
    %v485 = vpop.f32.mrb[0].mxu0
    %v486 = vadd.f32 %v173, %v485
    %487 = vmatprep.mubr.bf16.mxu0 0
    %488 = vmatmul.mubr.bf16.gmra.mrb[0].mxu0 %v196
    %v489 = vpop.f32.mrb[0].mxu0
    %v490 = vadd.f32 %v169, %v489
    %v491 = vpop.f32.mrb[0].mxu0
    %v492 = vadd.f32 %v173, %v491
    %v493 = vpop.f32.mrb[0].mxu0
    %v494 = vadd.f32 %v169, %v493
    %v495 = vpop.f32.mrb[0].mxu0
    %v496 = vadd.f32 %v173, %v495
    %497 = vmatprep.mubr.bf16.mxu0 0
    %498 = vmatmul.mubr.bf16.gmra.mrb[0].mxu0 %v197
    %v499 = vpop.f32.mrb[0].mxu0
    %v500 = vadd.f32 %v169, %v499
    %v501 = vpop.f32.mrb[0].mxu0
    %v502 = vadd.f32 %v173, %v501
    %v503 = vpop.f32.mrb[0].mxu0
    %v504 = vadd.f32 %v169, %v503
    %v505 = vpop.f32.mrb[0].mxu0
    %v506 = vadd.f32 %v173, %v505
    %507 = vdwg.mxu0
    %508 = vst [vmem:[#allocation3] sm:$0xff] %v397
    %509 = vst [vmem:[#allocation3 + $0x8] sm:$0xff] %v399
    %510 = vst [vmem:[#allocation3 + $0x10] sm:$0xff] %v470
    %511 = vst [vmem:[#allocation3 + $0x18] sm:$0xff] %v472
    %512 = vst [vmem:[#allocation3 + $0x20] sm:$0xff] %v401
    %513 = vst [vmem:[#allocation3 + $0x28] sm:$0xff] %v403
    %514 = vst [vmem:[#allocation3 + $0x30] sm:$0xff] %v474
    %515 = vst [vmem:[#allocation3 + $0x38] sm:$0xff] %v476
    %516 = vst [vmem:[#allocation3 + $0x40] sm:$0xff] %v407
    %517 = vst [vmem:[#allocation3 + $0x48] sm:$0xff] %v409
    %518 = vst [vmem:[#allocation3 + $0x50] sm:$0xff] %v480
    %519 = vst [vmem:[#allocation3 + $0x58] sm:$0xff] %v482
    %520 = vst [vmem:[#allocation3 + $0x60] sm:$0xff] %v411
    %521 = vst [vmem:[#allocation3 + $0x68] sm:$0xff] %v413
    %522 = vst [vmem:[#allocation3 + $0x70] sm:$0xff] %v484
    %523 = vst [vmem:[#allocation3 + $0x78] sm:$0xff] %v486
    %524 = vst [vmem:[#allocation3 + $0x80] sm:$0xff] %v417
    %525 = vst [vmem:[#allocation3 + $0x88] sm:$0xff] %v419
    %526 = vst [vmem:[#allocation3 + $0x90] sm:$0xff] %v490
    %527 = vst [vmem:[#allocation3 + $0x98] sm:$0xff] %v492
    %528 = vst [vmem:[#allocation3 + $0xa0] sm:$0xff] %v421
    %529 = vst [vmem:[#allocation3 + $0xa8] sm:$0xff] %v423
    %530 = vst [vmem:[#allocation3 + $0xb0] sm:$0xff] %v494
    %531 = vst [vmem:[#allocation3 + $0xb8] sm:$0xff] %v496
    %532 = vst [vmem:[#allocation3 + $0xc0] sm:$0xff] %v427
    %533 = vst [vmem:[#allocation3 + $0xc8] sm:$0xff] %v429
    %534 = vst [vmem:[#allocation3 + $0xd0] sm:$0xff] %v500
    %535 = vst [vmem:[#allocation3 + $0xd8] sm:$0xff] %v502
    %536 = vst [vmem:[#allocation3 + $0xe0] sm:$0xff] %v431
    %537 = vst [vmem:[#allocation3 + $0xe8] sm:$0xff] %v433
    %538 = vst [vmem:[#allocation3 + $0xf0] sm:$0xff] %v504
    %539 = vst [vmem:[#allocation3 + $0xf8] sm:$0xff] %v506
    %v540 = vld [vmem:[#allocation3] sm:$0xff]
    %v541 = vld [vmem:[#allocation3 + $0x8] sm:$0xff]
    %v542 = vld [vmem:[#allocation3 + $0x10] sm:$0xff]
    %v543 = vld [vmem:[#allocation3 + $0x18] sm:$0xff]
    %v544 = vld [vmem:[#allocation9] sm:$0xff]
    %v545 = vld [vmem:[#allocation9 + $0x8] sm:$0xff]
    %v546 = vld [vmem:[#allocation9 + $0x10] sm:$0xff]
    %v547 = vld [vmem:[#allocation9 + $0x18] sm:$0xff]
    %v548 = vld [vmem:[#allocation9 + $0x20] sm:$0xff]
    %v549 = vld [vmem:[#allocation9 + $0x28] sm:$0xff]
    %v550 = vld [vmem:[#allocation9 + $0x30] sm:$0xff]
    %v551 = vld [vmem:[#allocation9 + $0x38] sm:$0xff]
    %v552 = vld [vmem:[#allocation9 + $0x40] sm:$0xff]
    %v553 = vld [vmem:[#allocation9 + $0x48] sm:$0xff]
    %v554 = vld [vmem:[#allocation9 + $0x50] sm:$0xff]
    %v555 = vld [vmem:[#allocation9 + $0x58] sm:$0xff]
    %v556 = vld [vmem:[#allocation9 + $0x60] sm:$0xff]
    %v557 = vld [vmem:[#allocation9 + $0x68] sm:$0xff]
    %v558 = vld [vmem:[#allocation9 + $0x70] sm:$0xff]
    %v559 = vld [vmem:[#allocation9 + $0x78] sm:$0xff]
    %v560 = vld [vmem:[#allocation9 + $0x80] sm:$0xff]
    %v561 = vld [vmem:[#allocation9 + $0x88] sm:$0xff]
    %v562 = vld [vmem:[#allocation9 + $0x90] sm:$0xff]
    %v563 = vld [vmem:[#allocation9 + $0x98] sm:$0xff]
    %v564 = vld [vmem:[#allocation9 + $0xa0] sm:$0xff]
    %v565 = vld [vmem:[#allocation9 + $0xa8] sm:$0xff]
    %v566 = vld [vmem:[#allocation9 + $0xb0] sm:$0xff]
    %v567 = vld [vmem:[#allocation9 + $0xb8] sm:$0xff]
    %v568 = vld [vmem:[#allocation9 + $0xc0] sm:$0xff]
    %v569 = vld [vmem:[#allocation9 + $0xc8] sm:$0xff]
    %v570 = vld [vmem:[#allocation9 + $0xd0] sm:$0xff]
    %v571 = vld [vmem:[#allocation9 + $0xd8] sm:$0xff]
    %v572 = vld [vmem:[#allocation9 + $0xe0] sm:$0xff]
    %v573 = vld [vmem:[#allocation9 + $0xe8] sm:$0xff]
    %v574 = vld [vmem:[#allocation9 + $0xf0] sm:$0xff]
    %v575 = vld [vmem:[#allocation9 + $0xf8] sm:$0xff]
    %v608 = vunpack.c.l.b16 %v544
    %v609 = vunpack.c.h.b16 %v544
    %v610 = vunpack.c.l.b16 %v545
    %v611 = vunpack.c.h.b16 %v545
    %v612 = vunpack.c.l.b16 %v546
    %v613 = vunpack.c.h.b16 %v546
    %v614 = vunpack.c.l.b16 %v547
    %v615 = vunpack.c.h.b16 %v547
    %v616 = vunpack.c.l.b16 %v548
    %v617 = vunpack.c.h.b16 %v548
    %v618 = vunpack.c.l.b16 %v549
    %v619 = vunpack.c.h.b16 %v549
    %v620 = vunpack.c.l.b16 %v550
    %v621 = vunpack.c.h.b16 %v550
    %v622 = vunpack.c.l.b16 %v551
    %v623 = vunpack.c.h.b16 %v551
    %v624 = vunpack.c.l.b16 %v552
    %v625 = vunpack.c.h.b16 %v552
    %v626 = vunpack.c.l.b16 %v553
    %v627 = vunpack.c.h.b16 %v553
    %v628 = vunpack.c.l.b16 %v554
    %v629 = vunpack.c.h.b16 %v554
    %v630 = vunpack.c.l.b16 %v555
    %v631 = vunpack.c.h.b16 %v555
    %v632 = vunpack.c.l.b16 %v556
    %v633 = vunpack.c.h.b16 %v556
    %v634 = vunpack.c.l.b16 %v557
    %v635 = vunpack.c.h.b16 %v557
    %v636 = vunpack.c.l.b16 %v558
    %v637 = vunpack.c.h.b16 %v558
    %v638 = vunpack.c.l.b16 %v559
    %v639 = vunpack.c.h.b16 %v559
    %v640 = vunpack.c.l.b16 %v560
    %v641 = vunpack.c.h.b16 %v560
    %v642 = vunpack.c.l.b16 %v561
    %v643 = vunpack.c.h.b16 %v561
    %v644 = vunpack.c.l.b16 %v562
    %v645 = vunpack.c.h.b16 %v562
    %v646 = vunpack.c.l.b16 %v563
    %v647 = vunpack.c.h.b16 %v563
    %v648 = vunpack.c.l.b16 %v564
    %v649 = vunpack.c.h.b16 %v564
    %v650 = vunpack.c.l.b16 %v565
    %v651 = vunpack.c.h.b16 %v565
    %v652 = vunpack.c.l.b16 %v566
    %v653 = vunpack.c.h.b16 %v566
    %v654 = vunpack.c.l.b16 %v567
    %v655 = vunpack.c.h.b16 %v567
    %v656 = vunpack.c.l.b16 %v568
    %v657 = vunpack.c.h.b16 %v568
    %v658 = vunpack.c.l.b16 %v569
    %v659 = vunpack.c.h.b16 %v569
    %v660 = vunpack.c.l.b16 %v570
    %v661 = vunpack.c.h.b16 %v570
    %v662 = vunpack.c.l.b16 %v571
    %v663 = vunpack.c.h.b16 %v571
    %v664 = vunpack.c.l.b16 %v572
    %v665 = vunpack.c.h.b16 %v572
    %v666 = vunpack.c.l.b16 %v573
    %v667 = vunpack.c.h.b16 %v573
    %v668 = vunpack.c.l.b16 %v574
    %v669 = vunpack.c.h.b16 %v574
    %v670 = vunpack.c.l.b16 %v575
    %v671 = vunpack.c.h.b16 %v575
    %v672 = vpack.c.b16 %v612, %v608
    %v673 = vpack.c.b16 %v613, %v609
    %v674 = vpack.c.b16 %v614, %v610
    %v675 = vpack.c.b16 %v615, %v611
    %v676 = vpack.c.b16 %v620, %v616
    %v677 = vpack.c.b16 %v621, %v617
    %v678 = vpack.c.b16 %v622, %v618
    %v679 = vpack.c.b16 %v623, %v619
    %v680 = vpack.c.b16 %v628, %v624
    %v681 = vpack.c.b16 %v629, %v625
    %v682 = vpack.c.b16 %v630, %v626
    %v683 = vpack.c.b16 %v631, %v627
    %v684 = vpack.c.b16 %v636, %v632
    %v685 = vpack.c.b16 %v637, %v633
    %v686 = vpack.c.b16 %v638, %v634
    %v687 = vpack.c.b16 %v639, %v635
    %v688 = vpack.c.b16 %v644, %v640
    %v689 = vpack.c.b16 %v645, %v641
    %v690 = vpack.c.b16 %v646, %v642
    %v691 = vpack.c.b16 %v647, %v643
    %v692 = vpack.c.b16 %v652, %v648
    %v693 = vpack.c.b16 %v653, %v649
    %v694 = vpack.c.b16 %v654, %v650
    %v695 = vpack.c.b16 %v655, %v651
    %v696 = vpack.c.b16 %v660, %v656
    %v697 = vpack.c.b16 %v661, %v657
    %v698 = vpack.c.b16 %v662, %v658
    %v699 = vpack.c.b16 %v663, %v659
    %v700 = vpack.c.b16 %v668, %v664
    %v701 = vpack.c.b16 %v669, %v665
    %v702 = vpack.c.b16 %v670, %v666
    %v703 = vpack.c.b16 %v671, %v667
    %736 = vmatprep.subr.bf16.mxu0 %v673
    %737 = vmatpush1.bf16.msra.mxu0 %v672
    %738 = vmatprep.subr.bf16.mxu0 %v677
    %739 = vmatpush1.bf16.msra.mxu0 %v676
    %740 = vmatprep.subr.bf16.mxu0 %v681
    %741 = vmatpush1.bf16.msra.mxu0 %v680
    %742 = vmatprep.subr.bf16.mxu0 %v685
    %743 = vmatpush1.bf16.msra.mxu0 %v684
    %744 = vmatprep.subr.bf16.mxu0 %v689
    %745 = vmatpush1.bf16.msra.mxu0 %v688
    %746 = vmatprep.subr.bf16.mxu0 %v693
    %747 = vmatpush1.bf16.msra.mxu0 %v692
    %748 = vmatprep.subr.bf16.mxu0 %v697
    %749 = vmatpush1.bf16.msra.mxu0 %v696
    %750 = vmatprep.subr.bf16.mxu0 %v701
    %751 = vmatpush1.bf16.msra.mxu0 %v700
    %752 = vmatprep.subr.bf16.mxu0 0
    %753 = vmatpush1.bf16.msra.mxu0 0
    %754 = vmatprep.subr.bf16.mxu0 0
    %755 = vmatpush1.bf16.msra.mxu0 0
    %756 = vmatprep.subr.bf16.mxu0 0
    %757 = vmatpush1.bf16.msra.mxu0 0
    %758 = vmatprep.subr.bf16.mxu0 0
    %759 = vmatpush1.bf16.msra.mxu0 0
    %760 = vmatprep.subr.bf16.mxu0 0
    %761 = vmatpush1.bf16.msra.mxu0 0
    %762 = vmatprep.subr.bf16.mxu0 0
    %763 = vmatpush1.bf16.msra.mxu0 0
    %764 = vmatprep.subr.bf16.mxu0 0
    %765 = vmatpush1.bf16.msra.mxu0 0
    %766 = vmatprep.subr.bf16.mxu0 0
    %767 = vmatpush1.bf16.msra.mxu0 0
    %768 = vmatprep.mubr.bf16.mxu0 0
    %769 = vmatmul.mubr.bf16.gmra.mrb[0].mxu0 0
    %v770 = vpop.f32.mrb[0].mxu0
    %v771 = vadd.f32 0.0, %v770
    %v772 = vpop.f32.mrb[0].mxu0
    %v773 = vadd.f32 0.0, %v772
    %v774 = vpop.f32.mrb[0].mxu0
    %v775 = vpop.f32.mrb[0].mxu0
    %776 = vdwg.mxu0
    %777 = vmatprep.subr.bf16.mxu0 %v675
    %778 = vmatpush1.bf16.msra.mxu0 %v674
    %779 = vmatprep.subr.bf16.mxu0 %v679
    %780 = vmatpush1.bf16.msra.mxu0 %v678
    %781 = vmatprep.subr.bf16.mxu0 %v683
    %782 = vmatpush1.bf16.msra.mxu0 %v682
    %783 = vmatprep.subr.bf16.mxu0 %v687
    %784 = vmatpush1.bf16.msra.mxu0 %v686
    %785 = vmatprep.subr.bf16.mxu0 %v691
    %786 = vmatpush1.bf16.msra.mxu0 %v690
    %787 = vmatprep.subr.bf16.mxu0 %v695
    %788 = vmatpush1.bf16.msra.mxu0 %v694
    %789 = vmatprep.subr.bf16.mxu0 %v699
    %790 = vmatpush1.bf16.msra.mxu0 %v698
    %791 = vmatprep.subr.bf16.mxu0 %v703
    %792 = vmatpush1.bf16.msra.mxu0 %v702
    %793 = vmatprep.subr.bf16.mxu0 0
    %794 = vmatpush1.bf16.msra.mxu0 0
    %795 = vmatprep.subr.bf16.mxu0 0
    %796 = vmatpush1.bf16.msra.mxu0 0
    %797 = vmatprep.subr.bf16.mxu0 0
    %798 = vmatpush1.bf16.msra.mxu0 0
    %799 = vmatprep.subr.bf16.mxu0 0
    %800 = vmatpush1.bf16.msra.mxu0 0
    %801 = vmatprep.subr.bf16.mxu0 0
    %802 = vmatpush1.bf16.msra.mxu0 0
    %803 = vmatprep.subr.bf16.mxu0 0
    %804 = vmatpush1.bf16.msra.mxu0 0
    %805 = vmatprep.subr.bf16.mxu0 0
    %806 = vmatpush1.bf16.msra.mxu0 0
    %807 = vmatprep.subr.bf16.mxu0 0
    %808 = vmatpush1.bf16.msra.mxu0 0
    %809 = vmatprep.mubr.bf16.mxu0 0
    %810 = vmatmul.mubr.bf16.gmra.mrb[0].mxu0 0
    %v811 = vpop.f32.mrb[0].mxu0
    %v812 = vadd.f32 0.0, %v811
    %v813 = vpop.f32.mrb[0].mxu0
    %v814 = vadd.f32 0.0, %v813
    %v815 = vpop.f32.mrb[0].mxu0
    %v816 = vpop.f32.mrb[0].mxu0
    %817 = vdwg.mxu0
    %v818 = vadd.f32 %v540, %v771
    %v819 = vadd.f32 %v541, %v773
    %v820 = vadd.f32 %v542, %v812
    %v821 = vadd.f32 %v543, %v814
    %v822 = vxor.u32 %v818, 2147483648
    %v823 = vmul.f32 %v822, 1.442695
    %v824 = vpow.pop %v823
    %v825 = vadd.f32 %v824, 1.0
    %v826 = vrcp.pop %v825
    %v827 = vmul.f32 1.0, %v826
    %v828 = vxor.u32 %v819, 2147483648
    %v829 = vmul.f32 %v828, 1.442695
    %v830 = vpow.pop %v829
    %v831 = vadd.f32 %v830, 1.0
    %v832 = vrcp.pop %v831
    %v833 = vmul.f32 1.0, %v832
    %v834 = vtanh.pop %v820
    %v835 = vxor.u32 %v821, 2147483648
    %v836 = vmul.f32 %v835, 1.442695
    %v837 = vpow.pop %v836
    %v838 = vadd.f32 %v837, 1.0
    %v839 = vrcp.pop %v838
    %v840 = vmul.f32 1.0, %v839
    %v841 = vmul.f32 %v833, 0.0
    %v842 = vmul.f32 %v827, %v834
    %v843 = vadd.f32 %v841, %v842
    %v844 = vtanh.pop %v843
    %v845 = vmul.f32 %v840, %v844
    %846 = vst [vmem:[#allocation2] sm:$0xff] %v845
    %v847 = vld [vmem:[#allocation3 + $0x20] sm:$0xff]
    %v848 = vld [vmem:[#allocation3 + $0x28] sm:$0xff]
    %v849 = vld [vmem:[#allocation3 + $0x30] sm:$0xff]
    %v850 = vld [vmem:[#allocation3 + $0x38] sm:$0xff]
    %v851 = vpack.c.bf16 %v845, %v845
    %v852 = vld [vmem:[#allocation9] sm:$0xff]
    %v853 = vld [vmem:[#allocation9 + $0x8] sm:$0xff]
    %v854 = vld [vmem:[#allocation9 + $0x10] sm:$0xff]
    %v855 = vld [vmem:[#allocation9 + $0x18] sm:$0xff]
    %v856 = vld [vmem:[#allocation9 + $0x20] sm:$0xff]
    %v857 = vld [vmem:[#allocation9 + $0x28] sm:$0xff]
    %v858 = vld [vmem:[#allocation9 + $0x30] sm:$0xff]
    %v859 = vld [vmem:[#allocation9 + $0x38] sm:$0xff]
    %v860 = vld [vmem:[#allocation9 + $0x40] sm:$0xff]
    %v861 = vld [vmem:[#allocation9 + $0x48] sm:$0xff]
    %v862 = vld [vmem:[#allocation9 + $0x50] sm:$0xff]
    %v863 = vld [vmem:[#allocation9 + $0x58] sm:$0xff]
    %v864 = vld [vmem:[#allocation9 + $0x60] sm:$0xff]
    %v865 = vld [vmem:[#allocation9 + $0x68] sm:$0xff]
    %v866 = vld [vmem:[#allocation9 + $0x70] sm:$0xff]
    %v867 = vld [vmem:[#allocation9 + $0x78] sm:$0xff]
    %v868 = vld [vmem:[#allocation9 + $0x80] sm:$0xff]
    %v869 = vld [vmem:[#allocation9 + $0x88] sm:$0xff]
    %v870 = vld [vmem:[#allocation9 + $0x90] sm:$0xff]
    %v871 = vld [vmem:[#allocation9 + $0x98] sm:$0xff]
    %v872 = vld [vmem:[#allocation9 + $0xa0] sm:$0xff]
    %v873 = vld [vmem:[#allocation9 + $0xa8] sm:$0xff]
    %v874 = vld [vmem:[#allocation9 + $0xb0] sm:$0xff]
    %v875 = vld [vmem:[#allocation9 + $0xb8] sm:$0xff]
    %v876 = vld [vmem:[#allocation9 + $0xc0] sm:$0xff]
    %v877 = vld [vmem:[#allocation9 + $0xc8] sm:$0xff]
    %v878 = vld [vmem:[#allocation9 + $0xd0] sm:$0xff]
    %v879 = vld [vmem:[#allocation9 + $0xd8] sm:$0xff]
    %v880 = vld [vmem:[#allocation9 + $0xe0] sm:$0xff]
    %v881 = vld [vmem:[#allocation9 + $0xe8] sm:$0xff]
    %v882 = vld [vmem:[#allocation9 + $0xf0] sm:$0xff]
    %v883 = vld [vmem:[#allocation9 + $0xf8] sm:$0xff]
    %v916 = vunpack.c.l.b16 %v852
    %v917 = vunpack.c.h.b16 %v852
    %v918 = vunpack.c.l.b16 %v853
    %v919 = vunpack.c.h.b16 %v853
    %v920 = vunpack.c.l.b16 %v854
    %v921 = vunpack.c.h.b16 %v854
    %v922 = vunpack.c.l.b16 %v855
    %v923 = vunpack.c.h.b16 %v855
    %v924 = vunpack.c.l.b16 %v856
    %v925 = vunpack.c.h.b16 %v856
    %v926 = vunpack.c.l.b16 %v857
    %v927 = vunpack.c.h.b16 %v857
    %v928 = vunpack.c.l.b16 %v858
    %v929 = vunpack.c.h.b16 %v858
    %v930 = vunpack.c.l.b16 %v859
    %v931 = vunpack.c.h.b16 %v859
    %v932 = vunpack.c.l.b16 %v860
    %v933 = vunpack.c.h.b16 %v860
    %v934 = vunpack.c.l.b16 %v861
    %v935 = vunpack.c.h.b16 %v861
    %v936 = vunpack.c.l.b16 %v862
    %v937 = vunpack.c.h.b16 %v862
    %v938 = vunpack.c.l.b16 %v863
    %v939 = vunpack.c.h.b16 %v863
    %v940 = vunpack.c.l.b16 %v864
    %v941 = vunpack.c.h.b16 %v864
    %v942 = vunpack.c.l.b16 %v865
    %v943 = vunpack.c.h.b16 %v865
    %v944 = vunpack.c.l.b16 %v866
    %v945 = vunpack.c.h.b16 %v866
    %v946 = vunpack.c.l.b16 %v867
    %v947 = vunpack.c.h.b16 %v867
    %v948 = vunpack.c.l.b16 %v868
    %v949 = vunpack.c.h.b16 %v868
    %v950 = vunpack.c.l.b16 %v869
    %v951 = vunpack.c.h.b16 %v869
    %v952 = vunpack.c.l.b16 %v870
    %v953 = vunpack.c.h.b16 %v870
    %v954 = vunpack.c.l.b16 %v871
    %v955 = vunpack.c.h.b16 %v871
    %v956 = vunpack.c.l.b16 %v872
    %v957 = vunpack.c.h.b16 %v872
    %v958 = vunpack.c.l.b16 %v873
    %v959 = vunpack.c.h.b16 %v873
    %v960 = vunpack.c.l.b16 %v874
    %v961 = vunpack.c.h.b16 %v874
    %v962 = vunpack.c.l.b16 %v875
    %v963 = vunpack.c.h.b16 %v875
    %v964 = vunpack.c.l.b16 %v876
    %v965 = vunpack.c.h.b16 %v876
    %v966 = vunpack.c.l.b16 %v877
    %v967 = vunpack.c.h.b16 %v877
    %v968 = vunpack.c.l.b16 %v878
    %v969 = vunpack.c.h.b16 %v878
    %v970 = vunpack.c.l.b16 %v879
    %v971 = vunpack.c.h.b16 %v879
    %v972 = vunpack.c.l.b16 %v880
    %v973 = vunpack.c.h.b16 %v880
    %v974 = vunpack.c.l.b16 %v881
    %v975 = vunpack.c.h.b16 %v881
    %v976 = vunpack.c.l.b16 %v882
    %v977 = vunpack.c.h.b16 %v882
    %v978 = vunpack.c.l.b16 %v883
    %v979 = vunpack.c.h.b16 %v883
    %v980 = vpack.c.b16 %v920, %v916
    %v981 = vpack.c.b16 %v921, %v917
    %v982 = vpack.c.b16 %v922, %v918
    %v983 = vpack.c.b16 %v923, %v919
    %v984 = vpack.c.b16 %v928, %v924
    %v985 = vpack.c.b16 %v929, %v925
    %v986 = vpack.c.b16 %v930, %v926
    %v987 = vpack.c.b16 %v931, %v927
    %v988 = vpack.c.b16 %v936, %v932
    %v989 = vpack.c.b16 %v937, %v933
    %v990 = vpack.c.b16 %v938, %v934
    %v991 = vpack.c.b16 %v939, %v935
    %v992 = vpack.c.b16 %v944, %v940
    %v993 = vpack.c.b16 %v945, %v941
    %v994 = vpack.c.b16 %v946, %v942
    %v995 = vpack.c.b16 %v947, %v943
    %v996 = vpack.c.b16 %v952, %v948
    %v997 = vpack.c.b16 %v953, %v949
    %v998 = vpack.c.b16 %v954, %v950
    %v999 = vpack.c.b16 %v955, %v951
    %v1000 = vpack.c.b16 %v960, %v956
    %v1001 = vpack.c.b16 %v961, %v957
    %v1002 = vpack.c.b16 %v962, %v958
    %v1003 = vpack.c.b16 %v963, %v959
    %v1004 = vpack.c.b16 %v968, %v964
    %v1005 = vpack.c.b16 %v969, %v965
    %v1006 = vpack.c.b16 %v970, %v966
    %v1007 = vpack.c.b16 %v971, %v967
    %v1008 = vpack.c.b16 %v976, %v972
    %v1009 = vpack.c.b16 %v977, %v973
    %v1010 = vpack.c.b16 %v978, %v974
    %v1011 = vpack.c.b16 %v979, %v975
    %1044 = vmatprep.subr.bf16.mxu0 %v981
    %1045 = vmatpush1.bf16.msra.mxu0 %v980
    %1046 = vmatprep.subr.bf16.mxu0 %v985
    %1047 = vmatpush1.bf16.msra.mxu0 %v984
    %1048 = vmatprep.subr.bf16.mxu0 %v989
    %1049 = vmatpush1.bf16.msra.mxu0 %v988
    %1050 = vmatprep.subr.bf16.mxu0 %v993
    %1051 = vmatpush1.bf16.msra.mxu0 %v992
    %1052 = vmatprep.subr.bf16.mxu0 %v997
    %1053 = vmatpush1.bf16.msra.mxu0 %v996
    %1054 = vmatprep.subr.bf16.mxu0 %v1001
    %1055 = vmatpush1.bf16.msra.mxu0 %v1000
    %1056 = vmatprep.subr.bf16.mxu0 %v1005
    %1057 = vmatpush1.bf16.msra.mxu0 %v1004
    %1058 = vmatprep.subr.bf16.mxu0 %v1009
    %1059 = vmatpush1.bf16.msra.mxu0 %v1008
    %1060 = vmatprep.subr.bf16.mxu0 0
    %1061 = vmatpush1.bf16.msra.mxu0 0
    %1062 = vmatprep.subr.bf16.mxu0 0
    %1063 = vmatpush1.bf16.msra.mxu0 0
    %1064 = vmatprep.subr.bf16.mxu0 0
    %1065 = vmatpush1.bf16.msra.mxu0 0
    %1066 = vmatprep.subr.bf16.mxu0 0
    %1067 = vmatpush1.bf16.msra.mxu0 0
    %1068 = vmatprep.subr.bf16.mxu0 0
    %1069 = vmatpush1.bf16.msra.mxu0 0
    %1070 = vmatprep.subr.bf16.mxu0 0
    %1071 = vmatpush1.bf16.msra.mxu0 0
    %1072 = vmatprep.subr.bf16.mxu0 0
    %1073 = vmatpush1.bf16.msra.mxu0 0
    %1074 = vmatprep.subr.bf16.mxu0 0
    %1075 = vmatpush1.bf16.msra.mxu0 0
    %1076 = vmatprep.mubr.bf16.mxu0 0
    %1077 = vmatmul.mubr.bf16.gmra.mrb[0].mxu0 %v851
    %v1078 = vpop.f32.mrb[0].mxu0
    %v1079 = vadd.f32 0.0, %v1078
    %v1080 = vpop.f32.mrb[0].mxu0
    %v1081 = vadd.f32 0.0, %v1080
    %v1082 = vpop.f32.mrb[0].mxu0
    %v1083 = vpop.f32.mrb[0].mxu0
    %1084 = vdwg.mxu0
    %1085 = vmatprep.subr.bf16.mxu0 %v983
    %1086 = vmatpush1.bf16.msra.mxu0 %v982
    %1087 = vmatprep.subr.bf16.mxu0 %v987
    %1088 = vmatpush1.bf16.msra.mxu0 %v986
    %1089 = vmatprep.subr.bf16.mxu0 %v991
    %1090 = vmatpush1.bf16.msra.mxu0 %v990
    %1091 = vmatprep.subr.bf16.mxu0 %v995
    %1092 = vmatpush1.bf16.msra.mxu0 %v994
    %1093 = vmatprep.subr.bf16.mxu0 %v999
    %1094 = vmatpush1.bf16.msra.mxu0 %v998
    %1095 = vmatprep.subr.bf16.mxu0 %v1003
    %1096 = vmatpush1.bf16.msra.mxu0 %v1002
    %1097 = vmatprep.subr.bf16.mxu0 %v1007
    %1098 = vmatpush1.bf16.msra.mxu0 %v1006
    %1099 = vmatprep.subr.bf16.mxu0 %v1011
    %1100 = vmatpush1.bf16.msra.mxu0 %v1010
    %1101 = vmatprep.subr.bf16.mxu0 0
    %1102 = vmatpush1.bf16.msra.mxu0 0
    %1103 = vmatprep.subr.bf16.mxu0 0
    %1104 = vmatpush1.bf16.msra.mxu0 0
    %1105 = vmatprep.subr.bf16.mxu0 0
    %1106 = vmatpush1.bf16.msra.mxu0 0
    %1107 = vmatprep.subr.bf16.mxu0 0
    %1108 = vmatpush1.bf16.msra.mxu0 0
    %1109 = vmatprep.subr.bf16.mxu0 0
    %1110 = vmatpush1.bf16.msra.mxu0 0
    %1111 = vmatprep.subr.bf16.mxu0 0
    %1112 = vmatpush1.bf16.msra.mxu0 0
    %1113 = vmatprep.subr.bf16.mxu0 0
    %1114 = vmatpush1.bf16.msra.mxu0 0
    %1115 = vmatprep.subr.bf16.mxu0 0
    %1116 = vmatpush1.bf16.msra.mxu0 0
    %1117 = vmatprep.mubr.bf16.mxu0 0
    %1118 = vmatmul.mubr.bf16.gmra.mrb[0].mxu0 %v851
    %v1119 = vpop.f32.mrb[0].mxu0
    %v1120 = vadd.f32 0.0, %v1119
    %v1121 = vpop.f32.mrb[0].mxu0
    %v1122 = vadd.f32 0.0, %v1121
    %v1123 = vpop.f32.mrb[0].mxu0
    %v1124 = vpop.f32.mrb[0].mxu0
    %1125 = vdwg.mxu0
    %v1126 = vadd.f32 %v847, %v1079
    %v1127 = vadd.f32 %v848, %v1081
    %v1128 = vadd.f32 %v849, %v1120
    %v1129 = vadd.f32 %v850, %v1122
    %v1130 = vxor.u32 %v1126, 2147483648
    %v1131 = vmul.f32 %v1130, 1.442695
    %v1132 = vpow.pop %v1131
    %v1133 = vadd.f32 %v1132, 1.0
    %v1134 = vrcp.pop %v1133
    %v1135 = vmul.f32 1.0, %v1134
    %v1136 = vxor.u32 %v1127, 2147483648
    %v1137 = vmul.f32 %v1136, 1.442695
    %v1138 = vpow.pop %v1137
    %v1139 = vadd.f32 %v1138, 1.0
    %v1140 = vrcp.pop %v1139
    %v1141 = vmul.f32 1.0, %v1140
    %v1142 = vtanh.pop %v1128
    %v1143 = vxor.u32 %v1129, 2147483648
    %v1144 = vmul.f32 %v1143, 1.442695
    %v1145 = vpow.pop %v1144
    %v1146 = vadd.f32 %v1145, 1.0
    %v1147 = vrcp.pop %v1146
    %v1148 = vmul.f32 1.0, %v1147
    %v1149 = vmul.f32 %v1141, %v843
    %v1150 = vmul.f32 %v1135, %v1142
    %v1151 = vadd.f32 %v1149, %v1150
    %v1152 = vtanh.pop %v1151
    %v1153 = vmul.f32 %v1148, %v1152
    %1154 = vst [vmem:[#allocation2 + $0x8] sm:$0xff] %v1153
    %v1155 = vld [vmem:[#allocation3 + $0x40] sm:$0xff]
    %v1156 = vld [vmem:[#allocation3 + $0x48] sm:$0xff]
    %v1157 = vld [vmem:[#allocation3 + $0x50] sm:$0xff]
    %v1158 = vld [vmem:[#allocation3 + $0x58] sm:$0xff]
    %v1159 = vpack.c.bf16 %v1153, %v1153
    %v1160 = vld [vmem:[#allocation9] sm:$0xff]
    %v1161 = vld [vmem:[#allocation9 + $0x8] sm:$0xff]
    %v1162 = vld [vmem:[#allocation9 + $0x10] sm:$0xff]
    %v1163 = vld [vmem:[#allocation9 + $0x18] sm:$0xff]
    %v1164 = vld [vmem:[#allocation9 + $0x20] sm:$0xff]
    %v1165 = vld [vmem:[#allocation9 + $0x28] sm:$0xff]
    %v1166 = vld [vmem:[#allocation9 + $0x30] sm:$0xff]
    %v1167 = vld [vmem:[#allocation9 + $0x38] sm:$0xff]
    %v1168 = vld [vmem:[#allocation9 + $0x40] sm:$0xff]
    %v1169 = vld [vmem:[#allocation9 + $0x48] sm:$0xff]
    %v1170 = vld [vmem:[#allocation9 + $0x50] sm:$0xff]
    %v1171 = vld [vmem:[#allocation9 + $0x58] sm:$0xff]
    %v1172 = vld [vmem:[#allocation9 + $0x60] sm:$0xff]
    %v1173 = vld [vmem:[#allocation9 + $0x68] sm:$0xff]
    %v1174 = vld [vmem:[#allocation9 + $0x70] sm:$0xff]
    %v1175 = vld [vmem:[#allocation9 + $0x78] sm:$0xff]
    %v1176 = vld [vmem:[#allocation9 + $0x80] sm:$0xff]
    %v1177 = vld [vmem:[#allocation9 + $0x88] sm:$0xff]
    %v1178 = vld [vmem:[#allocation9 + $0x90] sm:$0xff]
    %v1179 = vld [vmem:[#allocation9 + $0x98] sm:$0xff]
    %v1180 = vld [vmem:[#allocation9 + $0xa0] sm:$0xff]
    %v1181 = vld [vmem:[#allocation9 + $0xa8] sm:$0xff]
    %v1182 = vld [vmem:[#allocation9 + $0xb0] sm:$0xff]
    %v1183 = vld [vmem:[#allocation9 + $0xb8] sm:$0xff]
    %v1184 = vld [vmem:[#allocation9 + $0xc0] sm:$0xff]
    %v1185 = vld [vmem:[#allocation9 + $0xc8] sm:$0xff]
    %v1186 = vld [vmem:[#allocation9 + $0xd0] sm:$0xff]
    %v1187 = vld [vmem:[#allocation9 + $0xd8] sm:$0xff]
    %v1188 = vld [vmem:[#allocation9 + $0xe0] sm:$0xff]
    %v1189 = vld [vmem:[#allocation9 + $0xe8] sm:$0xff]
    %v1190 = vld [vmem:[#allocation9 + $0xf0] sm:$0xff]
    %v1191 = vld [vmem:[#allocation9 + $0xf8] sm:$0xff]
    %v1224 = vunpack.c.l.b16 %v1160
    %v1225 = vunpack.c.h.b16 %v1160
    %v1226 = vunpack.c.l.b16 %v1161
    %v1227 = vunpack.c.h.b16 %v1161
    %v1228 = vunpack.c.l.b16 %v1162
    %v1229 = vunpack.c.h.b16 %v1162
    %v1230 = vunpack.c.l.b16 %v1163
    %v1231 = vunpack.c.h.b16 %v1163
    %v1232 = vunpack.c.l.b16 %v1164
    %v1233 = vunpack.c.h.b16 %v1164
    %v1234 = vunpack.c.l.b16 %v1165
    %v1235 = vunpack.c.h.b16 %v1165
    %v1236 = vunpack.c.l.b16 %v1166
    %v1237 = vunpack.c.h.b16 %v1166
    %v1238 = vunpack.c.l.b16 %v1167
    %v1239 = vunpack.c.h.b16 %v1167
    %v1240 = vunpack.c.l.b16 %v1168
    %v1241 = vunpack.c.h.b16 %v1168
    %v1242 = vunpack.c.l.b16 %v1169
    %v1243 = vunpack.c.h.b16 %v1169
    %v1244 = vunpack.c.l.b16 %v1170
    %v1245 = vunpack.c.h.b16 %v1170
    %v1246 = vunpack.c.l.b16 %v1171
    %v1247 = vunpack.c.h.b16 %v1171
    %v1248 = vunpack.c.l.b16 %v1172
    %v1249 = vunpack.c.h.b16 %v1172
    %v1250 = vunpack.c.l.b16 %v1173
    %v1251 = vunpack.c.h.b16 %v1173
    %v1252 = vunpack.c.l.b16 %v1174
    %v1253 = vunpack.c.h.b16 %v1174
    %v1254 = vunpack.c.l.b16 %v1175
    %v1255 = vunpack.c.h.b16 %v1175
    %v1256 = vunpack.c.l.b16 %v1176
    %v1257 = vunpack.c.h.b16 %v1176
    %v1258 = vunpack.c.l.b16 %v1177
    %v1259 = vunpack.c.h.b16 %v1177
    %v1260 = vunpack.c.l.b16 %v1178
    %v1261 = vunpack.c.h.b16 %v1178
    %v1262 = vunpack.c.l.b16 %v1179
    %v1263 = vunpack.c.h.b16 %v1179
    %v1264 = vunpack.c.l.b16 %v1180
    %v1265 = vunpack.c.h.b16 %v1180
    %v1266 = vunpack.c.l.b16 %v1181
    %v1267 = vunpack.c.h.b16 %v1181
    %v1268 = vunpack.c.l.b16 %v1182
    %v1269 = vunpack.c.h.b16 %v1182
    %v1270 = vunpack.c.l.b16 %v1183
    %v1271 = vunpack.c.h.b16 %v1183
    %v1272 = vunpack.c.l.b16 %v1184
    %v1273 = vunpack.c.h.b16 %v1184
    %v1274 = vunpack.c.l.b16 %v1185
    %v1275 = vunpack.c.h.b16 %v1185
    %v1276 = vunpack.c.l.b16 %v1186
    %v1277 = vunpack.c.h.b16 %v1186
    %v1278 = vunpack.c.l.b16 %v1187
    %v1279 = vunpack.c.h.b16 %v1187
    %v1280 = vunpack.c.l.b16 %v1188
    %v1281 = vunpack.c.h.b16 %v1188
    %v1282 = vunpack.c.l.b16 %v1189
    %v1283 = vunpack.c.h.b16 %v1189
    %v1284 = vunpack.c.l.b16 %v1190
    %v1285 = vunpack.c.h.b16 %v1190
    %v1286 = vunpack.c.l.b16 %v1191
    %v1287 = vunpack.c.h.b16 %v1191
    %v1288 = vpack.c.b16 %v1228, %v1224
    %v1289 = vpack.c.b16 %v1229, %v1225
    %v1290 = vpack.c.b16 %v1230, %v1226
    %v1291 = vpack.c.b16 %v1231, %v1227
    %v1292 = vpack.c.b16 %v1236, %v1232
    %v1293 = vpack.c.b16 %v1237, %v1233
    %v1294 = vpack.c.b16 %v1238, %v1234
    %v1295 = vpack.c.b16 %v1239, %v1235
    %v1296 = vpack.c.b16 %v1244, %v1240
    %v1297 = vpack.c.b16 %v1245, %v1241
    %v1298 = vpack.c.b16 %v1246, %v1242
    %v1299 = vpack.c.b16 %v1247, %v1243
    %v1300 = vpack.c.b16 %v1252, %v1248
    %v1301 = vpack.c.b16 %v1253, %v1249
    %v1302 = vpack.c.b16 %v1254, %v1250
    %v1303 = vpack.c.b16 %v1255, %v1251
    %v1304 = vpack.c.b16 %v1260, %v1256
    %v1305 = vpack.c.b16 %v1261, %v1257
    %v1306 = vpack.c.b16 %v1262, %v1258
    %v1307 = vpack.c.b16 %v1263, %v1259
    %v1308 = vpack.c.b16 %v1268, %v1264
    %v1309 = vpack.c.b16 %v1269, %v1265
    %v1310 = vpack.c.b16 %v1270, %v1266
    %v1311 = vpack.c.b16 %v1271, %v1267
    %v1312 = vpack.c.b16 %v1276, %v1272
    %v1313 = vpack.c.b16 %v1277, %v1273
    %v1314 = vpack.c.b16 %v1278, %v1274
    %v1315 = vpack.c.b16 %v1279, %v1275
    %v1316 = vpack.c.b16 %v1284, %v1280
    %v1317 = vpack.c.b16 %v1285, %v1281
    %v1318 = vpack.c.b16 %v1286, %v1282
    %v1319 = vpack.c.b16 %v1287, %v1283
    %1352 = vmatprep.subr.bf16.mxu0 %v1289
    %1353 = vmatpush1.bf16.msra.mxu0 %v1288
    %1354 = vmatprep.subr.bf16.mxu0 %v1293
    %1355 = vmatpush1.bf16.msra.mxu0 %v1292
    %1356 = vmatprep.subr.bf16.mxu0 %v1297
    %1357 = vmatpush1.bf16.msra.mxu0 %v1296
    %1358 = vmatprep.subr.bf16.mxu0 %v1301
    %1359 = vmatpush1.bf16.msra.mxu0 %v1300
    %1360 = vmatprep.subr.bf16.mxu0 %v1305
    %1361 = vmatpush1.bf16.msra.mxu0 %v1304
    %1362 = vmatprep.subr.bf16.mxu0 %v1309
    %1363 = vmatpush1.bf16.msra.mxu0 %v1308
    %1364 = vmatprep.subr.bf16.mxu0 %v1313
    %1365 = vmatpush1.bf16.msra.mxu0 %v1312
    %1366 = vmatprep.subr.bf16.mxu0 %v1317
    %1367 = vmatpush1.bf16.msra.mxu0 %v1316
    %1368 = vmatprep.subr.bf16.mxu0 0
    %1369 = vmatpush1.bf16.msra.mxu0 0
    %1370 = vmatprep.subr.bf16.mxu0 0
    %1371 = vmatpush1.bf16.msra.mxu0 0
    %1372 = vmatprep.subr.bf16.mxu0 0
    %1373 = vmatpush1.bf16.msra.mxu0 0
    %1374 = vmatprep.subr.bf16.mxu0 0
    %1375 = vmatpush1.bf16.msra.mxu0 0
    %1376 = vmatprep.subr.bf16.mxu0 0
    %1377 = vmatpush1.bf16.msra.mxu0 0
    %1378 = vmatprep.subr.bf16.mxu0 0
    %1379 = vmatpush1.bf16.msra.mxu0 0
    %1380 = vmatprep.subr.bf16.mxu0 0
    %1381 = vmatpush1.bf16.msra.mxu0 0
    %1382 = vmatprep.subr.bf16.mxu0 0
    %1383 = vmatpush1.bf16.msra.mxu0 0
    %1384 = vmatprep.mubr.bf16.mxu0 0
    %1385 = vmatmul.mubr.bf16.gmra.mrb[0].mxu0 %v1159
    %v1386 = vpop.f32.mrb[0].mxu0
    %v1387 = vadd.f32 0.0, %v1386
    %v1388 = vpop.f32.mrb[0].mxu0
    %v1389 = vadd.f32 0.0, %v1388
    %v1390 = vpop.f32.mrb[0].mxu0
    %v1391 = vpop.f32.mrb[0].mxu0
    %1392 = vdwg.mxu0
    %1393 = vmatprep.subr.bf16.mxu0 %v1291
    %1394 = vmatpush1.bf16.msra.mxu0 %v1290
    %1395 = vmatprep.subr.bf16.mxu0 %v1295
    %1396 = vmatpush1.bf16.msra.mxu0 %v1294
    %1397 = vmatprep.subr.bf16.mxu0 %v1299
    %1398 = vmatpush1.bf16.msra.mxu0 %v1298
    %1399 = vmatprep.subr.bf16.mxu0 %v1303
    %1400 = vmatpush1.bf16.msra.mxu0 %v1302
    %1401 = vmatprep.subr.bf16.mxu0 %v1307
    %1402 = vmatpush1.bf16.msra.mxu0 %v1306
    %1403 = vmatprep.subr.bf16.mxu0 %v1311
    %1404 = vmatpush1.bf16.msra.mxu0 %v1310
    %1405 = vmatprep.subr.bf16.mxu0 %v1315
    %1406 = vmatpush1.bf16.msra.mxu0 %v1314
    %1407 = vmatprep.subr.bf16.mxu0 %v1319
    %1408 = vmatpush1.bf16.msra.mxu0 %v1318
    %1409 = vmatprep.subr.bf16.mxu0 0
    %1410 = vmatpush1.bf16.msra.mxu0 0
    %1411 = vmatprep.subr.bf16.mxu0 0
    %1412 = vmatpush1.bf16.msra.mxu0 0
    %1413 = vmatprep.subr.bf16.mxu0 0
    %1414 = vmatpush1.bf16.msra.mxu0 0
    %1415 = vmatprep.subr.bf16.mxu0 0
    %1416 = vmatpush1.bf16.msra.mxu0 0
    %1417 = vmatprep.subr.bf16.mxu0 0
    %1418 = vmatpush1.bf16.msra.mxu0 0
    %1419 = vmatprep.subr.bf16.mxu0 0
    %1420 = vmatpush1.bf16.msra.mxu0 0
    %1421 = vmatprep.subr.bf16.mxu0 0
    %1422 = vmatpush1.bf16.msra.mxu0 0
    %1423 = vmatprep.subr.bf16.mxu0 0
    %1424 = vmatpush1.bf16.msra.mxu0 0
    %1425 = vmatprep.mubr.bf16.mxu0 0
    %1426 = vmatmul.mubr.bf16.gmra.mrb[0].mxu0 %v1159
    %v1427 = vpop.f32.mrb[0].mxu0
    %v1428 = vadd.f32 0.0, %v1427
    %v1429 = vpop.f32.mrb[0].mxu0
    %v1430 = vadd.f32 0.0, %v1429
    %v1431 = vpop.f32.mrb[0].mxu0
    %v1432 = vpop.f32.mrb[0].mxu0
    %1433 = vdwg.mxu0
    %v1434 = vadd.f32 %v1155, %v1387
    %v1435 = vadd.f32 %v1156, %v1389
    %v1436 = vadd.f32 %v1157, %v1428
    %v1437 = vadd.f32 %v1158, %v1430
    %v1438 = vxor.u32 %v1434, 2147483648
    %v1439 = vmul.f32 %v1438, 1.442695
    %v1440 = vpow.pop %v1439
    %v1441 = vadd.f32 %v1440, 1.0
    %v1442 = vrcp.pop %v1441
    %v1443 = vmul.f32 1.0, %v1442
    %v1444 = vxor.u32 %v1435, 2147483648
    %v1445 = vmul.f32 %v1444, 1.442695
    %v1446 = vpow.pop %v1445
    %v1447 = vadd.f32 %v1446, 1.0
    %v1448 = vrcp.pop %v1447
    %v1449 = vmul.f32 1.0, %v1448
    %v1450 = vtanh.pop %v1436
    %v1451 = vxor.u32 %v1437, 2147483648
    %v1452 = vmul.f32 %v1451, 1.442695
    %v1453 = vpow.pop %v1452
    %v1454 = vadd.f32 %v1453, 1.0
    %v1455 = vrcp.pop %v1454
    %v1456 = vmul.f32 1.0, %v1455
    %v1457 = vmul.f32 %v1449, %v1151
    %v1458 = vmul.f32 %v1443, %v1450
    %v1459 = vadd.f32 %v1457, %v1458
    %v1460 = vtanh.pop %v1459
    %v1461 = vmul.f32 %v1456, %v1460
    %1462 = vst [vmem:[#allocation2 + $0x10] sm:$0xff] %v1461
    %v1463 = vld [vmem:[#allocation3 + $0x60] sm:$0xff]
    %v1464 = vld [vmem:[#allocation3 + $0x68] sm:$0xff]
    %v1465 = vld [vmem:[#allocation3 + $0x70] sm:$0xff]
    %v1466 = vld [vmem:[#allocation3 + $0x78] sm:$0xff]
    %v1467 = vpack.c.bf16 %v1461, %v1461
    %v1468 = vld [vmem:[#allocation9] sm:$0xff]
    %v1469 = vld [vmem:[#allocation9 + $0x8] sm:$0xff]
    %v1470 = vld [vmem:[#allocation9 + $0x10] sm:$0xff]
    %v1471 = vld [vmem:[#allocation9 + $0x18] sm:$0xff]
    %v1472 = vld [vmem:[#allocation9 + $0x20] sm:$0xff]
    %v1473 = vld [vmem:[#allocation9 + $0x28] sm:$0xff]
    %v1474 = vld [vmem:[#allocation9 + $0x30] sm:$0xff]
    %v1475 = vld [vmem:[#allocation9 + $0x38] sm:$0xff]
    %v1476 = vld [vmem:[#allocation9 + $0x40] sm:$0xff]
    %v1477 = vld [vmem:[#allocation9 + $0x48] sm:$0xff]
    %v1478 = vld [vmem:[#allocation9 + $0x50] sm:$0xff]
    %v1479 = vld [vmem:[#allocation9 + $0x58] sm:$0xff]
    %v1480 = vld [vmem:[#allocation9 + $0x60] sm:$0xff]
    %v1481 = vld [vmem:[#allocation9 + $0x68] sm:$0xff]
    %v1482 = vld [vmem:[#allocation9 + $0x70] sm:$0xff]
    %v1483 = vld [vmem:[#allocation9 + $0x78] sm:$0xff]
    %v1484 = vld [vmem:[#allocation9 + $0x80] sm:$0xff]
    %v1485 = vld [vmem:[#allocation9 + $0x88] sm:$0xff]
    %v1486 = vld [vmem:[#allocation9 + $0x90] sm:$0xff]
    %v1487 = vld [vmem:[#allocation9 + $0x98] sm:$0xff]
    %v1488 = vld [vmem:[#allocation9 + $0xa0] sm:$0xff]
    %v1489 = vld [vmem:[#allocation9 + $0xa8] sm:$0xff]
    %v1490 = vld [vmem:[#allocation9 + $0xb0] sm:$0xff]
    %v1491 = vld [vmem:[#allocation9 + $0xb8] sm:$0xff]
    %v1492 = vld [vmem:[#allocation9 + $0xc0] sm:$0xff]
    %v1493 = vld [vmem:[#allocation9 + $0xc8] sm:$0xff]
    %v1494 = vld [vmem:[#allocation9 + $0xd0] sm:$0xff]
    %v1495 = vld [vmem:[#allocation9 + $0xd8] sm:$0xff]
    %v1496 = vld [vmem:[#allocation9 + $0xe0] sm:$0xff]
    %v1497 = vld [vmem:[#allocation9 + $0xe8] sm:$0xff]
    %v1498 = vld [vmem:[#allocation9 + $0xf0] sm:$0xff]
    %v1499 = vld [vmem:[#allocation9 + $0xf8] sm:$0xff]
    %v1532 = vunpack.c.l.b16 %v1468
    %v1533 = vunpack.c.h.b16 %v1468
    %v1534 = vunpack.c.l.b16 %v1469
    %v1535 = vunpack.c.h.b16 %v1469
    %v1536 = vunpack.c.l.b16 %v1470
    %v1537 = vunpack.c.h.b16 %v1470
    %v1538 = vunpack.c.l.b16 %v1471
    %v1539 = vunpack.c.h.b16 %v1471
    %v1540 = vunpack.c.l.b16 %v1472
    %v1541 = vunpack.c.h.b16 %v1472
    %v1542 = vunpack.c.l.b16 %v1473
    %v1543 = vunpack.c.h.b16 %v1473
    %v1544 = vunpack.c.l.b16 %v1474
    %v1545 = vunpack.c.h.b16 %v1474
    %v1546 = vunpack.c.l.b16 %v1475
    %v1547 = vunpack.c.h.b16 %v1475
    %v1548 = vunpack.c.l.b16 %v1476
    %v1549 = vunpack.c.h.b16 %v1476
    %v1550 = vunpack.c.l.b16 %v1477
    %v1551 = vunpack.c.h.b16 %v1477
    %v1552 = vunpack.c.l.b16 %v1478
    %v1553 = vunpack.c.h.b16 %v1478
    %v1554 = vunpack.c.l.b16 %v1479
    %v1555 = vunpack.c.h.b16 %v1479
    %v1556 = vunpack.c.l.b16 %v1480
    %v1557 = vunpack.c.h.b16 %v1480
    %v1558 = vunpack.c.l.b16 %v1481
    %v1559 = vunpack.c.h.b16 %v1481
    %v1560 = vunpack.c.l.b16 %v1482
    %v1561 = vunpack.c.h.b16 %v1482
    %v1562 = vunpack.c.l.b16 %v1483
    %v1563 = vunpack.c.h.b16 %v1483
    %v1564 = vunpack.c.l.b16 %v1484
    %v1565 = vunpack.c.h.b16 %v1484
    %v1566 = vunpack.c.l.b16 %v1485
    %v1567 = vunpack.c.h.b16 %v1485
    %v1568 = vunpack.c.l.b16 %v1486
    %v1569 = vunpack.c.h.b16 %v1486
    %v1570 = vunpack.c.l.b16 %v1487
    %v1571 = vunpack.c.h.b16 %v1487
    %v1572 = vunpack.c.l.b16 %v1488
    %v1573 = vunpack.c.h.b16 %v1488
    %v1574 = vunpack.c.l.b16 %v1489
    %v1575 = vunpack.c.h.b16 %v1489
    %v1576 = vunpack.c.l.b16 %v1490
    %v1577 = vunpack.c.h.b16 %v1490
    %v1578 = vunpack.c.l.b16 %v1491
    %v1579 = vunpack.c.h.b16 %v1491
    %v1580 = vunpack.c.l.b16 %v1492
    %v1581 = vunpack.c.h.b16 %v1492
    %v1582 = vunpack.c.l.b16 %v1493
    %v1583 = vunpack.c.h.b16 %v1493
    %v1584 = vunpack.c.l.b16 %v1494
    %v1585 = vunpack.c.h.b16 %v1494
    %v1586 = vunpack.c.l.b16 %v1495
    %v1587 = vunpack.c.h.b16 %v1495
    %v1588 = vunpack.c.l.b16 %v1496
    %v1589 = vunpack.c.h.b16 %v1496
    %v1590 = vunpack.c.l.b16 %v1497
    %v1591 = vunpack.c.h.b16 %v1497
    %v1592 = vunpack.c.l.b16 %v1498
    %v1593 = vunpack.c.h.b16 %v1498
    %v1594 = vunpack.c.l.b16 %v1499
    %v1595 = vunpack.c.h.b16 %v1499
    %v1596 = vpack.c.b16 %v1536, %v1532
    %v1597 = vpack.c.b16 %v1537, %v1533
    %v1598 = vpack.c.b16 %v1538, %v1534
    %v1599 = vpack.c.b16 %v1539, %v1535
    %v1600 = vpack.c.b16 %v1544, %v1540
    %v1601 = vpack.c.b16 %v1545, %v1541
    %v1602 = vpack.c.b16 %v1546, %v1542
    %v1603 = vpack.c.b16 %v1547, %v1543
    %v1604 = vpack.c.b16 %v1552, %v1548
    %v1605 = vpack.c.b16 %v1553, %v1549
    %v1606 = vpack.c.b16 %v1554, %v1550
    %v1607 = vpack.c.b16 %v1555, %v1551
    %v1608 = vpack.c.b16 %v1560, %v1556
    %v1609 = vpack.c.b16 %v1561, %v1557
    %v1610 = vpack.c.b16 %v1562, %v1558
    %v1611 = vpack.c.b16 %v1563, %v1559
    %v1612 = vpack.c.b16 %v1568, %v1564
    %v1613 = vpack.c.b16 %v1569, %v1565
    %v1614 = vpack.c.b16 %v1570, %v1566
    %v1615 = vpack.c.b16 %v1571, %v1567
    %v1616 = vpack.c.b16 %v1576, %v1572
    %v1617 = vpack.c.b16 %v1577, %v1573
    %v1618 = vpack.c.b16 %v1578, %v1574
    %v1619 = vpack.c.b16 %v1579, %v1575
    %v1620 = vpack.c.b16 %v1584, %v1580
    %v1621 = vpack.c.b16 %v1585, %v1581
    %v1622 = vpack.c.b16 %v1586, %v1582
    %v1623 = vpack.c.b16 %v1587, %v1583
    %v1624 = vpack.c.b16 %v1592, %v1588
    %v1625 = vpack.c.b16 %v1593, %v1589
    %v1626 = vpack.c.b16 %v1594, %v1590
    %v1627 = vpack.c.b16 %v1595, %v1591
    %1660 = vmatprep.subr.bf16.mxu0 %v1597
    %1661 = vmatpush1.bf16.msra.mxu0 %v1596
    %1662 = vmatprep.subr.bf16.mxu0 %v1601
    %1663 = vmatpush1.bf16.msra.mxu0 %v1600
    %1664 = vmatprep.subr.bf16.mxu0 %v1605
    %1665 = vmatpush1.bf16.msra.mxu0 %v1604
    %1666 = vmatprep.subr.bf16.mxu0 %v1609
    %1667 = vmatpush1.bf16.msra.mxu0 %v1608
    %1668 = vmatprep.subr.bf16.mxu0 %v1613
    %1669 = vmatpush1.bf16.msra.mxu0 %v1612
    %1670 = vmatprep.subr.bf16.mxu0 %v1617
    %1671 = vmatpush1.bf16.msra.mxu0 %v1616
    %1672 = vmatprep.subr.bf16.mxu0 %v1621
    %1673 = vmatpush1.bf16.msra.mxu0 %v1620
    %1674 = vmatprep.subr.bf16.mxu0 %v1625
    %1675 = vmatpush1.bf16.msra.mxu0 %v1624
    %1676 = vmatprep.subr.bf16.mxu0 0
    %1677 = vmatpush1.bf16.msra.mxu0 0
    %1678 = vmatprep.subr.bf16.mxu0 0
    %1679 = vmatpush1.bf16.msra.mxu0 0
    %1680 = vmatprep.subr.bf16.mxu0 0
    %1681 = vmatpush1.bf16.msra.mxu0 0
    %1682 = vmatprep.subr.bf16.mxu0 0
    %1683 = vmatpush1.bf16.msra.mxu0 0
    %1684 = vmatprep.subr.bf16.mxu0 0
    %1685 = vmatpush1.bf16.msra.mxu0 0
    %1686 = vmatprep.subr.bf16.mxu0 0
    %1687 = vmatpush1.bf16.msra.mxu0 0
    %1688 = vmatprep.subr.bf16.mxu0 0
    %1689 = vmatpush1.bf16.msra.mxu0 0
    %1690 = vmatprep.subr.bf16.mxu0 0
    %1691 = vmatpush1.bf16.msra.mxu0 0
    %1692 = vmatprep.mubr.bf16.mxu0 0
    %1693 = vmatmul.mubr.bf16.gmra.mrb[0].mxu0 %v1467
    %v1694 = vpop.f32.mrb[0].mxu0
    %v1695 = vadd.f32 0.0, %v1694
    %v1696 = vpop.f32.mrb[0].mxu0
    %v1697 = vadd.f32 0.0, %v1696
    %v1698 = vpop.f32.mrb[0].mxu0
    %v1699 = vpop.f32.mrb[0].mxu0
    %1700 = vdwg.mxu0
    %1701 = vmatprep.subr.bf16.mxu0 %v1599
    %1702 = vmatpush1.bf16.msra.mxu0 %v1598
    %1703 = vmatprep.subr.bf16.mxu0 %v1603
    %1704 = vmatpush1.bf16.msra.mxu0 %v1602
    %1705 = vmatprep.subr.bf16.mxu0 %v1607
    %1706 = vmatpush1.bf16.msra.mxu0 %v1606
    %1707 = vmatprep.subr.bf16.mxu0 %v1611
    %1708 = vmatpush1.bf16.msra.mxu0 %v1610
    %1709 = vmatprep.subr.bf16.mxu0 %v1615
    %1710 = vmatpush1.bf16.msra.mxu0 %v1614
    %1711 = vmatprep.subr.bf16.mxu0 %v1619
    %1712 = vmatpush1.bf16.msra.mxu0 %v1618
    %1713 = vmatprep.subr.bf16.mxu0 %v1623
    %1714 = vmatpush1.bf16.msra.mxu0 %v1622
    %1715 = vmatprep.subr.bf16.mxu0 %v1627
    %1716 = vmatpush1.bf16.msra.mxu0 %v1626
    %1717 = vmatprep.subr.bf16.mxu0 0
    %1718 = vmatpush1.bf16.msra.mxu0 0
    %1719 = vmatprep.subr.bf16.mxu0 0
    %1720 = vmatpush1.bf16.msra.mxu0 0
    %1721 = vmatprep.subr.bf16.mxu0 0
    %1722 = vmatpush1.bf16.msra.mxu0 0
    %1723 = vmatprep.subr.bf16.mxu0 0
    %1724 = vmatpush1.bf16.msra.mxu0 0
    %1725 = vmatprep.subr.bf16.mxu0 0
    %1726 = vmatpush1.bf16.msra.mxu0 0
    %1727 = vmatprep.subr.bf16.mxu0 0
    %1728 = vmatpush1.bf16.msra.mxu0 0
    %1729 = vmatprep.subr.bf16.mxu0 0
    %1730 = vmatpush1.bf16.msra.mxu0 0
    %1731 = vmatprep.subr.bf16.mxu0 0
    %1732 = vmatpush1.bf16.msra.mxu0 0
    %1733 = vmatprep.mubr.bf16.mxu0 0
    %1734 = vmatmul.mubr.bf16.gmra.mrb[0].mxu0 %v1467
    %v1735 = vpop.f32.mrb[0].mxu0
    %v1736 = vadd.f32 0.0, %v1735
    %v1737 = vpop.f32.mrb[0].mxu0
    %v1738 = vadd.f32 0.0, %v1737
    %v1739 = vpop.f32.mrb[0].mxu0
    %v1740 = vpop.f32.mrb[0].mxu0
    %1741 = vdwg.mxu0
    %v1742 = vadd.f32 %v1463, %v1695
    %v1743 = vadd.f32 %v1464, %v1697
    %v1744 = vadd.f32 %v1465, %v1736
    %v1745 = vadd.f32 %v1466, %v1738
    %v1746 = vxor.u32 %v1742, 2147483648
    %v1747 = vmul.f32 %v1746, 1.442695
    %v1748 = vpow.pop %v1747
    %v1749 = vadd.f32 %v1748, 1.0
    %v1750 = vrcp.pop %v1749
    %v1751 = vmul.f32 1.0, %v1750
    %v1752 = vxor.u32 %v1743, 2147483648
    %v1753 = vmul.f32 %v1752, 1.442695
    %v1754 = vpow.pop %v1753
    %v1755 = vadd.f32 %v1754, 1.0
    %v1756 = vrcp.pop %v1755
    %v1757 = vmul.f32 1.0, %v1756
    %v1758 = vtanh.pop %v1744
    %v1759 = vxor.u32 %v1745, 2147483648
    %v1760 = vmul.f32 %v1759, 1.442695
    %v1761 = vpow.pop %v1760
    %v1762 = vadd.f32 %v1761, 1.0
    %v1763 = vrcp.pop %v1762
    %v1764 = vmul.f32 1.0, %v1763
    %v1765 = vmul.f32 %v1757, %v1459
    %v1766 = vmul.f32 %v1751, %v1758
    %v1767 = vadd.f32 %v1765, %v1766
    %v1768 = vtanh.pop %v1767
    %v1769 = vmul.f32 %v1764, %v1768
    %1770 = vst [vmem:[#allocation2 + $0x18] sm:$0xff] %v1769
    %v1771 = vld [vmem:[#allocation3 + $0x80] sm:$0xff]
    %v1772 = vld [vmem:[#allocation3 + $0x88] sm:$0xff]
    %v1773 = vld [vmem:[#allocation3 + $0x90] sm:$0xff]
    %v1774 = vld [vmem:[#allocation3 + $0x98] sm:$0xff]
    %v1775 = vpack.c.bf16 %v1769, %v1769
    %v1776 = vld [vmem:[#allocation9] sm:$0xff]
    %v1777 = vld [vmem:[#allocation9 + $0x8] sm:$0xff]
    %v1778 = vld [vmem:[#allocation9 + $0x10] sm:$0xff]
    %v1779 = vld [vmem:[#allocation9 + $0x18] sm:$0xff]
    %v1780 = vld [vmem:[#allocation9 + $0x20] sm:$0xff]
    %v1781 = vld [vmem:[#allocation9 + $0x28] sm:$0xff]
    %v1782 = vld [vmem:[#allocation9 + $0x30] sm:$0xff]
    %v1783 = vld [vmem:[#allocation9 + $0x38] sm:$0xff]
    %v1784 = vld [vmem:[#allocation9 + $0x40] sm:$0xff]
    %v1785 = vld [vmem:[#allocation9 + $0x48] sm:$0xff]
    %v1786 = vld [vmem:[#allocation9 + $0x50] sm:$0xff]
    %v1787 = vld [vmem:[#allocation9 + $0x58] sm:$0xff]
    %v1788 = vld [vmem:[#allocation9 + $0x60] sm:$0xff]
    %v1789 = vld [vmem:[#allocation9 + $0x68] sm:$0xff]
    %v1790 = vld [vmem:[#allocation9 + $0x70] sm:$0xff]
    %v1791 = vld [vmem:[#allocation9 + $0x78] sm:$0xff]
    %v1792 = vld [vmem:[#allocation9 + $0x80] sm:$0xff]
    %v1793 = vld [vmem:[#allocation9 + $0x88] sm:$0xff]
    %v1794 = vld [vmem:[#allocation9 + $0x90] sm:$0xff]
    %v1795 = vld [vmem:[#allocation9 + $0x98] sm:$0xff]
    %v1796 = vld [vmem:[#allocation9 + $0xa0] sm:$0xff]
    %v1797 = vld [vmem:[#allocation9 + $0xa8] sm:$0xff]
    %v1798 = vld [vmem:[#allocation9 + $0xb0] sm:$0xff]
    %v1799 = vld [vmem:[#allocation9 + $0xb8] sm:$0xff]
    %v1800 = vld [vmem:[#allocation9 + $0xc0] sm:$0xff]
    %v1801 = vld [vmem:[#allocation9 + $0xc8] sm:$0xff]
    %v1802 = vld [vmem:[#allocation9 + $0xd0] sm:$0xff]
    %v1803 = vld [vmem:[#allocation9 + $0xd8] sm:$0xff]
    %v1804 = vld [vmem:[#allocation9 + $0xe0] sm:$0xff]
    %v1805 = vld [vmem:[#allocation9 + $0xe8] sm:$0xff]
    %v1806 = vld [vmem:[#allocation9 + $0xf0] sm:$0xff]
    %v1807 = vld [vmem:[#allocation9 + $0xf8] sm:$0xff]
    %v1840 = vunpack.c.l.b16 %v1776
    %v1841 = vunpack.c.h.b16 %v1776
    %v1842 = vunpack.c.l.b16 %v1777
    %v1843 = vunpack.c.h.b16 %v1777
    %v1844 = vunpack.c.l.b16 %v1778
    %v1845 = vunpack.c.h.b16 %v1778
    %v1846 = vunpack.c.l.b16 %v1779
    %v1847 = vunpack.c.h.b16 %v1779
    %v1848 = vunpack.c.l.b16 %v1780
    %v1849 = vunpack.c.h.b16 %v1780
    %v1850 = vunpack.c.l.b16 %v1781
    %v1851 = vunpack.c.h.b16 %v1781
    %v1852 = vunpack.c.l.b16 %v1782
    %v1853 = vunpack.c.h.b16 %v1782
    %v1854 = vunpack.c.l.b16 %v1783
    %v1855 = vunpack.c.h.b16 %v1783
    %v1856 = vunpack.c.l.b16 %v1784
    %v1857 = vunpack.c.h.b16 %v1784
    %v1858 = vunpack.c.l.b16 %v1785
    %v1859 = vunpack.c.h.b16 %v1785
    %v1860 = vunpack.c.l.b16 %v1786
    %v1861 = vunpack.c.h.b16 %v1786
    %v1862 = vunpack.c.l.b16 %v1787
    %v1863 = vunpack.c.h.b16 %v1787
    %v1864 = vunpack.c.l.b16 %v1788
    %v1865 = vunpack.c.h.b16 %v1788
    %v1866 = vunpack.c.l.b16 %v1789
    %v1867 = vunpack.c.h.b16 %v1789
    %v1868 = vunpack.c.l.b16 %v1790
    %v1869 = vunpack.c.h.b16 %v1790
    %v1870 = vunpack.c.l.b16 %v1791
    %v1871 = vunpack.c.h.b16 %v1791
    %v1872 = vunpack.c.l.b16 %v1792
    %v1873 = vunpack.c.h.b16 %v1792
    %v1874 = vunpack.c.l.b16 %v1793
    %v1875 = vunpack.c.h.b16 %v1793
    %v1876 = vunpack.c.l.b16 %v1794
    %v1877 = vunpack.c.h.b16 %v1794
    %v1878 = vunpack.c.l.b16 %v1795
    %v1879 = vunpack.c.h.b16 %v1795
    %v1880 = vunpack.c.l.b16 %v1796
    %v1881 = vunpack.c.h.b16 %v1796
    %v1882 = vunpack.c.l.b16 %v1797
    %v1883 = vunpack.c.h.b16 %v1797
    %v1884 = vunpack.c.l.b16 %v1798
    %v1885 = vunpack.c.h.b16 %v1798
    %v1886 = vunpack.c.l.b16 %v1799
    %v1887 = vunpack.c.h.b16 %v1799
    %v1888 = vunpack.c.l.b16 %v1800
    %v1889 = vunpack.c.h.b16 %v1800
    %v1890 = vunpack.c.l.b16 %v1801
    %v1891 = vunpack.c.h.b16 %v1801
    %v1892 = vunpack.c.l.b16 %v1802
    %v1893 = vunpack.c.h.b16 %v1802
    %v1894 = vunpack.c.l.b16 %v1803
    %v1895 = vunpack.c.h.b16 %v1803
    %v1896 = vunpack.c.l.b16 %v1804
    %v1897 = vunpack.c.h.b16 %v1804
    %v1898 = vunpack.c.l.b16 %v1805
    %v1899 = vunpack.c.h.b16 %v1805
    %v1900 = vunpack.c.l.b16 %v1806
    %v1901 = vunpack.c.h.b16 %v1806
    %v1902 = vunpack.c.l.b16 %v1807
    %v1903 = vunpack.c.h.b16 %v1807
    %v1904 = vpack.c.b16 %v1844, %v1840
    %v1905 = vpack.c.b16 %v1845, %v1841
    %v1906 = vpack.c.b16 %v1846, %v1842
    %v1907 = vpack.c.b16 %v1847, %v1843
    %v1908 = vpack.c.b16 %v1852, %v1848
    %v1909 = vpack.c.b16 %v1853, %v1849
    %v1910 = vpack.c.b16 %v1854, %v1850
    %v1911 = vpack.c.b16 %v1855, %v1851
    %v1912 = vpack.c.b16 %v1860, %v1856
    %v1913 = vpack.c.b16 %v1861, %v1857
    %v1914 = vpack.c.b16 %v1862, %v1858
    %v1915 = vpack.c.b16 %v1863, %v1859
    %v1916 = vpack.c.b16 %v1868, %v1864
    %v1917 = vpack.c.b16 %v1869, %v1865
    %v1918 = vpack.c.b16 %v1870, %v1866
    %v1919 = vpack.c.b16 %v1871, %v1867
    %v1920 = vpack.c.b16 %v1876, %v1872
    %v1921 = vpack.c.b16 %v1877, %v1873
    %v1922 = vpack.c.b16 %v1878, %v1874
    %v1923 = vpack.c.b16 %v1879, %v1875
    %v1924 = vpack.c.b16 %v1884, %v1880
    %v1925 = vpack.c.b16 %v1885, %v1881
    %v1926 = vpack.c.b16 %v1886, %v1882
    %v1927 = vpack.c.b16 %v1887, %v1883
    %v1928 = vpack.c.b16 %v1892, %v1888
    %v1929 = vpack.c.b16 %v1893, %v1889
    %v1930 = vpack.c.b16 %v1894, %v1890
    %v1931 = vpack.c.b16 %v1895, %v1891
    %v1932 = vpack.c.b16 %v1900, %v1896
    %v1933 = vpack.c.b16 %v1901, %v1897
    %v1934 = vpack.c.b16 %v1902, %v1898
    %v1935 = vpack.c.b16 %v1903, %v1899
    %1968 = vmatprep.subr.bf16.mxu0 %v1905
    %1969 = vmatpush1.bf16.msra.mxu0 %v1904
    %1970 = vmatprep.subr.bf16.mxu0 %v1909
    %1971 = vmatpush1.bf16.msra.mxu0 %v1908
    %1972 = vmatprep.subr.bf16.mxu0 %v1913
    %1973 = vmatpush1.bf16.msra.mxu0 %v1912
    %1974 = vmatprep.subr.bf16.mxu0 %v1917
    %1975 = vmatpush1.bf16.msra.mxu0 %v1916
    %1976 = vmatprep.subr.bf16.mxu0 %v1921
    %1977 = vmatpush1.bf16.msra.mxu0 %v1920
    %1978 = vmatprep.subr.bf16.mxu0 %v1925
    %1979 = vmatpush1.bf16.msra.mxu0 %v1924
    %1980 = vmatprep.subr.bf16.mxu0 %v1929
    %1981 = vmatpush1.bf16.msra.mxu0 %v1928
    %1982 = vmatprep.subr.bf16.mxu0 %v1933
    %1983 = vmatpush1.bf16.msra.mxu0 %v1932
    %1984 = vmatprep.subr.bf16.mxu0 0
    %1985 = vmatpush1.bf16.msra.mxu0 0
    %1986 = vmatprep.subr.bf16.mxu0 0
    %1987 = vmatpush1.bf16.msra.mxu0 0
    %1988 = vmatprep.subr.bf16.mxu0 0
    %1989 = vmatpush1.bf16.msra.mxu0 0
    %1990 = vmatprep.subr.bf16.mxu0 0
    %1991 = vmatpush1.bf16.msra.mxu0 0
    %1992 = vmatprep.subr.bf16.mxu0 0
    %1993 = vmatpush1.bf16.msra.mxu0 0
    %1994 = vmatprep.subr.bf16.mxu0 0
    %1995 = vmatpush1.bf16.msra.mxu0 0
    %1996 = vmatprep.subr.bf16.mxu0 0
    %1997 = vmatpush1.bf16.msra.mxu0 0
    %1998 = vmatprep.subr.bf16.mxu0 0
    %1999 = vmatpush1.bf16.msra.mxu0 0
    %2000 = vmatprep.mubr.bf16.mxu0 0
    %2001 = vmatmul.mubr.bf16.gmra.mrb[0].mxu0 %v1775
    %v2002 = vpop.f32.mrb[0].mxu0
    %v2003 = vadd.f32 0.0, %v2002
    %v2004 = vpop.f32.mrb[0].mxu0
    %v2005 = vadd.f32 0.0, %v2004
    %v2006 = vpop.f32.mrb[0].mxu0
    %v2007 = vpop.f32.mrb[0].mxu0
    %2008 = vdwg.mxu0
    %2009 = vmatprep.subr.bf16.mxu0 %v1907
    %2010 = vmatpush1.bf16.msra.mxu0 %v1906
    %2011 = vmatprep.subr.bf16.mxu0 %v1911
    %2012 = vmatpush1.bf16.msra.mxu0 %v1910
    %2013 = vmatprep.subr.bf16.mxu0 %v1915
    %2014 = vmatpush1.bf16.msra.mxu0 %v1914
    %2015 = vmatprep.subr.bf16.mxu0 %v1919
    %2016 = vmatpush1.bf16.msra.mxu0 %v1918
    %2017 = vmatprep.subr.bf16.mxu0 %v1923
    %2018 = vmatpush1.bf16.msra.mxu0 %v1922
    %2019 = vmatprep.subr.bf16.mxu0 %v1927
    %2020 = vmatpush1.bf16.msra.mxu0 %v1926
    %2021 = vmatprep.subr.bf16.mxu0 %v1931
    %2022 = vmatpush1.bf16.msra.mxu0 %v1930
    %2023 = vmatprep.subr.bf16.mxu0 %v1935
    %2024 = vmatpush1.bf16.msra.mxu0 %v1934
    %2025 = vmatprep.subr.bf16.mxu0 0
    %2026 = vmatpush1.bf16.msra.mxu0 0
    %2027 = vmatprep.subr.bf16.mxu0 0
    %2028 = vmatpush1.bf16.msra.mxu0 0
    %2029 = vmatprep.subr.bf16.mxu0 0
    %2030 = vmatpush1.bf16.msra.mxu0 0
    %2031 = vmatprep.subr.bf16.mxu0 0
    %2032 = vmatpush1.bf16.msra.mxu0 0
    %2033 = vmatprep.subr.bf16.mxu0 0
    %2034 = vmatpush1.bf16.msra.mxu0 0
    %2035 = vmatprep.subr.bf16.mxu0 0
    %2036 = vmatpush1.bf16.msra.mxu0 0
    %2037 = vmatprep.subr.bf16.mxu0 0
    %2038 = vmatpush1.bf16.msra.mxu0 0
    %2039 = vmatprep.subr.bf16.mxu0 0
    %2040 = vmatpush1.bf16.msra.mxu0 0
    %2041 = vmatprep.mubr.bf16.mxu0 0
    %2042 = vmatmul.mubr.bf16.gmra.mrb[0].mxu0 %v1775
    %v2043 = vpop.f32.mrb[0].mxu0
    %v2044 = vadd.f32 0.0, %v2043
    %v2045 = vpop.f32.mrb[0].mxu0
    %v2046 = vadd.f32 0.0, %v2045
    %v2047 = vpop.f32.mrb[0].mxu0
    %v2048 = vpop.f32.mrb[0].mxu0
    %2049 = vdwg.mxu0
    %v2050 = vadd.f32 %v1771, %v2003
    %v2051 = vadd.f32 %v1772, %v2005
    %v2052 = vadd.f32 %v1773, %v2044
    %v2053 = vadd.f32 %v1774, %v2046
    %v2054 = vxor.u32 %v2050, 2147483648
    %v2055 = vmul.f32 %v2054, 1.442695
    %v2056 = vpow.pop %v2055
    %v2057 = vadd.f32 %v2056, 1.0
    %v2058 = vrcp.pop %v2057
    %v2059 = vmul.f32 1.0, %v2058
    %v2060 = vxor.u32 %v2051, 2147483648
    %v2061 = vmul.f32 %v2060, 1.442695
    %v2062 = vpow.pop %v2061
    %v2063 = vadd.f32 %v2062, 1.0
    %v2064 = vrcp.pop %v2063
    %v2065 = vmul.f32 1.0, %v2064
    %v2066 = vtanh.pop %v2052
    %v2067 = vxor.u32 %v2053, 2147483648
    %v2068 = vmul.f32 %v2067, 1.442695
    %v2069 = vpow.pop %v2068
    %v2070 = vadd.f32 %v2069, 1.0
    %v2071 = vrcp.pop %v2070
    %v2072 = vmul.f32 1.0, %v2071
    %v2073 = vmul.f32 %v2065, %v1767
    %v2074 = vmul.f32 %v2059, %v2066
    %v2075 = vadd.f32 %v2073, %v2074
    %v2076 = vtanh.pop %v2075
    %v2077 = vmul.f32 %v2072, %v2076
    %2078 = vst [vmem:[#allocation2 + $0x20] sm:$0xff] %v2077
    %v2079 = vld [vmem:[#allocation3 + $0xa0] sm:$0xff]
    %v2080 = vld [vmem:[#allocation3 + $0xa8] sm:$0xff]
    %v2081 = vld [vmem:[#allocation3 + $0xb0] sm:$0xff]
    %v2082 = vld [vmem:[#allocation3 + $0xb8] sm:$0xff]
    %v2083 = vpack.c.bf16 %v2077, %v2077
    %v2084 = vld [vmem:[#allocation9] sm:$0xff]
    %v2085 = vld [vmem:[#allocation9 + $0x8] sm:$0xff]
    %v2086 = vld [vmem:[#allocation9 + $0x10] sm:$0xff]
    %v2087 = vld [vmem:[#allocation9 + $0x18] sm:$0xff]
    %v2088 = vld [vmem:[#allocation9 + $0x20] sm:$0xff]
    %v2089 = vld [vmem:[#allocation9 + $0x28] sm:$0xff]
    %v2090 = vld [vmem:[#allocation9 + $0x30] sm:$0xff]
    %v2091 = vld [vmem:[#allocation9 + $0x38] sm:$0xff]
    %v2092 = vld [vmem:[#allocation9 + $0x40] sm:$0xff]
    %v2093 = vld [vmem:[#allocation9 + $0x48] sm:$0xff]
    %v2094 = vld [vmem:[#allocation9 + $0x50] sm:$0xff]
    %v2095 = vld [vmem:[#allocation9 + $0x58] sm:$0xff]
    %v2096 = vld [vmem:[#allocation9 + $0x60] sm:$0xff]
    %v2097 = vld [vmem:[#allocation9 + $0x68] sm:$0xff]
    %v2098 = vld [vmem:[#allocation9 + $0x70] sm:$0xff]
    %v2099 = vld [vmem:[#allocation9 + $0x78] sm:$0xff]
    %v2100 = vld [vmem:[#allocation9 + $0x80] sm:$0xff]
    %v2101 = vld [vmem:[#allocation9 + $0x88] sm:$0xff]
    %v2102 = vld [vmem:[#allocation9 + $0x90] sm:$0xff]
    %v2103 = vld [vmem:[#allocation9 + $0x98] sm:$0xff]
    %v2104 = vld [vmem:[#allocation9 + $0xa0] sm:$0xff]
    %v2105 = vld [vmem:[#allocation9 + $0xa8] sm:$0xff]
    %v2106 = vld [vmem:[#allocation9 + $0xb0] sm:$0xff]
    %v2107 = vld [vmem:[#allocation9 + $0xb8] sm:$0xff]
    %v2108 = vld [vmem:[#allocation9 + $0xc0] sm:$0xff]
    %v2109 = vld [vmem:[#allocation9 + $0xc8] sm:$0xff]
    %v2110 = vld [vmem:[#allocation9 + $0xd0] sm:$0xff]
    %v2111 = vld [vmem:[#allocation9 + $0xd8] sm:$0xff]
    %v2112 = vld [vmem:[#allocation9 + $0xe0] sm:$0xff]
    %v2113 = vld [vmem:[#allocation9 + $0xe8] sm:$0xff]
    %v2114 = vld [vmem:[#allocation9 + $0xf0] sm:$0xff]
    %v2115 = vld [vmem:[#allocation9 + $0xf8] sm:$0xff]
    %v2148 = vunpack.c.l.b16 %v2084
    %v2149 = vunpack.c.h.b16 %v2084
    %v2150 = vunpack.c.l.b16 %v2085
    %v2151 = vunpack.c.h.b16 %v2085
    %v2152 = vunpack.c.l.b16 %v2086
    %v2153 = vunpack.c.h.b16 %v2086
    %v2154 = vunpack.c.l.b16 %v2087
    %v2155 = vunpack.c.h.b16 %v2087
    %v2156 = vunpack.c.l.b16 %v2088
    %v2157 = vunpack.c.h.b16 %v2088
    %v2158 = vunpack.c.l.b16 %v2089
    %v2159 = vunpack.c.h.b16 %v2089
    %v2160 = vunpack.c.l.b16 %v2090
    %v2161 = vunpack.c.h.b16 %v2090
    %v2162 = vunpack.c.l.b16 %v2091
    %v2163 = vunpack.c.h.b16 %v2091
    %v2164 = vunpack.c.l.b16 %v2092
    %v2165 = vunpack.c.h.b16 %v2092
    %v2166 = vunpack.c.l.b16 %v2093
    %v2167 = vunpack.c.h.b16 %v2093
    %v2168 = vunpack.c.l.b16 %v2094
    %v2169 = vunpack.c.h.b16 %v2094
    %v2170 = vunpack.c.l.b16 %v2095
    %v2171 = vunpack.c.h.b16 %v2095
    %v2172 = vunpack.c.l.b16 %v2096
    %v2173 = vunpack.c.h.b16 %v2096
    %v2174 = vunpack.c.l.b16 %v2097
    %v2175 = vunpack.c.h.b16 %v2097
    %v2176 = vunpack.c.l.b16 %v2098
    %v2177 = vunpack.c.h.b16 %v2098
    %v2178 = vunpack.c.l.b16 %v2099
    %v2179 = vunpack.c.h.b16 %v2099
    %v2180 = vunpack.c.l.b16 %v2100
    %v2181 = vunpack.c.h.b16 %v2100
    %v2182 = vunpack.c.l.b16 %v2101
    %v2183 = vunpack.c.h.b16 %v2101
    %v2184 = vunpack.c.l.b16 %v2102
    %v2185 = vunpack.c.h.b16 %v2102
    %v2186 = vunpack.c.l.b16 %v2103
    %v2187 = vunpack.c.h.b16 %v2103
    %v2188 = vunpack.c.l.b16 %v2104
    %v2189 = vunpack.c.h.b16 %v2104
    %v2190 = vunpack.c.l.b16 %v2105
    %v2191 = vunpack.c.h.b16 %v2105
    %v2192 = vunpack.c.l.b16 %v2106
    %v2193 = vunpack.c.h.b16 %v2106
    %v2194 = vunpack.c.l.b16 %v2107
    %v2195 = vunpack.c.h.b16 %v2107
    %v2196 = vunpack.c.l.b16 %v2108
    %v2197 = vunpack.c.h.b16 %v2108
    %v2198 = vunpack.c.l.b16 %v2109
    %v2199 = vunpack.c.h.b16 %v2109
    %v2200 = vunpack.c.l.b16 %v2110
    %v2201 = vunpack.c.h.b16 %v2110
    %v2202 = vunpack.c.l.b16 %v2111
    %v2203 = vunpack.c.h.b16 %v2111
    %v2204 = vunpack.c.l.b16 %v2112
    %v2205 = vunpack.c.h.b16 %v2112
    %v2206 = vunpack.c.l.b16 %v2113
    %v2207 = vunpack.c.h.b16 %v2113
    %v2208 = vunpack.c.l.b16 %v2114
    %v2209 = vunpack.c.h.b16 %v2114
    %v2210 = vunpack.c.l.b16 %v2115
    %v2211 = vunpack.c.h.b16 %v2115
    %v2212 = vpack.c.b16 %v2152, %v2148
    %v2213 = vpack.c.b16 %v2153, %v2149
    %v2214 = vpack.c.b16 %v2154, %v2150
    %v2215 = vpack.c.b16 %v2155, %v2151
    %v2216 = vpack.c.b16 %v2160, %v2156
    %v2217 = vpack.c.b16 %v2161, %v2157
    %v2218 = vpack.c.b16 %v2162, %v2158
    %v2219 = vpack.c.b16 %v2163, %v2159
    %v2220 = vpack.c.b16 %v2168, %v2164
    %v2221 = vpack.c.b16 %v2169, %v2165
    %v2222 = vpack.c.b16 %v2170, %v2166
    %v2223 = vpack.c.b16 %v2171, %v2167
    %v2224 = vpack.c.b16 %v2176, %v2172
    %v2225 = vpack.c.b16 %v2177, %v2173
    %v2226 = vpack.c.b16 %v2178, %v2174
    %v2227 = vpack.c.b16 %v2179, %v2175
    %v2228 = vpack.c.b16 %v2184, %v2180
    %v2229 = vpack.c.b16 %v2185, %v2181
    %v2230 = vpack.c.b16 %v2186, %v2182
    %v2231 = vpack.c.b16 %v2187, %v2183
    %v2232 = vpack.c.b16 %v2192, %v2188
    %v2233 = vpack.c.b16 %v2193, %v2189
    %v2234 = vpack.c.b16 %v2194, %v2190
    %v2235 = vpack.c.b16 %v2195, %v2191
    %v2236 = vpack.c.b16 %v2200, %v2196
    %v2237 = vpack.c.b16 %v2201, %v2197
    %v2238 = vpack.c.b16 %v2202, %v2198
    %v2239 = vpack.c.b16 %v2203, %v2199
    %v2240 = vpack.c.b16 %v2208, %v2204
    %v2241 = vpack.c.b16 %v2209, %v2205
    %v2242 = vpack.c.b16 %v2210, %v2206
    %v2243 = vpack.c.b16 %v2211, %v2207
    %2276 = vmatprep.subr.bf16.mxu0 %v2213
    %2277 = vmatpush1.bf16.msra.mxu0 %v2212
    %2278 = vmatprep.subr.bf16.mxu0 %v2217
    %2279 = vmatpush1.bf16.msra.mxu0 %v2216
    %2280 = vmatprep.subr.bf16.mxu0 %v2221
    %2281 = vmatpush1.bf16.msra.mxu0 %v2220
    %2282 = vmatprep.subr.bf16.mxu0 %v2225
    %2283 = vmatpush1.bf16.msra.mxu0 %v2224
    %2284 = vmatprep.subr.bf16.mxu0 %v2229
    %2285 = vmatpush1.bf16.msra.mxu0 %v2228
    %2286 = vmatprep.subr.bf16.mxu0 %v2233
    %2287 = vmatpush1.bf16.msra.mxu0 %v2232
    %2288 = vmatprep.subr.bf16.mxu0 %v2237
    %2289 = vmatpush1.bf16.msra.mxu0 %v2236
    %2290 = vmatprep.subr.bf16.mxu0 %v2241
    %2291 = vmatpush1.bf16.msra.mxu0 %v2240
    %2292 = vmatprep.subr.bf16.mxu0 0
    %2293 = vmatpush1.bf16.msra.mxu0 0
    %2294 = vmatprep.subr.bf16.mxu0 0
    %2295 = vmatpush1.bf16.msra.mxu0 0
    %2296 = vmatprep.subr.bf16.mxu0 0
    %2297 = vmatpush1.bf16.msra.mxu0 0
    %2298 = vmatprep.subr.bf16.mxu0 0
    %2299 = vmatpush1.bf16.msra.mxu0 0
    %2300 = vmatprep.subr.bf16.mxu0 0
    %2301 = vmatpush1.bf16.msra.mxu0 0
    %2302 = vmatprep.subr.bf16.mxu0 0
    %2303 = vmatpush1.bf16.msra.mxu0 0
    %2304 = vmatprep.subr.bf16.mxu0 0
    %2305 = vmatpush1.bf16.msra.mxu0 0
    %2306 = vmatprep.subr.bf16.mxu0 0
    %2307 = vmatpush1.bf16.msra.mxu0 0
    %2308 = vmatprep.mubr.bf16.mxu0 0
    %2309 = vmatmul.mubr.bf16.gmra.mrb[0].mxu0 %v2083
    %v2310 = vpop.f32.mrb[0].mxu0
    %v2311 = vadd.f32 0.0, %v2310
    %v2312 = vpop.f32.mrb[0].mxu0
    %v2313 = vadd.f32 0.0, %v2312
    %v2314 = vpop.f32.mrb[0].mxu0
    %v2315 = vpop.f32.mrb[0].mxu0
    %2316 = vdwg.mxu0
    %2317 = vmatprep.subr.bf16.mxu0 %v2215
    %2318 = vmatpush1.bf16.msra.mxu0 %v2214
    %2319 = vmatprep.subr.bf16.mxu0 %v2219
    %2320 = vmatpush1.bf16.msra.mxu0 %v2218
    %2321 = vmatprep.subr.bf16.mxu0 %v2223
    %2322 = vmatpush1.bf16.msra.mxu0 %v2222
    %2323 = vmatprep.subr.bf16.mxu0 %v2227
    %2324 = vmatpush1.bf16.msra.mxu0 %v2226
    %2325 = vmatprep.subr.bf16.mxu0 %v2231
    %2326 = vmatpush1.bf16.msra.mxu0 %v2230
    %2327 = vmatprep.subr.bf16.mxu0 %v2235
    %2328 = vmatpush1.bf16.msra.mxu0 %v2234
    %2329 = vmatprep.subr.bf16.mxu0 %v2239
    %2330 = vmatpush1.bf16.msra.mxu0 %v2238
    %2331 = vmatprep.subr.bf16.mxu0 %v2243
    %2332 = vmatpush1.bf16.msra.mxu0 %v2242
    %2333 = vmatprep.subr.bf16.mxu0 0
    %2334 = vmatpush1.bf16.msra.mxu0 0
    %2335 = vmatprep.subr.bf16.mxu0 0
    %2336 = vmatpush1.bf16.msra.mxu0 0
    %2337 = vmatprep.subr.bf16.mxu0 0
    %2338 = vmatpush1.bf16.msra.mxu0 0
    %2339 = vmatprep.subr.bf16.mxu0 0
    %2340 = vmatpush1.bf16.msra.mxu0 0
    %2341 = vmatprep.subr.bf16.mxu0 0
    %2342 = vmatpush1.bf16.msra.mxu0 0
    %2343 = vmatprep.subr.bf16.mxu0 0
    %2344 = vmatpush1.bf16.msra.mxu0 0
    %2345 = vmatprep.subr.bf16.mxu0 0
    %2346 = vmatpush1.bf16.msra.mxu0 0
    %2347 = vmatprep.subr.bf16.mxu0 0
    %2348 = vmatpush1.bf16.msra.mxu0 0
    %2349 = vmatprep.mubr.bf16.mxu0 0
    %2350 = vmatmul.mubr.bf16.gmra.mrb[0].mxu0 %v2083
    %v2351 = vpop.f32.mrb[0].mxu0
    %v2352 = vadd.f32 0.0, %v2351
    %v2353 = vpop.f32.mrb[0].mxu0
    %v2354 = vadd.f32 0.0, %v2353
    %v2355 = vpop.f32.mrb[0].mxu0
    %v2356 = vpop.f32.mrb[0].mxu0
    %2357 = vdwg.mxu0
    %v2358 = vadd.f32 %v2079, %v2311
    %v2359 = vadd.f32 %v2080, %v2313
    %v2360 = vadd.f32 %v2081, %v2352
    %v2361 = vadd.f32 %v2082, %v2354
    %v2362 = vxor.u32 %v2358, 2147483648
    %v2363 = vmul.f32 %v2362, 1.442695
    %v2364 = vpow.pop %v2363
    %v2365 = vadd.f32 %v2364, 1.0
    %v2366 = vrcp.pop %v2365
    %v2367 = vmul.f32 1.0, %v2366
    %v2368 = vxor.u32 %v2359, 2147483648
    %v2369 = vmul.f32 %v2368, 1.442695
    %v2370 = vpow.pop %v2369
    %v2371 = vadd.f32 %v2370, 1.0
    %v2372 = vrcp.pop %v2371
    %v2373 = vmul.f32 1.0, %v2372
    %v2374 = vtanh.pop %v2360
    %v2375 = vxor.u32 %v2361, 2147483648
    %v2376 = vmul.f32 %v2375, 1.442695
    %v2377 = vpow.pop %v2376
    %v2378 = vadd.f32 %v2377, 1.0
    %v2379 = vrcp.pop %v2378
    %v2380 = vmul.f32 1.0, %v2379
    %v2381 = vmul.f32 %v2373, %v2075
    %v2382 = vmul.f32 %v2367, %v2374
    %v2383 = vadd.f32 %v2381, %v2382
    %v2384 = vtanh.pop %v2383
    %v2385 = vmul.f32 %v2380, %v2384
    %2386 = vst [vmem:[#allocation2 + $0x28] sm:$0xff] %v2385
    %v2387 = vld [vmem:[#allocation3 + $0xc0] sm:$0xff]
    %v2388 = vld [vmem:[#allocation3 + $0xc8] sm:$0xff]
    %v2389 = vld [vmem:[#allocation3 + $0xd0] sm:$0xff]
    %v2390 = vld [vmem:[#allocation3 + $0xd8] sm:$0xff]
    %v2391 = vpack.c.bf16 %v2385, %v2385
    %v2392 = vld [vmem:[#allocation9] sm:$0xff]
    %v2393 = vld [vmem:[#allocation9 + $0x8] sm:$0xff]
    %v2394 = vld [vmem:[#allocation9 + $0x10] sm:$0xff]
    %v2395 = vld [vmem:[#allocation9 + $0x18] sm:$0xff]
    %v2396 = vld [vmem:[#allocation9 + $0x20] sm:$0xff]
    %v2397 = vld [vmem:[#allocation9 + $0x28] sm:$0xff]
    %v2398 = vld [vmem:[#allocation9 + $0x30] sm:$0xff]
    %v2399 = vld [vmem:[#allocation9 + $0x38] sm:$0xff]
    %v2400 = vld [vmem:[#allocation9 + $0x40] sm:$0xff]
    %v2401 = vld [vmem:[#allocation9 + $0x48] sm:$0xff]
    %v2402 = vld [vmem:[#allocation9 + $0x50] sm:$0xff]
    %v2403 = vld [vmem:[#allocation9 + $0x58] sm:$0xff]
    %v2404 = vld [vmem:[#allocation9 + $0x60] sm:$0xff]
    %v2405 = vld [vmem:[#allocation9 + $0x68] sm:$0xff]
    %v2406 = vld [vmem:[#allocation9 + $0x70] sm:$0xff]
    %v2407 = vld [vmem:[#allocation9 + $0x78] sm:$0xff]
    %v2408 = vld [vmem:[#allocation9 + $0x80] sm:$0xff]
    %v2409 = vld [vmem:[#allocation9 + $0x88] sm:$0xff]
    %v2410 = vld [vmem:[#allocation9 + $0x90] sm:$0xff]
    %v2411 = vld [vmem:[#allocation9 + $0x98] sm:$0xff]
    %v2412 = vld [vmem:[#allocation9 + $0xa0] sm:$0xff]
    %v2413 = vld [vmem:[#allocation9 + $0xa8] sm:$0xff]
    %v2414 = vld [vmem:[#allocation9 + $0xb0] sm:$0xff]
    %v2415 = vld [vmem:[#allocation9 + $0xb8] sm:$0xff]
    %v2416 = vld [vmem:[#allocation9 + $0xc0] sm:$0xff]
    %v2417 = vld [vmem:[#allocation9 + $0xc8] sm:$0xff]
    %v2418 = vld [vmem:[#allocation9 + $0xd0] sm:$0xff]
    %v2419 = vld [vmem:[#allocation9 + $0xd8] sm:$0xff]
    %v2420 = vld [vmem:[#allocation9 + $0xe0] sm:$0xff]
    %v2421 = vld [vmem:[#allocation9 + $0xe8] sm:$0xff]
    %v2422 = vld [vmem:[#allocation9 + $0xf0] sm:$0xff]
    %v2423 = vld [vmem:[#allocation9 + $0xf8] sm:$0xff]
    %v2456 = vunpack.c.l.b16 %v2392
    %v2457 = vunpack.c.h.b16 %v2392
    %v2458 = vunpack.c.l.b16 %v2393
    %v2459 = vunpack.c.h.b16 %v2393
    %v2460 = vunpack.c.l.b16 %v2394
    %v2461 = vunpack.c.h.b16 %v2394
    %v2462 = vunpack.c.l.b16 %v2395
    %v2463 = vunpack.c.h.b16 %v2395
    %v2464 = vunpack.c.l.b16 %v2396
    %v2465 = vunpack.c.h.b16 %v2396
    %v2466 = vunpack.c.l.b16 %v2397
    %v2467 = vunpack.c.h.b16 %v2397
    %v2468 = vunpack.c.l.b16 %v2398
    %v2469 = vunpack.c.h.b16 %v2398
    %v2470 = vunpack.c.l.b16 %v2399
    %v2471 = vunpack.c.h.b16 %v2399
    %v2472 = vunpack.c.l.b16 %v2400
    %v2473 = vunpack.c.h.b16 %v2400
    %v2474 = vunpack.c.l.b16 %v2401
    %v2475 = vunpack.c.h.b16 %v2401
    %v2476 = vunpack.c.l.b16 %v2402
    %v2477 = vunpack.c.h.b16 %v2402
    %v2478 = vunpack.c.l.b16 %v2403
    %v2479 = vunpack.c.h.b16 %v2403
    %v2480 = vunpack.c.l.b16 %v2404
    %v2481 = vunpack.c.h.b16 %v2404
    %v2482 = vunpack.c.l.b16 %v2405
    %v2483 = vunpack.c.h.b16 %v2405
    %v2484 = vunpack.c.l.b16 %v2406
    %v2485 = vunpack.c.h.b16 %v2406
    %v2486 = vunpack.c.l.b16 %v2407
    %v2487 = vunpack.c.h.b16 %v2407
    %v2488 = vunpack.c.l.b16 %v2408
    %v2489 = vunpack.c.h.b16 %v2408
    %v2490 = vunpack.c.l.b16 %v2409
    %v2491 = vunpack.c.h.b16 %v2409
    %v2492 = vunpack.c.l.b16 %v2410
    %v2493 = vunpack.c.h.b16 %v2410
    %v2494 = vunpack.c.l.b16 %v2411
    %v2495 = vunpack.c.h.b16 %v2411
    %v2496 = vunpack.c.l.b16 %v2412
    %v2497 = vunpack.c.h.b16 %v2412
    %v2498 = vunpack.c.l.b16 %v2413
    %v2499 = vunpack.c.h.b16 %v2413
    %v2500 = vunpack.c.l.b16 %v2414
    %v2501 = vunpack.c.h.b16 %v2414
    %v2502 = vunpack.c.l.b16 %v2415
    %v2503 = vunpack.c.h.b16 %v2415
    %v2504 = vunpack.c.l.b16 %v2416
    %v2505 = vunpack.c.h.b16 %v2416
    %v2506 = vunpack.c.l.b16 %v2417
    %v2507 = vunpack.c.h.b16 %v2417
    %v2508 = vunpack.c.l.b16 %v2418
    %v2509 = vunpack.c.h.b16 %v2418
    %v2510 = vunpack.c.l.b16 %v2419
    %v2511 = vunpack.c.h.b16 %v2419
    %v2512 = vunpack.c.l.b16 %v2420
    %v2513 = vunpack.c.h.b16 %v2420
    %v2514 = vunpack.c.l.b16 %v2421
    %v2515 = vunpack.c.h.b16 %v2421
    %v2516 = vunpack.c.l.b16 %v2422
    %v2517 = vunpack.c.h.b16 %v2422
    %v2518 = vunpack.c.l.b16 %v2423
    %v2519 = vunpack.c.h.b16 %v2423
    %v2520 = vpack.c.b16 %v2460, %v2456
    %v2521 = vpack.c.b16 %v2461, %v2457
    %v2522 = vpack.c.b16 %v2462, %v2458
    %v2523 = vpack.c.b16 %v2463, %v2459
    %v2524 = vpack.c.b16 %v2468, %v2464
    %v2525 = vpack.c.b16 %v2469, %v2465
    %v2526 = vpack.c.b16 %v2470, %v2466
    %v2527 = vpack.c.b16 %v2471, %v2467
    %v2528 = vpack.c.b16 %v2476, %v2472
    %v2529 = vpack.c.b16 %v2477, %v2473
    %v2530 = vpack.c.b16 %v2478, %v2474
    %v2531 = vpack.c.b16 %v2479, %v2475
    %v2532 = vpack.c.b16 %v2484, %v2480
    %v2533 = vpack.c.b16 %v2485, %v2481
    %v2534 = vpack.c.b16 %v2486, %v2482
    %v2535 = vpack.c.b16 %v2487, %v2483
    %v2536 = vpack.c.b16 %v2492, %v2488
    %v2537 = vpack.c.b16 %v2493, %v2489
    %v2538 = vpack.c.b16 %v2494, %v2490
    %v2539 = vpack.c.b16 %v2495, %v2491
    %v2540 = vpack.c.b16 %v2500, %v2496
    %v2541 = vpack.c.b16 %v2501, %v2497
    %v2542 = vpack.c.b16 %v2502, %v2498
    %v2543 = vpack.c.b16 %v2503, %v2499
    %v2544 = vpack.c.b16 %v2508, %v2504
    %v2545 = vpack.c.b16 %v2509, %v2505
    %v2546 = vpack.c.b16 %v2510, %v2506
    %v2547 = vpack.c.b16 %v2511, %v2507
    %v2548 = vpack.c.b16 %v2516, %v2512
    %v2549 = vpack.c.b16 %v2517, %v2513
    %v2550 = vpack.c.b16 %v2518, %v2514
    %v2551 = vpack.c.b16 %v2519, %v2515
    %2584 = vmatprep.subr.bf16.mxu0 %v2521
    %2585 = vmatpush1.bf16.msra.mxu0 %v2520
    %2586 = vmatprep.subr.bf16.mxu0 %v2525
    %2587 = vmatpush1.bf16.msra.mxu0 %v2524
    %2588 = vmatprep.subr.bf16.mxu0 %v2529
    %2589 = vmatpush1.bf16.msra.mxu0 %v2528
    %2590 = vmatprep.subr.bf16.mxu0 %v2533
    %2591 = vmatpush1.bf16.msra.mxu0 %v2532
    %2592 = vmatprep.subr.bf16.mxu0 %v2537
    %2593 = vmatpush1.bf16.msra.mxu0 %v2536
    %2594 = vmatprep.subr.bf16.mxu0 %v2541
    %2595 = vmatpush1.bf16.msra.mxu0 %v2540
    %2596 = vmatprep.subr.bf16.mxu0 %v2545
    %2597 = vmatpush1.bf16.msra.mxu0 %v2544
    %2598 = vmatprep.subr.bf16.mxu0 %v2549
    %2599 = vmatpush1.bf16.msra.mxu0 %v2548
    %2600 = vmatprep.subr.bf16.mxu0 0
    %2601 = vmatpush1.bf16.msra.mxu0 0
    %2602 = vmatprep.subr.bf16.mxu0 0
    %2603 = vmatpush1.bf16.msra.mxu0 0
    %2604 = vmatprep.subr.bf16.mxu0 0
    %2605 = vmatpush1.bf16.msra.mxu0 0
    %2606 = vmatprep.subr.bf16.mxu0 0
    %2607 = vmatpush1.bf16.msra.mxu0 0
    %2608 = vmatprep.subr.bf16.mxu0 0
    %2609 = vmatpush1.bf16.msra.mxu0 0
    %2610 = vmatprep.subr.bf16.mxu0 0
    %2611 = vmatpush1.bf16.msra.mxu0 0
    %2612 = vmatprep.subr.bf16.mxu0 0
    %2613 = vmatpush1.bf16.msra.mxu0 0
    %2614 = vmatprep.subr.bf16.mxu0 0
    %2615 = vmatpush1.bf16.msra.mxu0 0
    %2616 = vmatprep.mubr.bf16.mxu0 0
    %2617 = vmatmul.mubr.bf16.gmra.mrb[0].mxu0 %v2391
    %v2618 = vpop.f32.mrb[0].mxu0
    %v2619 = vadd.f32 0.0, %v2618
    %v2620 = vpop.f32.mrb[0].mxu0
    %v2621 = vadd.f32 0.0, %v2620
    %v2622 = vpop.f32.mrb[0].mxu0
    %v2623 = vpop.f32.mrb[0].mxu0
    %2624 = vdwg.mxu0
    %2625 = vmatprep.subr.bf16.mxu0 %v2523
    %2626 = vmatpush1.bf16.msra.mxu0 %v2522
    %2627 = vmatprep.subr.bf16.mxu0 %v2527
    %2628 = vmatpush1.bf16.msra.mxu0 %v2526
    %2629 = vmatprep.subr.bf16.mxu0 %v2531
    %2630 = vmatpush1.bf16.msra.mxu0 %v2530
    %2631 = vmatprep.subr.bf16.mxu0 %v2535
    %2632 = vmatpush1.bf16.msra.mxu0 %v2534
    %2633 = vmatprep.subr.bf16.mxu0 %v2539
    %2634 = vmatpush1.bf16.msra.mxu0 %v2538
    %2635 = vmatprep.subr.bf16.mxu0 %v2543
    %2636 = vmatpush1.bf16.msra.mxu0 %v2542
    %2637 = vmatprep.subr.bf16.mxu0 %v2547
    %2638 = vmatpush1.bf16.msra.mxu0 %v2546
    %2639 = vmatprep.subr.bf16.mxu0 %v2551
    %2640 = vmatpush1.bf16.msra.mxu0 %v2550
    %2641 = vmatprep.subr.bf16.mxu0 0
    %2642 = vmatpush1.bf16.msra.mxu0 0
    %2643 = vmatprep.subr.bf16.mxu0 0
    %2644 = vmatpush1.bf16.msra.mxu0 0
    %2645 = vmatprep.subr.bf16.mxu0 0
    %2646 = vmatpush1.bf16.msra.mxu0 0
    %2647 = vmatprep.subr.bf16.mxu0 0
    %2648 = vmatpush1.bf16.msra.mxu0 0
    %2649 = vmatprep.subr.bf16.mxu0 0
    %2650 = vmatpush1.bf16.msra.mxu0 0
    %2651 = vmatprep.subr.bf16.mxu0 0
    %2652 = vmatpush1.bf16.msra.mxu0 0
    %2653 = vmatprep.subr.bf16.mxu0 0
    %2654 = vmatpush1.bf16.msra.mxu0 0
    %2655 = vmatprep.subr.bf16.mxu0 0
    %2656 = vmatpush1.bf16.msra.mxu0 0
    %2657 = vmatprep.mubr.bf16.mxu0 0
    %2658 = vmatmul.mubr.bf16.gmra.mrb[0].mxu0 %v2391
    %v2659 = vpop.f32.mrb[0].mxu0
    %v2660 = vadd.f32 0.0, %v2659
    %v2661 = vpop.f32.mrb[0].mxu0
    %v2662 = vadd.f32 0.0, %v2661
    %v2663 = vpop.f32.mrb[0].mxu0
    %v2664 = vpop.f32.mrb[0].mxu0
    %2665 = vdwg.mxu0
    %v2666 = vadd.f32 %v2387, %v2619
    %v2667 = vadd.f32 %v2388, %v2621
    %v2668 = vadd.f32 %v2389, %v2660
    %v2669 = vadd.f32 %v2390, %v2662
    %v2670 = vxor.u32 %v2666, 2147483648
    %v2671 = vmul.f32 %v2670, 1.442695
    %v2672 = vpow.pop %v2671
    %v2673 = vadd.f32 %v2672, 1.0
    %v2674 = vrcp.pop %v2673
    %v2675 = vmul.f32 1.0, %v2674
    %v2676 = vxor.u32 %v2667, 2147483648
    %v2677 = vmul.f32 %v2676, 1.442695
    %v2678 = vpow.pop %v2677
    %v2679 = vadd.f32 %v2678, 1.0
    %v2680 = vrcp.pop %v2679
    %v2681 = vmul.f32 1.0, %v2680
    %v2682 = vtanh.pop %v2668
    %v2683 = vxor.u32 %v2669, 2147483648
    %v2684 = vmul.f32 %v2683, 1.442695
    %v2685 = vpow.pop %v2684
    %v2686 = vadd.f32 %v2685, 1.0
    %v2687 = vrcp.pop %v2686
    %v2688 = vmul.f32 1.0, %v2687
    %v2689 = vmul.f32 %v2681, %v2383
    %v2690 = vmul.f32 %v2675, %v2682
    %v2691 = vadd.f32 %v2689, %v2690
    %v2692 = vtanh.pop %v2691
    %v2693 = vmul.f32 %v2688, %v2692
    %2694 = vst [vmem:[#allocation2 + $0x30] sm:$0xff] %v2693
    %v2695 = vld [vmem:[#allocation3 + $0xe0] sm:$0xff]
    %v2696 = vld [vmem:[#allocation3 + $0xe8] sm:$0xff]
    %v2697 = vld [vmem:[#allocation3 + $0xf0] sm:$0xff]
    %v2698 = vld [vmem:[#allocation3 + $0xf8] sm:$0xff]
    %v2699 = vpack.c.bf16 %v2693, %v2693
    %v2700 = vld [vmem:[#allocation9] sm:$0xff]
    %v2701 = vld [vmem:[#allocation9 + $0x8] sm:$0xff]
    %v2702 = vld [vmem:[#allocation9 + $0x10] sm:$0xff]
    %v2703 = vld [vmem:[#allocation9 + $0x18] sm:$0xff]
    %v2704 = vld [vmem:[#allocation9 + $0x20] sm:$0xff]
    %v2705 = vld [vmem:[#allocation9 + $0x28] sm:$0xff]
    %v2706 = vld [vmem:[#allocation9 + $0x30] sm:$0xff]
    %v2707 = vld [vmem:[#allocation9 + $0x38] sm:$0xff]
    %v2708 = vld [vmem:[#allocation9 + $0x40] sm:$0xff]
    %v2709 = vld [vmem:[#allocation9 + $0x48] sm:$0xff]
    %v2710 = vld [vmem:[#allocation9 + $0x50] sm:$0xff]
    %v2711 = vld [vmem:[#allocation9 + $0x58] sm:$0xff]
    %v2712 = vld [vmem:[#allocation9 + $0x60] sm:$0xff]
    %v2713 = vld [vmem:[#allocation9 + $0x68] sm:$0xff]
    %v2714 = vld [vmem:[#allocation9 + $0x70] sm:$0xff]
    %v2715 = vld [vmem:[#allocation9 + $0x78] sm:$0xff]
    %v2716 = vld [vmem:[#allocation9 + $0x80] sm:$0xff]
    %v2717 = vld [vmem:[#allocation9 + $0x88] sm:$0xff]
    %v2718 = vld [vmem:[#allocation9 + $0x90] sm:$0xff]
    %v2719 = vld [vmem:[#allocation9 + $0x98] sm:$0xff]
    %v2720 = vld [vmem:[#allocation9 + $0xa0] sm:$0xff]
    %v2721 = vld [vmem:[#allocation9 + $0xa8] sm:$0xff]
    %v2722 = vld [vmem:[#allocation9 + $0xb0] sm:$0xff]
    %v2723 = vld [vmem:[#allocation9 + $0xb8] sm:$0xff]
    %v2724 = vld [vmem:[#allocation9 + $0xc0] sm:$0xff]
    %v2725 = vld [vmem:[#allocation9 + $0xc8] sm:$0xff]
    %v2726 = vld [vmem:[#allocation9 + $0xd0] sm:$0xff]
    %v2727 = vld [vmem:[#allocation9 + $0xd8] sm:$0xff]
    %v2728 = vld [vmem:[#allocation9 + $0xe0] sm:$0xff]
    %v2729 = vld [vmem:[#allocation9 + $0xe8] sm:$0xff]
    %v2730 = vld [vmem:[#allocation9 + $0xf0] sm:$0xff]
    %v2731 = vld [vmem:[#allocation9 + $0xf8] sm:$0xff]
    %v2764 = vunpack.c.l.b16 %v2700
    %v2765 = vunpack.c.h.b16 %v2700
    %v2766 = vunpack.c.l.b16 %v2701
    %v2767 = vunpack.c.h.b16 %v2701
    %v2768 = vunpack.c.l.b16 %v2702
    %v2769 = vunpack.c.h.b16 %v2702
    %v2770 = vunpack.c.l.b16 %v2703
    %v2771 = vunpack.c.h.b16 %v2703
    %v2772 = vunpack.c.l.b16 %v2704
    %v2773 = vunpack.c.h.b16 %v2704
    %v2774 = vunpack.c.l.b16 %v2705
    %v2775 = vunpack.c.h.b16 %v2705
    %v2776 = vunpack.c.l.b16 %v2706
    %v2777 = vunpack.c.h.b16 %v2706
    %v2778 = vunpack.c.l.b16 %v2707
    %v2779 = vunpack.c.h.b16 %v2707
    %v2780 = vunpack.c.l.b16 %v2708
    %v2781 = vunpack.c.h.b16 %v2708
    %v2782 = vunpack.c.l.b16 %v2709
    %v2783 = vunpack.c.h.b16 %v2709
    %v2784 = vunpack.c.l.b16 %v2710
    %v2785 = vunpack.c.h.b16 %v2710
    %v2786 = vunpack.c.l.b16 %v2711
    %v2787 = vunpack.c.h.b16 %v2711
    %v2788 = vunpack.c.l.b16 %v2712
    %v2789 = vunpack.c.h.b16 %v2712
    %v2790 = vunpack.c.l.b16 %v2713
    %v2791 = vunpack.c.h.b16 %v2713
    %v2792 = vunpack.c.l.b16 %v2714
    %v2793 = vunpack.c.h.b16 %v2714
    %v2794 = vunpack.c.l.b16 %v2715
    %v2795 = vunpack.c.h.b16 %v2715
    %v2796 = vunpack.c.l.b16 %v2716
    %v2797 = vunpack.c.h.b16 %v2716
    %v2798 = vunpack.c.l.b16 %v2717
    %v2799 = vunpack.c.h.b16 %v2717
    %v2800 = vunpack.c.l.b16 %v2718
    %v2801 = vunpack.c.h.b16 %v2718
    %v2802 = vunpack.c.l.b16 %v2719
    %v2803 = vunpack.c.h.b16 %v2719
    %v2804 = vunpack.c.l.b16 %v2720
    %v2805 = vunpack.c.h.b16 %v2720
    %v2806 = vunpack.c.l.b16 %v2721
    %v2807 = vunpack.c.h.b16 %v2721
    %v2808 = vunpack.c.l.b16 %v2722
    %v2809 = vunpack.c.h.b16 %v2722
    %v2810 = vunpack.c.l.b16 %v2723
    %v2811 = vunpack.c.h.b16 %v2723
    %v2812 = vunpack.c.l.b16 %v2724
    %v2813 = vunpack.c.h.b16 %v2724
    %v2814 = vunpack.c.l.b16 %v2725
    %v2815 = vunpack.c.h.b16 %v2725
    %v2816 = vunpack.c.l.b16 %v2726
    %v2817 = vunpack.c.h.b16 %v2726
    %v2818 = vunpack.c.l.b16 %v2727
    %v2819 = vunpack.c.h.b16 %v2727
    %v2820 = vunpack.c.l.b16 %v2728
    %v2821 = vunpack.c.h.b16 %v2728
    %v2822 = vunpack.c.l.b16 %v2729
    %v2823 = vunpack.c.h.b16 %v2729
    %v2824 = vunpack.c.l.b16 %v2730
    %v2825 = vunpack.c.h.b16 %v2730
    %v2826 = vunpack.c.l.b16 %v2731
    %v2827 = vunpack.c.h.b16 %v2731
    %v2828 = vpack.c.b16 %v2768, %v2764
    %v2829 = vpack.c.b16 %v2769, %v2765
    %v2830 = vpack.c.b16 %v2770, %v2766
    %v2831 = vpack.c.b16 %v2771, %v2767
    %v2832 = vpack.c.b16 %v2776, %v2772
    %v2833 = vpack.c.b16 %v2777, %v2773
    %v2834 = vpack.c.b16 %v2778, %v2774
    %v2835 = vpack.c.b16 %v2779, %v2775
    %v2836 = vpack.c.b16 %v2784, %v2780
    %v2837 = vpack.c.b16 %v2785, %v2781
    %v2838 = vpack.c.b16 %v2786, %v2782
    %v2839 = vpack.c.b16 %v2787, %v2783
    %v2840 = vpack.c.b16 %v2792, %v2788
    %v2841 = vpack.c.b16 %v2793, %v2789
    %v2842 = vpack.c.b16 %v2794, %v2790
    %v2843 = vpack.c.b16 %v2795, %v2791
    %v2844 = vpack.c.b16 %v2800, %v2796
    %v2845 = vpack.c.b16 %v2801, %v2797
    %v2846 = vpack.c.b16 %v2802, %v2798
    %v2847 = vpack.c.b16 %v2803, %v2799
    %v2848 = vpack.c.b16 %v2808, %v2804
    %v2849 = vpack.c.b16 %v2809, %v2805
    %v2850 = vpack.c.b16 %v2810, %v2806
    %v2851 = vpack.c.b16 %v2811, %v2807
    %v2852 = vpack.c.b16 %v2816, %v2812
    %v2853 = vpack.c.b16 %v2817, %v2813
    %v2854 = vpack.c.b16 %v2818, %v2814
    %v2855 = vpack.c.b16 %v2819, %v2815
    %v2856 = vpack.c.b16 %v2824, %v2820
    %v2857 = vpack.c.b16 %v2825, %v2821
    %v2858 = vpack.c.b16 %v2826, %v2822
    %v2859 = vpack.c.b16 %v2827, %v2823
    %2892 = vmatprep.subr.bf16.mxu0 %v2829
    %2893 = vmatpush1.bf16.msra.mxu0 %v2828
    %2894 = vmatprep.subr.bf16.mxu0 %v2833
    %2895 = vmatpush1.bf16.msra.mxu0 %v2832
    %2896 = vmatprep.subr.bf16.mxu0 %v2837
    %2897 = vmatpush1.bf16.msra.mxu0 %v2836
    %2898 = vmatprep.subr.bf16.mxu0 %v2841
    %2899 = vmatpush1.bf16.msra.mxu0 %v2840
    %2900 = vmatprep.subr.bf16.mxu0 %v2845
    %2901 = vmatpush1.bf16.msra.mxu0 %v2844
    %2902 = vmatprep.subr.bf16.mxu0 %v2849
    %2903 = vmatpush1.bf16.msra.mxu0 %v2848
    %2904 = vmatprep.subr.bf16.mxu0 %v2853
    %2905 = vmatpush1.bf16.msra.mxu0 %v2852
    %2906 = vmatprep.subr.bf16.mxu0 %v2857
    %2907 = vmatpush1.bf16.msra.mxu0 %v2856
    %2908 = vmatprep.subr.bf16.mxu0 0
    %2909 = vmatpush1.bf16.msra.mxu0 0
    %2910 = vmatprep.subr.bf16.mxu0 0
    %2911 = vmatpush1.bf16.msra.mxu0 0
    %2912 = vmatprep.subr.bf16.mxu0 0
    %2913 = vmatpush1.bf16.msra.mxu0 0
    %2914 = vmatprep.subr.bf16.mxu0 0
    %2915 = vmatpush1.bf16.msra.mxu0 0
    %2916 = vmatprep.subr.bf16.mxu0 0
    %2917 = vmatpush1.bf16.msra.mxu0 0
    %2918 = vmatprep.subr.bf16.mxu0 0
    %2919 = vmatpush1.bf16.msra.mxu0 0
    %2920 = vmatprep.subr.bf16.mxu0 0
    %2921 = vmatpush1.bf16.msra.mxu0 0
    %2922 = vmatprep.subr.bf16.mxu0 0
    %2923 = vmatpush1.bf16.msra.mxu0 0
    %2924 = vmatprep.mubr.bf16.mxu0 0
    %2925 = vmatmul.mubr.bf16.gmra.mrb[0].mxu0 %v2699
    %v2926 = vpop.f32.mrb[0].mxu0
    %v2927 = vadd.f32 0.0, %v2926
    %v2928 = vpop.f32.mrb[0].mxu0
    %v2929 = vadd.f32 0.0, %v2928
    %v2930 = vpop.f32.mrb[0].mxu0
    %v2931 = vpop.f32.mrb[0].mxu0
    %2932 = vdwg.mxu0
    %2933 = vmatprep.subr.bf16.mxu0 %v2831
    %2934 = vmatpush1.bf16.msra.mxu0 %v2830
    %2935 = vmatprep.subr.bf16.mxu0 %v2835
    %2936 = vmatpush1.bf16.msra.mxu0 %v2834
    %2937 = vmatprep.subr.bf16.mxu0 %v2839
    %2938 = vmatpush1.bf16.msra.mxu0 %v2838
    %2939 = vmatprep.subr.bf16.mxu0 %v2843
    %2940 = vmatpush1.bf16.msra.mxu0 %v2842
    %2941 = vmatprep.subr.bf16.mxu0 %v2847
    %2942 = vmatpush1.bf16.msra.mxu0 %v2846
    %2943 = vmatprep.subr.bf16.mxu0 %v2851
    %2944 = vmatpush1.bf16.msra.mxu0 %v2850
    %2945 = vmatprep.subr.bf16.mxu0 %v2855
    %2946 = vmatpush1.bf16.msra.mxu0 %v2854
    %2947 = vmatprep.subr.bf16.mxu0 %v2859
    %2948 = vmatpush1.bf16.msra.mxu0 %v2858
    %2949 = vmatprep.subr.bf16.mxu0 0
    %2950 = vmatpush1.bf16.msra.mxu0 0
    %2951 = vmatprep.subr.bf16.mxu0 0
    %2952 = vmatpush1.bf16.msra.mxu0 0
    %2953 = vmatprep.subr.bf16.mxu0 0
    %2954 = vmatpush1.bf16.msra.mxu0 0
    %2955 = vmatprep.subr.bf16.mxu0 0
    %2956 = vmatpush1.bf16.msra.mxu0 0
    %2957 = vmatprep.subr.bf16.mxu0 0
    %2958 = vmatpush1.bf16.msra.mxu0 0
    %2959 = vmatprep.subr.bf16.mxu0 0
    %2960 = vmatpush1.bf16.msra.mxu0 0
    %2961 = vmatprep.subr.bf16.mxu0 0
    %2962 = vmatpush1.bf16.msra.mxu0 0
    %2963 = vmatprep.subr.bf16.mxu0 0
    %2964 = vmatpush1.bf16.msra.mxu0 0
    %2965 = vmatprep.mubr.bf16.mxu0 0
    %2966 = vmatmul.mubr.bf16.gmra.mrb[0].mxu0 %v2699
    %v2967 = vpop.f32.mrb[0].mxu0
    %v2968 = vadd.f32 0.0, %v2967
    %v2969 = vpop.f32.mrb[0].mxu0
    %v2970 = vadd.f32 0.0, %v2969
    %v2971 = vpop.f32.mrb[0].mxu0
    %v2972 = vpop.f32.mrb[0].mxu0
    %2973 = vdwg.mxu0
    %v2974 = vadd.f32 %v2695, %v2927
    %v2975 = vadd.f32 %v2696, %v2929
    %v2976 = vadd.f32 %v2697, %v2968
    %v2977 = vadd.f32 %v2698, %v2970
    %v2978 = vxor.u32 %v2974, 2147483648
    %v2979 = vmul.f32 %v2978, 1.442695
    %v2980 = vpow.pop %v2979
    %v2981 = vadd.f32 %v2980, 1.0
    %v2982 = vrcp.pop %v2981
    %v2983 = vmul.f32 1.0, %v2982
    %v2984 = vxor.u32 %v2975, 2147483648
    %v2985 = vmul.f32 %v2984, 1.442695
    %v2986 = vpow.pop %v2985
    %v2987 = vadd.f32 %v2986, 1.0
    %v2988 = vrcp.pop %v2987
    %v2989 = vmul.f32 1.0, %v2988
    %v2990 = vtanh.pop %v2976
    %v2991 = vxor.u32 %v2977, 2147483648
    %v2992 = vmul.f32 %v2991, 1.442695
    %v2993 = vpow.pop %v2992
    %v2994 = vadd.f32 %v2993, 1.0
    %v2995 = vrcp.pop %v2994
    %v2996 = vmul.f32 1.0, %v2995
    %v2997 = vmul.f32 %v2989, %v2691
    %v2998 = vmul.f32 %v2983, %v2990
    %v2999 = vadd.f32 %v2997, %v2998
    %v3000 = vtanh.pop %v2999
    %v3001 = vmul.f32 %v2996, %v3000
    %3002 = vst [vmem:[#allocation2 + $0x38] sm:$0xff] %v3001
    %v3003 = vld [vmem:[#allocation2] sm:$0xff]
    %v3004 = vld [vmem:[#allocation2 + $0x8] sm:$0xff]
    %v3005 = vld [vmem:[#allocation2 + $0x10] sm:$0xff]
    %v3006 = vld [vmem:[#allocation2 + $0x18] sm:$0xff]
    %v3007 = vld [vmem:[#allocation2 + $0x20] sm:$0xff]
    %v3008 = vld [vmem:[#allocation2 + $0x28] sm:$0xff]
    %v3009 = vld [vmem:[#allocation2 + $0x30] sm:$0xff]
    %v3010 = vld [vmem:[#allocation2 + $0x38] sm:$0xff]
    %v3011 = vpack.c.bf16 %v3004, %v3003
    %v3012 = vpack.c.bf16 %v3006, %v3005
    %v3013 = vpack.c.bf16 %v3008, %v3007
    %v3014 = vpack.c.bf16 %v3010, %v3009
    %v3015 = vld [vmem:[#allocation10] sm:$0xff]
    %v3016 = vld [vmem:[#allocation10 + $0x8] sm:$0xff]
    %v3017 = vld [vmem:[#allocation10 + $0x10] sm:$0xff]
    %v3018 = vld [vmem:[#allocation10 + $0x18] sm:$0xff]
    %v3019 = vld [vmem:[#allocation10 + $0x20] sm:$0xff]
    %v3020 = vld [vmem:[#allocation10 + $0x28] sm:$0xff]
    %v3021 = vld [vmem:[#allocation10 + $0x30] sm:$0xff]
    %v3022 = vld [vmem:[#allocation10 + $0x38] sm:$0xff]
    %v3023 = vld [vmem:[#allocation10 + $0x40] sm:$0xff]
    %v3024 = vld [vmem:[#allocation10 + $0x48] sm:$0xff]
    %v3025 = vld [vmem:[#allocation10 + $0x50] sm:$0xff]
    %v3026 = vld [vmem:[#allocation10 + $0x58] sm:$0xff]
    %v3027 = vld [vmem:[#allocation10 + $0x60] sm:$0xff]
    %v3028 = vld [vmem:[#allocation10 + $0x68] sm:$0xff]
    %v3029 = vld [vmem:[#allocation10 + $0x70] sm:$0xff]
    %v3030 = vld [vmem:[#allocation10 + $0x78] sm:$0xff]
    %v3031 = vld [vmem:[#allocation10 + $0x80] sm:$0xff]
    %v3032 = vld [vmem:[#allocation10 + $0x88] sm:$0xff]
    %v3033 = vld [vmem:[#allocation10 + $0x90] sm:$0xff]
    %v3034 = vld [vmem:[#allocation10 + $0x98] sm:$0xff]
    %v3035 = vld [vmem:[#allocation10 + $0xa0] sm:$0xff]
    %v3036 = vld [vmem:[#allocation10 + $0xa8] sm:$0xff]
    %v3037 = vld [vmem:[#allocation10 + $0xb0] sm:$0xff]
    %v3038 = vld [vmem:[#allocation10 + $0xb8] sm:$0xff]
    %v3039 = vld [vmem:[#allocation10 + $0xc0] sm:$0xff]
    %v3040 = vld [vmem:[#allocation10 + $0xc8] sm:$0xff]
    %v3041 = vld [vmem:[#allocation10 + $0xd0] sm:$0xff]
    %v3042 = vld [vmem:[#allocation10 + $0xd8] sm:$0xff]
    %v3043 = vld [vmem:[#allocation10 + $0xe0] sm:$0xff]
    %v3044 = vld [vmem:[#allocation10 + $0xe8] sm:$0xff]
    %v3045 = vld [vmem:[#allocation10 + $0xf0] sm:$0xff]
    %v3046 = vld [vmem:[#allocation10 + $0xf8] sm:$0xff]
    %v3047 = vld [vmem:[%s6] sm:$0xf]
    %v3049 = vlaneseq
    %v3050 = vshrl.u32 %v3049, 7
    %v3051 = vsub.s32 0, %v3050
    %v3052 = vrot.slane %v3047, %v3051
    %v3053 = vlaneseq
    %v3054 = vshrl.u32 %v3053, 7
    %v3055 = vsub.s32 1, %v3054
    %v3056 = vrot.slane %v3047, %v3055
    %v3057 = vlaneseq
    %v3058 = vshrl.u32 %v3057, 7
    %v3059 = vsub.s32 2, %v3058
    %v3060 = vrot.slane %v3047, %v3059
    %v3061 = vlaneseq
    %v3062 = vshrl.u32 %v3061, 7
    %v3063 = vsub.s32 3, %v3062
    %v3064 = vrot.slane %v3047, %v3063
    %v3101 = vunpack.c.l.b16 %v3015
    %v3102 = vunpack.c.h.b16 %v3015
    %v3103 = vunpack.c.l.b16 %v3016
    %v3104 = vunpack.c.h.b16 %v3016
    %v3105 = vunpack.c.l.b16 %v3017
    %v3106 = vunpack.c.h.b16 %v3017
    %v3107 = vunpack.c.l.b16 %v3018
    %v3108 = vunpack.c.h.b16 %v3018
    %v3109 = vunpack.c.l.b16 %v3019
    %v3110 = vunpack.c.h.b16 %v3019
    %v3111 = vunpack.c.l.b16 %v3020
    %v3112 = vunpack.c.h.b16 %v3020
    %v3113 = vunpack.c.l.b16 %v3021
    %v3114 = vunpack.c.h.b16 %v3021
    %v3115 = vunpack.c.l.b16 %v3022
    %v3116 = vunpack.c.h.b16 %v3022
    %v3117 = vunpack.c.l.b16 %v3023
    %v3118 = vunpack.c.h.b16 %v3023
    %v3119 = vunpack.c.l.b16 %v3024
    %v3120 = vunpack.c.h.b16 %v3024
    %v3121 = vunpack.c.l.b16 %v3025
    %v3122 = vunpack.c.h.b16 %v3025
    %v3123 = vunpack.c.l.b16 %v3026
    %v3124 = vunpack.c.h.b16 %v3026
    %v3125 = vunpack.c.l.b16 %v3027
    %v3126 = vunpack.c.h.b16 %v3027
    %v3127 = vunpack.c.l.b16 %v3028
    %v3128 = vunpack.c.h.b16 %v3028
    %v3129 = vunpack.c.l.b16 %v3029
    %v3130 = vunpack.c.h.b16 %v3029
    %v3131 = vunpack.c.l.b16 %v3030
    %v3132 = vunpack.c.h.b16 %v3030
    %v3133 = vunpack.c.l.b16 %v3031
    %v3134 = vunpack.c.h.b16 %v3031
    %v3135 = vunpack.c.l.b16 %v3032
    %v3136 = vunpack.c.h.b16 %v3032
    %v3137 = vunpack.c.l.b16 %v3033
    %v3138 = vunpack.c.h.b16 %v3033
    %v3139 = vunpack.c.l.b16 %v3034
    %v3140 = vunpack.c.h.b16 %v3034
    %v3141 = vunpack.c.l.b16 %v3035
    %v3142 = vunpack.c.h.b16 %v3035
    %v3143 = vunpack.c.l.b16 %v3036
    %v3144 = vunpack.c.h.b16 %v3036
    %v3145 = vunpack.c.l.b16 %v3037
    %v3146 = vunpack.c.h.b16 %v3037
    %v3147 = vunpack.c.l.b16 %v3038
    %v3148 = vunpack.c.h.b16 %v3038
    %v3149 = vunpack.c.l.b16 %v3039
    %v3150 = vunpack.c.h.b16 %v3039
    %v3151 = vunpack.c.l.b16 %v3040
    %v3152 = vunpack.c.h.b16 %v3040
    %v3153 = vunpack.c.l.b16 %v3041
    %v3154 = vunpack.c.h.b16 %v3041
    %v3155 = vunpack.c.l.b16 %v3042
    %v3156 = vunpack.c.h.b16 %v3042
    %v3157 = vunpack.c.l.b16 %v3043
    %v3158 = vunpack.c.h.b16 %v3043
    %v3159 = vunpack.c.l.b16 %v3044
    %v3160 = vunpack.c.h.b16 %v3044
    %v3161 = vunpack.c.l.b16 %v3045
    %v3162 = vunpack.c.h.b16 %v3045
    %v3163 = vunpack.c.l.b16 %v3046
    %v3164 = vunpack.c.h.b16 %v3046
    %v3165 = vpack.c.b16 %v3105, %v3101
    %v3166 = vpack.c.b16 %v3106, %v3102
    %v3167 = vpack.c.b16 %v3107, %v3103
    %v3168 = vpack.c.b16 %v3108, %v3104
    %v3169 = vpack.c.b16 %v3113, %v3109
    %v3170 = vpack.c.b16 %v3114, %v3110
    %v3171 = vpack.c.b16 %v3115, %v3111
    %v3172 = vpack.c.b16 %v3116, %v3112
    %v3173 = vpack.c.b16 %v3121, %v3117
    %v3174 = vpack.c.b16 %v3122, %v3118
    %v3175 = vpack.c.b16 %v3123, %v3119
    %v3176 = vpack.c.b16 %v3124, %v3120
    %v3177 = vpack.c.b16 %v3129, %v3125
    %v3178 = vpack.c.b16 %v3130, %v3126
    %v3179 = vpack.c.b16 %v3131, %v3127
    %v3180 = vpack.c.b16 %v3132, %v3128
    %v3181 = vpack.c.b16 %v3137, %v3133
    %v3182 = vpack.c.b16 %v3138, %v3134
    %v3183 = vpack.c.b16 %v3139, %v3135
    %v3184 = vpack.c.b16 %v3140, %v3136
    %v3185 = vpack.c.b16 %v3145, %v3141
    %v3186 = vpack.c.b16 %v3146, %v3142
    %v3187 = vpack.c.b16 %v3147, %v3143
    %v3188 = vpack.c.b16 %v3148, %v3144
    %v3189 = vpack.c.b16 %v3153, %v3149
    %v3190 = vpack.c.b16 %v3154, %v3150
    %v3191 = vpack.c.b16 %v3155, %v3151
    %v3192 = vpack.c.b16 %v3156, %v3152
    %v3193 = vpack.c.b16 %v3161, %v3157
    %v3194 = vpack.c.b16 %v3162, %v3158
    %v3195 = vpack.c.b16 %v3163, %v3159
    %v3196 = vpack.c.b16 %v3164, %v3160
    %3229 = vmatprep.subr.bf16.mxu0 %v3166
    %3230 = vmatpush1.bf16.msra.mxu0 %v3165
    %3231 = vmatprep.subr.bf16.mxu0 %v3170
    %3232 = vmatpush1.bf16.msra.mxu0 %v3169
    %3233 = vmatprep.subr.bf16.mxu0 %v3174
    %3234 = vmatpush1.bf16.msra.mxu0 %v3173
    %3235 = vmatprep.subr.bf16.mxu0 %v3178
    %3236 = vmatpush1.bf16.msra.mxu0 %v3177
    %3237 = vmatprep.subr.bf16.mxu0 %v3182
    %3238 = vmatpush1.bf16.msra.mxu0 %v3181
    %3239 = vmatprep.subr.bf16.mxu0 %v3186
    %3240 = vmatpush1.bf16.msra.mxu0 %v3185
    %3241 = vmatprep.subr.bf16.mxu0 %v3190
    %3242 = vmatpush1.bf16.msra.mxu0 %v3189
    %3243 = vmatprep.subr.bf16.mxu0 %v3194
    %3244 = vmatpush1.bf16.msra.mxu0 %v3193
    %3245 = vmatprep.subr.bf16.mxu0 0
    %3246 = vmatpush1.bf16.msra.mxu0 0
    %3247 = vmatprep.subr.bf16.mxu0 0
    %3248 = vmatpush1.bf16.msra.mxu0 0
    %3249 = vmatprep.subr.bf16.mxu0 0
    %3250 = vmatpush1.bf16.msra.mxu0 0
    %3251 = vmatprep.subr.bf16.mxu0 0
    %3252 = vmatpush1.bf16.msra.mxu0 0
    %3253 = vmatprep.subr.bf16.mxu0 0
    %3254 = vmatpush1.bf16.msra.mxu0 0
    %3255 = vmatprep.subr.bf16.mxu0 0
    %3256 = vmatpush1.bf16.msra.mxu0 0
    %3257 = vmatprep.subr.bf16.mxu0 0
    %3258 = vmatpush1.bf16.msra.mxu0 0
    %3259 = vmatprep.subr.bf16.mxu0 0
    %3260 = vmatpush1.bf16.msra.mxu0 0
    %3261 = vmatprep.mubr.bf16.mxu0 0
    %3262 = vmatmul.mubr.bf16.gmra.mrb[0].mxu0 %v3011
    %v3263 = vpop.f32.mrb[0].mxu0
    %v3264 = vadd.f32 %v3052, %v3263
    %v3265 = vpop.f32.mrb[0].mxu0
    %v3266 = vadd.f32 %v3056, %v3265
    %v3267 = vpop.f32.mrb[0].mxu0
    %v3268 = vadd.f32 %v3052, %v3267
    %v3269 = vpop.f32.mrb[0].mxu0
    %v3270 = vadd.f32 %v3056, %v3269
    %3271 = vmatprep.mubr.bf16.mxu0 0
    %3272 = vmatmul.mubr.bf16.gmra.mrb[0].mxu0 %v3012
    %v3273 = vpop.f32.mrb[0].mxu0
    %v3274 = vadd.f32 %v3052, %v3273
    %v3275 = vpop.f32.mrb[0].mxu0
    %v3276 = vadd.f32 %v3056, %v3275
    %v3277 = vpop.f32.mrb[0].mxu0
    %v3278 = vadd.f32 %v3052, %v3277
    %v3279 = vpop.f32.mrb[0].mxu0
    %v3280 = vadd.f32 %v3056, %v3279
    %3281 = vmatprep.mubr.bf16.mxu0 0
    %3282 = vmatmul.mubr.bf16.gmra.mrb[0].mxu0 %v3013
    %v3283 = vpop.f32.mrb[0].mxu0
    %v3284 = vadd.f32 %v3052, %v3283
    %v3285 = vpop.f32.mrb[0].mxu0
    %v3286 = vadd.f32 %v3056, %v3285
    %v3287 = vpop.f32.mrb[0].mxu0
    %v3288 = vadd.f32 %v3052, %v3287
    %v3289 = vpop.f32.mrb[0].mxu0
    %v3290 = vadd.f32 %v3056, %v3289
    %3291 = vmatprep.mubr.bf16.mxu0 0
    %3292 = vmatmul.mubr.bf16.gmra.mrb[0].mxu0 %v3014
    %v3293 = vpop.f32.mrb[0].mxu0
    %v3294 = vadd.f32 %v3052, %v3293
    %v3295 = vpop.f32.mrb[0].mxu0
    %v3296 = vadd.f32 %v3056, %v3295
    %v3297 = vpop.f32.mrb[0].mxu0
    %v3298 = vadd.f32 %v3052, %v3297
    %v3299 = vpop.f32.mrb[0].mxu0
    %v3300 = vadd.f32 %v3056, %v3299
    %3301 = vdwg.mxu0
    %3302 = vmatprep.subr.bf16.mxu0 %v3168
    %3303 = vmatpush1.bf16.msra.mxu0 %v3167
    %3304 = vmatprep.subr.bf16.mxu0 %v3172
    %3305 = vmatpush1.bf16.msra.mxu0 %v3171
    %3306 = vmatprep.subr.bf16.mxu0 %v3176
    %3307 = vmatpush1.bf16.msra.mxu0 %v3175
    %3308 = vmatprep.subr.bf16.mxu0 %v3180
    %3309 = vmatpush1.bf16.msra.mxu0 %v3179
    %3310 = vmatprep.subr.bf16.mxu0 %v3184
    %3311 = vmatpush1.bf16.msra.mxu0 %v3183
    %3312 = vmatprep.subr.bf16.mxu0 %v3188
    %3313 = vmatpush1.bf16.msra.mxu0 %v3187
    %3314 = vmatprep.subr.bf16.mxu0 %v3192
    %3315 = vmatpush1.bf16.msra.mxu0 %v3191
    %3316 = vmatprep.subr.bf16.mxu0 %v3196
    %3317 = vmatpush1.bf16.msra.mxu0 %v3195
    %3318 = vmatprep.subr.bf16.mxu0 0
    %3319 = vmatpush1.bf16.msra.mxu0 0
    %3320 = vmatprep.subr.bf16.mxu0 0
    %3321 = vmatpush1.bf16.msra.mxu0 0
    %3322 = vmatprep.subr.bf16.mxu0 0
    %3323 = vmatpush1.bf16.msra.mxu0 0
    %3324 = vmatprep.subr.bf16.mxu0 0
    %3325 = vmatpush1.bf16.msra.mxu0 0
    %3326 = vmatprep.subr.bf16.mxu0 0
    %3327 = vmatpush1.bf16.msra.mxu0 0
    %3328 = vmatprep.subr.bf16.mxu0 0
    %3329 = vmatpush1.bf16.msra.mxu0 0
    %3330 = vmatprep.subr.bf16.mxu0 0
    %3331 = vmatpush1.bf16.msra.mxu0 0
    %3332 = vmatprep.subr.bf16.mxu0 0
    %3333 = vmatpush1.bf16.msra.mxu0 0
    %3334 = vmatprep.mubr.bf16.mxu0 0
    %3335 = vmatmul.mubr.bf16.gmra.mrb[0].mxu0 %v3011
    %v3336 = vpop.f32.mrb[0].mxu0
    %v3337 = vadd.f32 %v3060, %v3336
    %v3338 = vpop.f32.mrb[0].mxu0
    %v3339 = vadd.f32 %v3064, %v3338
    %v3340 = vpop.f32.mrb[0].mxu0
    %v3341 = vadd.f32 %v3060, %v3340
    %v3342 = vpop.f32.mrb[0].mxu0
    %v3343 = vadd.f32 %v3064, %v3342
    %3344 = vmatprep.mubr.bf16.mxu0 0
    %3345 = vmatmul.mubr.bf16.gmra.mrb[0].mxu0 %v3012
    %v3346 = vpop.f32.mrb[0].mxu0
    %v3347 = vadd.f32 %v3060, %v3346
    %v3348 = vpop.f32.mrb[0].mxu0
    %v3349 = vadd.f32 %v3064, %v3348
    %v3350 = vpop.f32.mrb[0].mxu0
    %v3351 = vadd.f32 %v3060, %v3350
    %v3352 = vpop.f32.mrb[0].mxu0
    %v3353 = vadd.f32 %v3064, %v3352
    %3354 = vmatprep.mubr.bf16.mxu0 0
    %3355 = vmatmul.mubr.bf16.gmra.mrb[0].mxu0 %v3013
    %v3356 = vpop.f32.mrb[0].mxu0
    %v3357 = vadd.f32 %v3060, %v3356
    %v3358 = vpop.f32.mrb[0].mxu0
    %v3359 = vadd.f32 %v3064, %v3358
    %v3360 = vpop.f32.mrb[0].mxu0
    %v3361 = vadd.f32 %v3060, %v3360
    %v3362 = vpop.f32.mrb[0].mxu0
    %v3363 = vadd.f32 %v3064, %v3362
    %3364 = vmatprep.mubr.bf16.mxu0 0
    %3365 = vmatmul.mubr.bf16.gmra.mrb[0].mxu0 %v3014
    %v3366 = vpop.f32.mrb[0].mxu0
    %v3367 = vadd.f32 %v3060, %v3366
    %v3368 = vpop.f32.mrb[0].mxu0
    %v3369 = vadd.f32 %v3064, %v3368
    %v3370 = vpop.f32.mrb[0].mxu0
    %v3371 = vadd.f32 %v3060, %v3370
    %v3372 = vpop.f32.mrb[0].mxu0
    %v3373 = vadd.f32 %v3064, %v3372
    %3374 = vdwg.mxu0
    %3375 = vst [vmem:[#allocation3] sm:$0xff] %v3264
    %3376 = vst [vmem:[#allocation3 + $0x8] sm:$0xff] %v3266
    %3377 = vst [vmem:[#allocation3 + $0x10] sm:$0xff] %v3337
    %3378 = vst [vmem:[#allocation3 + $0x18] sm:$0xff] %v3339
    %3379 = vst [vmem:[#allocation3 + $0x20] sm:$0xff] %v3268
    %3380 = vst [vmem:[#allocation3 + $0x28] sm:$0xff] %v3270
    %3381 = vst [vmem:[#allocation3 + $0x30] sm:$0xff] %v3341
    %3382 = vst [vmem:[#allocation3 + $0x38] sm:$0xff] %v3343
    %3383 = vst [vmem:[#allocation3 + $0x40] sm:$0xff] %v3274
    %3384 = vst [vmem:[#allocation3 + $0x48] sm:$0xff] %v3276
    %3385 = vst [vmem:[#allocation3 + $0x50] sm:$0xff] %v3347
    %3386 = vst [vmem:[#allocation3 + $0x58] sm:$0xff] %v3349
    %3387 = vst [vmem:[#allocation3 + $0x60] sm:$0xff] %v3278
    %3388 = vst [vmem:[#allocation3 + $0x68] sm:$0xff] %v3280
    %3389 = vst [vmem:[#allocation3 + $0x70] sm:$0xff] %v3351
    %3390 = vst [vmem:[#allocation3 + $0x78] sm:$0xff] %v3353
    %3391 = vst [vmem:[#allocation3 + $0x80] sm:$0xff] %v3284
    %3392 = vst [vmem:[#allocation3 + $0x88] sm:$0xff] %v3286
    %3393 = vst [vmem:[#allocation3 + $0x90] sm:$0xff] %v3357
    %3394 = vst [vmem:[#allocation3 + $0x98] sm:$0xff] %v3359
    %3395 = vst [vmem:[#allocation3 + $0xa0] sm:$0xff] %v3288
    %3396 = vst [vmem:[#allocation3 + $0xa8] sm:$0xff] %v3290
    %3397 = vst [vmem:[#allocation3 + $0xb0] sm:$0xff] %v3361
    %3398 = vst [vmem:[#allocation3 + $0xb8] sm:$0xff] %v3363
    %3399 = vst [vmem:[#allocation3 + $0xc0] sm:$0xff] %v3294
    %3400 = vst [vmem:[#allocation3 + $0xc8] sm:$0xff] %v3296
    %3401 = vst [vmem:[#allocation3 + $0xd0] sm:$0xff] %v3367
    %3402 = vst [vmem:[#allocation3 + $0xd8] sm:$0xff] %v3369
    %3403 = vst [vmem:[#allocation3 + $0xe0] sm:$0xff] %v3298
    %3404 = vst [vmem:[#allocation3 + $0xe8] sm:$0xff] %v3300
    %3405 = vst [vmem:[#allocation3 + $0xf0] sm:$0xff] %v3371
    %3406 = vst [vmem:[#allocation3 + $0xf8] sm:$0xff] %v3373
    %v3407 = vld [vmem:[#allocation3] sm:$0xff]
    %v3408 = vld [vmem:[#allocation3 + $0x8] sm:$0xff]
    %v3409 = vld [vmem:[#allocation3 + $0x10] sm:$0xff]
    %v3410 = vld [vmem:[#allocation3 + $0x18] sm:$0xff]
    %v3411 = vld [vmem:[#allocation12] sm:$0xff]
    %v3412 = vld [vmem:[#allocation12 + $0x8] sm:$0xff]
    %v3413 = vld [vmem:[#allocation12 + $0x10] sm:$0xff]
    %v3414 = vld [vmem:[#allocation12 + $0x18] sm:$0xff]
    %v3415 = vld [vmem:[#allocation12 + $0x20] sm:$0xff]
    %v3416 = vld [vmem:[#allocation12 + $0x28] sm:$0xff]
    %v3417 = vld [vmem:[#allocation12 + $0x30] sm:$0xff]
    %v3418 = vld [vmem:[#allocation12 + $0x38] sm:$0xff]
    %v3419 = vld [vmem:[#allocation12 + $0x40] sm:$0xff]
    %v3420 = vld [vmem:[#allocation12 + $0x48] sm:$0xff]
    %v3421 = vld [vmem:[#allocation12 + $0x50] sm:$0xff]
    %v3422 = vld [vmem:[#allocation12 + $0x58] sm:$0xff]
    %v3423 = vld [vmem:[#allocation12 + $0x60] sm:$0xff]
    %v3424 = vld [vmem:[#allocation12 + $0x68] sm:$0xff]
    %v3425 = vld [vmem:[#allocation12 + $0x70] sm:$0xff]
    %v3426 = vld [vmem:[#allocation12 + $0x78] sm:$0xff]
    %v3427 = vld [vmem:[#allocation12 + $0x80] sm:$0xff]
    %v3428 = vld [vmem:[#allocation12 + $0x88] sm:$0xff]
    %v3429 = vld [vmem:[#allocation12 + $0x90] sm:$0xff]
    %v3430 = vld [vmem:[#allocation12 + $0x98] sm:$0xff]
    %v3431 = vld [vmem:[#allocation12 + $0xa0] sm:$0xff]
    %v3432 = vld [vmem:[#allocation12 + $0xa8] sm:$0xff]
    %v3433 = vld [vmem:[#allocation12 + $0xb0] sm:$0xff]
    %v3434 = vld [vmem:[#allocation12 + $0xb8] sm:$0xff]
    %v3435 = vld [vmem:[#allocation12 + $0xc0] sm:$0xff]
    %v3436 = vld [vmem:[#allocation12 + $0xc8] sm:$0xff]
    %v3437 = vld [vmem:[#allocation12 + $0xd0] sm:$0xff]
    %v3438 = vld [vmem:[#allocation12 + $0xd8] sm:$0xff]
    %v3439 = vld [vmem:[#allocation12 + $0xe0] sm:$0xff]
    %v3440 = vld [vmem:[#allocation12 + $0xe8] sm:$0xff]
    %v3441 = vld [vmem:[#allocation12 + $0xf0] sm:$0xff]
    %v3442 = vld [vmem:[#allocation12 + $0xf8] sm:$0xff]
    %v3475 = vunpack.c.l.b16 %v3411
    %v3476 = vunpack.c.h.b16 %v3411
    %v3477 = vunpack.c.l.b16 %v3412
    %v3478 = vunpack.c.h.b16 %v3412
    %v3479 = vunpack.c.l.b16 %v3413
    %v3480 = vunpack.c.h.b16 %v3413
    %v3481 = vunpack.c.l.b16 %v3414
    %v3482 = vunpack.c.h.b16 %v3414
    %v3483 = vunpack.c.l.b16 %v3415
    %v3484 = vunpack.c.h.b16 %v3415
    %v3485 = vunpack.c.l.b16 %v3416
    %v3486 = vunpack.c.h.b16 %v3416
    %v3487 = vunpack.c.l.b16 %v3417
    %v3488 = vunpack.c.h.b16 %v3417
    %v3489 = vunpack.c.l.b16 %v3418
    %v3490 = vunpack.c.h.b16 %v3418
    %v3491 = vunpack.c.l.b16 %v3419
    %v3492 = vunpack.c.h.b16 %v3419
    %v3493 = vunpack.c.l.b16 %v3420
    %v3494 = vunpack.c.h.b16 %v3420
    %v3495 = vunpack.c.l.b16 %v3421
    %v3496 = vunpack.c.h.b16 %v3421
    %v3497 = vunpack.c.l.b16 %v3422
    %v3498 = vunpack.c.h.b16 %v3422
    %v3499 = vunpack.c.l.b16 %v3423
    %v3500 = vunpack.c.h.b16 %v3423
    %v3501 = vunpack.c.l.b16 %v3424
    %v3502 = vunpack.c.h.b16 %v3424
    %v3503 = vunpack.c.l.b16 %v3425
    %v3504 = vunpack.c.h.b16 %v3425
    %v3505 = vunpack.c.l.b16 %v3426
    %v3506 = vunpack.c.h.b16 %v3426
    %v3507 = vunpack.c.l.b16 %v3427
    %v3508 = vunpack.c.h.b16 %v3427
    %v3509 = vunpack.c.l.b16 %v3428
    %v3510 = vunpack.c.h.b16 %v3428
    %v3511 = vunpack.c.l.b16 %v3429
    %v3512 = vunpack.c.h.b16 %v3429
    %v3513 = vunpack.c.l.b16 %v3430
    %v3514 = vunpack.c.h.b16 %v3430
    %v3515 = vunpack.c.l.b16 %v3431
    %v3516 = vunpack.c.h.b16 %v3431
    %v3517 = vunpack.c.l.b16 %v3432
    %v3518 = vunpack.c.h.b16 %v3432
    %v3519 = vunpack.c.l.b16 %v3433
    %v3520 = vunpack.c.h.b16 %v3433
    %v3521 = vunpack.c.l.b16 %v3434
    %v3522 = vunpack.c.h.b16 %v3434
    %v3523 = vunpack.c.l.b16 %v3435
    %v3524 = vunpack.c.h.b16 %v3435
    %v3525 = vunpack.c.l.b16 %v3436
    %v3526 = vunpack.c.h.b16 %v3436
    %v3527 = vunpack.c.l.b16 %v3437
    %v3528 = vunpack.c.h.b16 %v3437
    %v3529 = vunpack.c.l.b16 %v3438
    %v3530 = vunpack.c.h.b16 %v3438
    %v3531 = vunpack.c.l.b16 %v3439
    %v3532 = vunpack.c.h.b16 %v3439
    %v3533 = vunpack.c.l.b16 %v3440
    %v3534 = vunpack.c.h.b16 %v3440
    %v3535 = vunpack.c.l.b16 %v3441
    %v3536 = vunpack.c.h.b16 %v3441
    %v3537 = vunpack.c.l.b16 %v3442
    %v3538 = vunpack.c.h.b16 %v3442
    %v3539 = vpack.c.b16 %v3479, %v3475
    %v3540 = vpack.c.b16 %v3480, %v3476
    %v3541 = vpack.c.b16 %v3481, %v3477
    %v3542 = vpack.c.b16 %v3482, %v3478
    %v3543 = vpack.c.b16 %v3487, %v3483
    %v3544 = vpack.c.b16 %v3488, %v3484
    %v3545 = vpack.c.b16 %v3489, %v3485
    %v3546 = vpack.c.b16 %v3490, %v3486
    %v3547 = vpack.c.b16 %v3495, %v3491
    %v3548 = vpack.c.b16 %v3496, %v3492
    %v3549 = vpack.c.b16 %v3497, %v3493
    %v3550 = vpack.c.b16 %v3498, %v3494
    %v3551 = vpack.c.b16 %v3503, %v3499
    %v3552 = vpack.c.b16 %v3504, %v3500
    %v3553 = vpack.c.b16 %v3505, %v3501
    %v3554 = vpack.c.b16 %v3506, %v3502
    %v3555 = vpack.c.b16 %v3511, %v3507
    %v3556 = vpack.c.b16 %v3512, %v3508
    %v3557 = vpack.c.b16 %v3513, %v3509
    %v3558 = vpack.c.b16 %v3514, %v3510
    %v3559 = vpack.c.b16 %v3519, %v3515
    %v3560 = vpack.c.b16 %v3520, %v3516
    %v3561 = vpack.c.b16 %v3521, %v3517
    %v3562 = vpack.c.b16 %v3522, %v3518
    %v3563 = vpack.c.b16 %v3527, %v3523
    %v3564 = vpack.c.b16 %v3528, %v3524
    %v3565 = vpack.c.b16 %v3529, %v3525
    %v3566 = vpack.c.b16 %v3530, %v3526
    %v3567 = vpack.c.b16 %v3535, %v3531
    %v3568 = vpack.c.b16 %v3536, %v3532
    %v3569 = vpack.c.b16 %v3537, %v3533
    %v3570 = vpack.c.b16 %v3538, %v3534
    %3603 = vmatprep.subr.bf16.mxu0 %v3540
    %3604 = vmatpush1.bf16.msra.mxu0 %v3539
    %3605 = vmatprep.subr.bf16.mxu0 %v3544
    %3606 = vmatpush1.bf16.msra.mxu0 %v3543
    %3607 = vmatprep.subr.bf16.mxu0 %v3548
    %3608 = vmatpush1.bf16.msra.mxu0 %v3547
    %3609 = vmatprep.subr.bf16.mxu0 %v3552
    %3610 = vmatpush1.bf16.msra.mxu0 %v3551
    %3611 = vmatprep.subr.bf16.mxu0 %v3556
    %3612 = vmatpush1.bf16.msra.mxu0 %v3555
    %3613 = vmatprep.subr.bf16.mxu0 %v3560
    %3614 = vmatpush1.bf16.msra.mxu0 %v3559
    %3615 = vmatprep.subr.bf16.mxu0 %v3564
    %3616 = vmatpush1.bf16.msra.mxu0 %v3563
    %3617 = vmatprep.subr.bf16.mxu0 %v3568
    %3618 = vmatpush1.bf16.msra.mxu0 %v3567
    %3619 = vmatprep.subr.bf16.mxu0 0
    %3620 = vmatpush1.bf16.msra.mxu0 0
    %3621 = vmatprep.subr.bf16.mxu0 0
    %3622 = vmatpush1.bf16.msra.mxu0 0
    %3623 = vmatprep.subr.bf16.mxu0 0
    %3624 = vmatpush1.bf16.msra.mxu0 0
    %3625 = vmatprep.subr.bf16.mxu0 0
    %3626 = vmatpush1.bf16.msra.mxu0 0
    %3627 = vmatprep.subr.bf16.mxu0 0
    %3628 = vmatpush1.bf16.msra.mxu0 0
    %3629 = vmatprep.subr.bf16.mxu0 0
    %3630 = vmatpush1.bf16.msra.mxu0 0
    %3631 = vmatprep.subr.bf16.mxu0 0
    %3632 = vmatpush1.bf16.msra.mxu0 0
    %3633 = vmatprep.subr.bf16.mxu0 0
    %3634 = vmatpush1.bf16.msra.mxu0 0
    %3635 = vmatprep.mubr.bf16.mxu0 0
    %3636 = vmatmul.mubr.bf16.gmra.mrb[0].mxu0 0
    %v3637 = vpop.f32.mrb[0].mxu0
    %v3638 = vadd.f32 0.0, %v3637
    %v3639 = vpop.f32.mrb[0].mxu0
    %v3640 = vadd.f32 0.0, %v3639
    %v3641 = vpop.f32.mrb[0].mxu0
    %v3642 = vpop.f32.mrb[0].mxu0
    %3643 = vdwg.mxu0
    %3644 = vmatprep.subr.bf16.mxu0 %v3542
    %3645 = vmatpush1.bf16.msra.mxu0 %v3541
    %3646 = vmatprep.subr.bf16.mxu0 %v3546
    %3647 = vmatpush1.bf16.msra.mxu0 %v3545
    %3648 = vmatprep.subr.bf16.mxu0 %v3550
    %3649 = vmatpush1.bf16.msra.mxu0 %v3549
    %3650 = vmatprep.subr.bf16.mxu0 %v3554
    %3651 = vmatpush1.bf16.msra.mxu0 %v3553
    %3652 = vmatprep.subr.bf16.mxu0 %v3558
    %3653 = vmatpush1.bf16.msra.mxu0 %v3557
    %3654 = vmatprep.subr.bf16.mxu0 %v3562
    %3655 = vmatpush1.bf16.msra.mxu0 %v3561
    %3656 = vmatprep.subr.bf16.mxu0 %v3566
    %3657 = vmatpush1.bf16.msra.mxu0 %v3565
    %3658 = vmatprep.subr.bf16.mxu0 %v3570
    %3659 = vmatpush1.bf16.msra.mxu0 %v3569
    %3660 = vmatprep.subr.bf16.mxu0 0
    %3661 = vmatpush1.bf16.msra.mxu0 0
    %3662 = vmatprep.subr.bf16.mxu0 0
    %3663 = vmatpush1.bf16.msra.mxu0 0
    %3664 = vmatprep.subr.bf16.mxu0 0
    %3665 = vmatpush1.bf16.msra.mxu0 0
    %3666 = vmatprep.subr.bf16.mxu0 0
    %3667 = vmatpush1.bf16.msra.mxu0 0
    %3668 = vmatprep.subr.bf16.mxu0 0
    %3669 = vmatpush1.bf16.msra.mxu0 0
    %3670 = vmatprep.subr.bf16.mxu0 0
    %3671 = vmatpush1.bf16.msra.mxu0 0
    %3672 = vmatprep.subr.bf16.mxu0 0
    %3673 = vmatpush1.bf16.msra.mxu0 0
    %3674 = vmatprep.subr.bf16.mxu0 0
    %3675 = vmatpush1.bf16.msra.mxu0 0
    %3676 = vmatprep.mubr.bf16.mxu0 0
    %3677 = vmatmul.mubr.bf16.gmra.mrb[0].mxu0 0
    %v3678 = vpop.f32.mrb[0].mxu0
    %v3679 = vadd.f32 0.0, %v3678
    %v3680 = vpop.f32.mrb[0].mxu0
    %v3681 = vadd.f32 0.0, %v3680
    %v3682 = vpop.f32.mrb[0].mxu0
    %v3683 = vpop.f32.mrb[0].mxu0
    %3684 = vdwg.mxu0
    %v3685 = vadd.f32 %v3407, %v3638
    %v3686 = vadd.f32 %v3408, %v3640
    %v3687 = vadd.f32 %v3409, %v3679
    %v3688 = vadd.f32 %v3410, %v3681
    %v3689 = vxor.u32 %v3685, 2147483648
    %v3690 = vmul.f32 %v3689, 1.442695
    %v3691 = vpow.pop %v3690
    %v3692 = vadd.f32 %v3691, 1.0
    %v3693 = vrcp.pop %v3692
    %v3694 = vmul.f32 1.0, %v3693
    %v3695 = vxor.u32 %v3686, 2147483648
    %v3696 = vmul.f32 %v3695, 1.442695
    %v3697 = vpow.pop %v3696
    %v3698 = vadd.f32 %v3697, 1.0
    %v3699 = vrcp.pop %v3698
    %v3700 = vmul.f32 1.0, %v3699
    %v3701 = vtanh.pop %v3687
    %v3702 = vxor.u32 %v3688, 2147483648
    %v3703 = vmul.f32 %v3702, 1.442695
    %v3704 = vpow.pop %v3703
    %v3705 = vadd.f32 %v3704, 1.0
    %v3706 = vrcp.pop %v3705
    %v3707 = vmul.f32 1.0, %v3706
    %v3708 = vmul.f32 %v3700, 0.0
    %v3709 = vmul.f32 %v3694, %v3701
    %v3710 = vadd.f32 %v3708, %v3709
    %v3711 = vtanh.pop %v3710
    %v3712 = vmul.f32 %v3707, %v3711
    %3713 = vst [vmem:[#allocation2] sm:$0xff] %v3712
    %v3714 = vld [vmem:[#allocation3 + $0x20] sm:$0xff]
    %v3715 = vld [vmem:[#allocation3 + $0x28] sm:$0xff]
    %v3716 = vld [vmem:[#allocation3 + $0x30] sm:$0xff]
    %v3717 = vld [vmem:[#allocation3 + $0x38] sm:$0xff]
    %v3718 = vpack.c.bf16 %v3712, %v3712
    %v3719 = vld [vmem:[#allocation12] sm:$0xff]
    %v3720 = vld [vmem:[#allocation12 + $0x8] sm:$0xff]
    %v3721 = vld [vmem:[#allocation12 + $0x10] sm:$0xff]
    %v3722 = vld [vmem:[#allocation12 + $0x18] sm:$0xff]
    %v3723 = vld [vmem:[#allocation12 + $0x20] sm:$0xff]
    %v3724 = vld [vmem:[#allocation12 + $0x28] sm:$0xff]
    %v3725 = vld [vmem:[#allocation12 + $0x30] sm:$0xff]
    %v3726 = vld [vmem:[#allocation12 + $0x38] sm:$0xff]
    %v3727 = vld [vmem:[#allocation12 + $0x40] sm:$0xff]
    %v3728 = vld [vmem:[#allocation12 + $0x48] sm:$0xff]
    %v3729 = vld [vmem:[#allocation12 + $0x50] sm:$0xff]
    %v3730 = vld [vmem:[#allocation12 + $0x58] sm:$0xff]
    %v3731 = vld [vmem:[#allocation12 + $0x60] sm:$0xff]
    %v3732 = vld [vmem:[#allocation12 + $0x68] sm:$0xff]
    %v3733 = vld [vmem:[#allocation12 + $0x70] sm:$0xff]
    %v3734 = vld [vmem:[#allocation12 + $0x78] sm:$0xff]
    %v3735 = vld [vmem:[#allocation12 + $0x80] sm:$0xff]
    %v3736 = vld [vmem:[#allocation12 + $0x88] sm:$0xff]
    %v3737 = vld [vmem:[#allocation12 + $0x90] sm:$0xff]
    %v3738 = vld [vmem:[#allocation12 + $0x98] sm:$0xff]
    %v3739 = vld [vmem:[#allocation12 + $0xa0] sm:$0xff]
    %v3740 = vld [vmem:[#allocation12 + $0xa8] sm:$0xff]
    %v3741 = vld [vmem:[#allocation12 + $0xb0] sm:$0xff]
    %v3742 = vld [vmem:[#allocation12 + $0xb8] sm:$0xff]
    %v3743 = vld [vmem:[#allocation12 + $0xc0] sm:$0xff]
    %v3744 = vld [vmem:[#allocation12 + $0xc8] sm:$0xff]
    %v3745 = vld [vmem:[#allocation12 + $0xd0] sm:$0xff]
    %v3746 = vld [vmem:[#allocation12 + $0xd8] sm:$0xff]
    %v3747 = vld [vmem:[#allocation12 + $0xe0] sm:$0xff]
    %v3748 = vld [vmem:[#allocation12 + $0xe8] sm:$0xff]
    %v3749 = vld [vmem:[#allocation12 + $0xf0] sm:$0xff]
    %v3750 = vld [vmem:[#allocation12 + $0xf8] sm:$0xff]
    %v3783 = vunpack.c.l.b16 %v3719
    %v3784 = vunpack.c.h.b16 %v3719
    %v3785 = vunpack.c.l.b16 %v3720
    %v3786 = vunpack.c.h.b16 %v3720
    %v3787 = vunpack.c.l.b16 %v3721
    %v3788 = vunpack.c.h.b16 %v3721
    %v3789 = vunpack.c.l.b16 %v3722
    %v3790 = vunpack.c.h.b16 %v3722
    %v3791 = vunpack.c.l.b16 %v3723
    %v3792 = vunpack.c.h.b16 %v3723
    %v3793 = vunpack.c.l.b16 %v3724
    %v3794 = vunpack.c.h.b16 %v3724
    %v3795 = vunpack.c.l.b16 %v3725
    %v3796 = vunpack.c.h.b16 %v3725
    %v3797 = vunpack.c.l.b16 %v3726
    %v3798 = vunpack.c.h.b16 %v3726
    %v3799 = vunpack.c.l.b16 %v3727
    %v3800 = vunpack.c.h.b16 %v3727
    %v3801 = vunpack.c.l.b16 %v3728
    %v3802 = vunpack.c.h.b16 %v3728
    %v3803 = vunpack.c.l.b16 %v3729
    %v3804 = vunpack.c.h.b16 %v3729
    %v3805 = vunpack.c.l.b16 %v3730
    %v3806 = vunpack.c.h.b16 %v3730
    %v3807 = vunpack.c.l.b16 %v3731
    %v3808 = vunpack.c.h.b16 %v3731
    %v3809 = vunpack.c.l.b16 %v3732
    %v3810 = vunpack.c.h.b16 %v3732
    %v3811 = vunpack.c.l.b16 %v3733
    %v3812 = vunpack.c.h.b16 %v3733
    %v3813 = vunpack.c.l.b16 %v3734
    %v3814 = vunpack.c.h.b16 %v3734
    %v3815 = vunpack.c.l.b16 %v3735
    %v3816 = vunpack.c.h.b16 %v3735
    %v3817 = vunpack.c.l.b16 %v3736
    %v3818 = vunpack.c.h.b16 %v3736
    %v3819 = vunpack.c.l.b16 %v3737
    %v3820 = vunpack.c.h.b16 %v3737
    %v3821 = vunpack.c.l.b16 %v3738
    %v3822 = vunpack.c.h.b16 %v3738
    %v3823 = vunpack.c.l.b16 %v3739
    %v3824 = vunpack.c.h.b16 %v3739
    %v3825 = vunpack.c.l.b16 %v3740
    %v3826 = vunpack.c.h.b16 %v3740
    %v3827 = vunpack.c.l.b16 %v3741
    %v3828 = vunpack.c.h.b16 %v3741
    %v3829 = vunpack.c.l.b16 %v3742
    %v3830 = vunpack.c.h.b16 %v3742
    %v3831 = vunpack.c.l.b16 %v3743
    %v3832 = vunpack.c.h.b16 %v3743
    %v3833 = vunpack.c.l.b16 %v3744
    %v3834 = vunpack.c.h.b16 %v3744
    %v3835 = vunpack.c.l.b16 %v3745
    %v3836 = vunpack.c.h.b16 %v3745
    %v3837 = vunpack.c.l.b16 %v3746
    %v3838 = vunpack.c.h.b16 %v3746
    %v3839 = vunpack.c.l.b16 %v3747
    %v3840 = vunpack.c.h.b16 %v3747
    %v3841 = vunpack.c.l.b16 %v3748
    %v3842 = vunpack.c.h.b16 %v3748
    %v3843 = vunpack.c.l.b16 %v3749
    %v3844 = vunpack.c.h.b16 %v3749
    %v3845 = vunpack.c.l.b16 %v3750
    %v3846 = vunpack.c.h.b16 %v3750
    %v3847 = vpack.c.b16 %v3787, %v3783
    %v3848 = vpack.c.b16 %v3788, %v3784
    %v3849 = vpack.c.b16 %v3789, %v3785
    %v3850 = vpack.c.b16 %v3790, %v3786
    %v3851 = vpack.c.b16 %v3795, %v3791
    %v3852 = vpack.c.b16 %v3796, %v3792
    %v3853 = vpack.c.b16 %v3797, %v3793
    %v3854 = vpack.c.b16 %v3798, %v3794
    %v3855 = vpack.c.b16 %v3803, %v3799
    %v3856 = vpack.c.b16 %v3804, %v3800
    %v3857 = vpack.c.b16 %v3805, %v3801
    %v3858 = vpack.c.b16 %v3806, %v3802
    %v3859 = vpack.c.b16 %v3811, %v3807
    %v3860 = vpack.c.b16 %v3812, %v3808
    %v3861 = vpack.c.b16 %v3813, %v3809
    %v3862 = vpack.c.b16 %v3814, %v3810
    %v3863 = vpack.c.b16 %v3819, %v3815
    %v3864 = vpack.c.b16 %v3820, %v3816
    %v3865 = vpack.c.b16 %v3821, %v3817
    %v3866 = vpack.c.b16 %v3822, %v3818
    %v3867 = vpack.c.b16 %v3827, %v3823
    %v3868 = vpack.c.b16 %v3828, %v3824
    %v3869 = vpack.c.b16 %v3829, %v3825
    %v3870 = vpack.c.b16 %v3830, %v3826
    %v3871 = vpack.c.b16 %v3835, %v3831
    %v3872 = vpack.c.b16 %v3836, %v3832
    %v3873 = vpack.c.b16 %v3837, %v3833
    %v3874 = vpack.c.b16 %v3838, %v3834
    %v3875 = vpack.c.b16 %v3843, %v3839
    %v3876 = vpack.c.b16 %v3844, %v3840
    %v3877 = vpack.c.b16 %v3845, %v3841
    %v3878 = vpack.c.b16 %v3846, %v3842
    %3911 = vmatprep.subr.bf16.mxu0 %v3848
    %3912 = vmatpush1.bf16.msra.mxu0 %v3847
    %3913 = vmatprep.subr.bf16.mxu0 %v3852
    %3914 = vmatpush1.bf16.msra.mxu0 %v3851
    %3915 = vmatprep.subr.bf16.mxu0 %v3856
    %3916 = vmatpush1.bf16.msra.mxu0 %v3855
    %3917 = vmatprep.subr.bf16.mxu0 %v3860
    %3918 = vmatpush1.bf16.msra.mxu0 %v3859
    %3919 = vmatprep.subr.bf16.mxu0 %v3864
    %3920 = vmatpush1.bf16.msra.mxu0 %v3863
    %3921 = vmatprep.subr.bf16.mxu0 %v3868
    %3922 = vmatpush1.bf16.msra.mxu0 %v3867
    %3923 = vmatprep.subr.bf16.mxu0 %v3872
    %3924 = vmatpush1.bf16.msra.mxu0 %v3871
    %3925 = vmatprep.subr.bf16.mxu0 %v3876
    %3926 = vmatpush1.bf16.msra.mxu0 %v3875
    %3927 = vmatprep.subr.bf16.mxu0 0
    %3928 = vmatpush1.bf16.msra.mxu0 0
    %3929 = vmatprep.subr.bf16.mxu0 0
    %3930 = vmatpush1.bf16.msra.mxu0 0
    %3931 = vmatprep.subr.bf16.mxu0 0
    %3932 = vmatpush1.bf16.msra.mxu0 0
    %3933 = vmatprep.subr.bf16.mxu0 0
    %3934 = vmatpush1.bf16.msra.mxu0 0
    %3935 = vmatprep.subr.bf16.mxu0 0
    %3936 = vmatpush1.bf16.msra.mxu0 0
    %3937 = vmatprep.subr.bf16.mxu0 0
    %3938 = vmatpush1.bf16.msra.mxu0 0
    %3939 = vmatprep.subr.bf16.mxu0 0
    %3940 = vmatpush1.bf16.msra.mxu0 0
    %3941 = vmatprep.subr.bf16.mxu0 0
    %3942 = vmatpush1.bf16.msra.mxu0 0
    %3943 = vmatprep.mubr.bf16.mxu0 0
    %3944 = vmatmul.mubr.bf16.gmra.mrb[0].mxu0 %v3718
    %v3945 = vpop.f32.mrb[0].mxu0
    %v3946 = vadd.f32 0.0, %v3945
    %v3947 = vpop.f32.mrb[0].mxu0
    %v3948 = vadd.f32 0.0, %v3947
    %v3949 = vpop.f32.mrb[0].mxu0
    %v3950 = vpop.f32.mrb[0].mxu0
    %3951 = vdwg.mxu0
    %3952 = vmatprep.subr.bf16.mxu0 %v3850
    %3953 = vmatpush1.bf16.msra.mxu0 %v3849
    %3954 = vmatprep.subr.bf16.mxu0 %v3854
    %3955 = vmatpush1.bf16.msra.mxu0 %v3853
    %3956 = vmatprep.subr.bf16.mxu0 %v3858
    %3957 = vmatpush1.bf16.msra.mxu0 %v3857
    %3958 = vmatprep.subr.bf16.mxu0 %v3862
    %3959 = vmatpush1.bf16.msra.mxu0 %v3861
    %3960 = vmatprep.subr.bf16.mxu0 %v3866
    %3961 = vmatpush1.bf16.msra.mxu0 %v3865
    %3962 = vmatprep.subr.bf16.mxu0 %v3870
    %3963 = vmatpush1.bf16.msra.mxu0 %v3869
    %3964 = vmatprep.subr.bf16.mxu0 %v3874
    %3965 = vmatpush1.bf16.msra.mxu0 %v3873
    %3966 = vmatprep.subr.bf16.mxu0 %v3878
    %3967 = vmatpush1.bf16.msra.mxu0 %v3877
    %3968 = vmatprep.subr.bf16.mxu0 0
    %3969 = vmatpush1.bf16.msra.mxu0 0
    %3970 = vmatprep.subr.bf16.mxu0 0
    %3971 = vmatpush1.bf16.msra.mxu0 0
    %3972 = vmatprep.subr.bf16.mxu0 0
    %3973 = vmatpush1.bf16.msra.mxu0 0
    %3974 = vmatprep.subr.bf16.mxu0 0
    %3975 = vmatpush1.bf16.msra.mxu0 0
    %3976 = vmatprep.subr.bf16.mxu0 0
    %3977 = vmatpush1.bf16.msra.mxu0 0
    %3978 = vmatprep.subr.bf16.mxu0 0
    %3979 = vmatpush1.bf16.msra.mxu0 0
    %3980 = vmatprep.subr.bf16.mxu0 0
    %3981 = vmatpush1.bf16.msra.mxu0 0
    %3982 = vmatprep.subr.bf16.mxu0 0
    %3983 = vmatpush1.bf16.msra.mxu0 0
    %3984 = vmatprep.mubr.bf16.mxu0 0
    %3985 = vmatmul.mubr.bf16.gmra.mrb[0].mxu0 %v3718
    %v3986 = vpop.f32.mrb[0].mxu0
    %v3987 = vadd.f32 0.0, %v3986
    %v3988 = vpop.f32.mrb[0].mxu0
    %v3989 = vadd.f32 0.0, %v3988
    %v3990 = vpop.f32.mrb[0].mxu0
    %v3991 = vpop.f32.mrb[0].mxu0
    %3992 = vdwg.mxu0
    %v3993 = vadd.f32 %v3714, %v3946
    %v3994 = vadd.f32 %v3715, %v3948
    %v3995 = vadd.f32 %v3716, %v3987
    %v3996 = vadd.f32 %v3717, %v3989
    %v3997 = vxor.u32 %v3993, 2147483648
    %v3998 = vmul.f32 %v3997, 1.442695
    %v3999 = vpow.pop %v3998
    %v4000 = vadd.f32 %v3999, 1.0
    %v4001 = vrcp.pop %v4000
    %v4002 = vmul.f32 1.0, %v4001
    %v4003 = vxor.u32 %v3994, 2147483648
    %v4004 = vmul.f32 %v4003, 1.442695
    %v4005 = vpow.pop %v4004
    %v4006 = vadd.f32 %v4005, 1.0
    %v4007 = vrcp.pop %v4006
    %v4008 = vmul.f32 1.0, %v4007
    %v4009 = vtanh.pop %v3995
    %v4010 = vxor.u32 %v3996, 2147483648
    %v4011 = vmul.f32 %v4010, 1.442695
    %v4012 = vpow.pop %v4011
    %v4013 = vadd.f32 %v4012, 1.0
    %v4014 = vrcp.pop %v4013
    %v4015 = vmul.f32 1.0, %v4014
    %v4016 = vmul.f32 %v4008, %v3710
    %v4017 = vmul.f32 %v4002, %v4009
    %v4018 = vadd.f32 %v4016, %v4017
    %v4019 = vtanh.pop %v4018
    %v4020 = vmul.f32 %v4015, %v4019
    %4021 = vst [vmem:[#allocation2 + $0x8] sm:$0xff] %v4020
    %v4022 = vld [vmem:[#allocation3 + $0x40] sm:$0xff]
    %v4023 = vld [vmem:[#allocation3 + $0x48] sm:$0xff]
    %v4024 = vld [vmem:[#allocation3 + $0x50] sm:$0xff]
    %v4025 = vld [vmem:[#allocation3 + $0x58] sm:$0xff]
    %v4026 = vpack.c.bf16 %v4020, %v4020
    %v4027 = vld [vmem:[#allocation12] sm:$0xff]
    %v4028 = vld [vmem:[#allocation12 + $0x8] sm:$0xff]
    %v4029 = vld [vmem:[#allocation12 + $0x10] sm:$0xff]
    %v4030 = vld [vmem:[#allocation12 + $0x18] sm:$0xff]
    %v4031 = vld [vmem:[#allocation12 + $0x20] sm:$0xff]
    %v4032 = vld [vmem:[#allocation12 + $0x28] sm:$0xff]
    %v4033 = vld [vmem:[#allocation12 + $0x30] sm:$0xff]
    %v4034 = vld [vmem:[#allocation12 + $0x38] sm:$0xff]
    %v4035 = vld [vmem:[#allocation12 + $0x40] sm:$0xff]
    %v4036 = vld [vmem:[#allocation12 + $0x48] sm:$0xff]
    %v4037 = vld [vmem:[#allocation12 + $0x50] sm:$0xff]
    %v4038 = vld [vmem:[#allocation12 + $0x58] sm:$0xff]
    %v4039 = vld [vmem:[#allocation12 + $0x60] sm:$0xff]
    %v4040 = vld [vmem:[#allocation12 + $0x68] sm:$0xff]
    %v4041 = vld [vmem:[#allocation12 + $0x70] sm:$0xff]
    %v4042 = vld [vmem:[#allocation12 + $0x78] sm:$0xff]
    %v4043 = vld [vmem:[#allocation12 + $0x80] sm:$0xff]
    %v4044 = vld [vmem:[#allocation12 + $0x88] sm:$0xff]
    %v4045 = vld [vmem:[#allocation12 + $0x90] sm:$0xff]
    %v4046 = vld [vmem:[#allocation12 + $0x98] sm:$0xff]
    %v4047 = vld [vmem:[#allocation12 + $0xa0] sm:$0xff]
    %v4048 = vld [vmem:[#allocation12 + $0xa8] sm:$0xff]
    %v4049 = vld [vmem:[#allocation12 + $0xb0] sm:$0xff]
    %v4050 = vld [vmem:[#allocation12 + $0xb8] sm:$0xff]
    %v4051 = vld [vmem:[#allocation12 + $0xc0] sm:$0xff]
    %v4052 = vld [vmem:[#allocation12 + $0xc8] sm:$0xff]
    %v4053 = vld [vmem:[#allocation12 + $0xd0] sm:$0xff]
    %v4054 = vld [vmem:[#allocation12 + $0xd8] sm:$0xff]
    %v4055 = vld [vmem:[#allocation12 + $0xe0] sm:$0xff]
    %v4056 = vld [vmem:[#allocation12 + $0xe8] sm:$0xff]
    %v4057 = vld [vmem:[#allocation12 + $0xf0] sm:$0xff]
    %v4058 = vld [vmem:[#allocation12 + $0xf8] sm:$0xff]
    %v4091 = vunpack.c.l.b16 %v4027
    %v4092 = vunpack.c.h.b16 %v4027
    %v4093 = vunpack.c.l.b16 %v4028
    %v4094 = vunpack.c.h.b16 %v4028
    %v4095 = vunpack.c.l.b16 %v4029
    %v4096 = vunpack.c.h.b16 %v4029
    %v4097 = vunpack.c.l.b16 %v4030
    %v4098 = vunpack.c.h.b16 %v4030
    %v4099 = vunpack.c.l.b16 %v4031
    %v4100 = vunpack.c.h.b16 %v4031
    %v4101 = vunpack.c.l.b16 %v4032
    %v4102 = vunpack.c.h.b16 %v4032
    %v4103 = vunpack.c.l.b16 %v4033
    %v4104 = vunpack.c.h.b16 %v4033
    %v4105 = vunpack.c.l.b16 %v4034
    %v4106 = vunpack.c.h.b16 %v4034
    %v4107 = vunpack.c.l.b16 %v4035
    %v4108 = vunpack.c.h.b16 %v4035
    %v4109 = vunpack.c.l.b16 %v4036
    %v4110 = vunpack.c.h.b16 %v4036
    %v4111 = vunpack.c.l.b16 %v4037
    %v4112 = vunpack.c.h.b16 %v4037
    %v4113 = vunpack.c.l.b16 %v4038
    %v4114 = vunpack.c.h.b16 %v4038
    %v4115 = vunpack.c.l.b16 %v4039
    %v4116 = vunpack.c.h.b16 %v4039
    %v4117 = vunpack.c.l.b16 %v4040
    %v4118 = vunpack.c.h.b16 %v4040
    %v4119 = vunpack.c.l.b16 %v4041
    %v4120 = vunpack.c.h.b16 %v4041
    %v4121 = vunpack.c.l.b16 %v4042
    %v4122 = vunpack.c.h.b16 %v4042
    %v4123 = vunpack.c.l.b16 %v4043
    %v4124 = vunpack.c.h.b16 %v4043
    %v4125 = vunpack.c.l.b16 %v4044
    %v4126 = vunpack.c.h.b16 %v4044
    %v4127 = vunpack.c.l.b16 %v4045
    %v4128 = vunpack.c.h.b16 %v4045
    %v4129 = vunpack.c.l.b16 %v4046
    %v4130 = vunpack.c.h.b16 %v4046
    %v4131 = vunpack.c.l.b16 %v4047
    %v4132 = vunpack.c.h.b16 %v4047
    %v4133 = vunpack.c.l.b16 %v4048
    %v4134 = vunpack.c.h.b16 %v4048
    %v4135 = vunpack.c.l.b16 %v4049
    %v4136 = vunpack.c.h.b16 %v4049
    %v4137 = vunpack.c.l.b16 %v4050
    %v4138 = vunpack.c.h.b16 %v4050
    %v4139 = vunpack.c.l.b16 %v4051
    %v4140 = vunpack.c.h.b16 %v4051
    %v4141 = vunpack.c.l.b16 %v4052
    %v4142 = vunpack.c.h.b16 %v4052
    %v4143 = vunpack.c.l.b16 %v4053
    %v4144 = vunpack.c.h.b16 %v4053
    %v4145 = vunpack.c.l.b16 %v4054
    %v4146 = vunpack.c.h.b16 %v4054
    %v4147 = vunpack.c.l.b16 %v4055
    %v4148 = vunpack.c.h.b16 %v4055
    %v4149 = vunpack.c.l.b16 %v4056
    %v4150 = vunpack.c.h.b16 %v4056
    %v4151 = vunpack.c.l.b16 %v4057
    %v4152 = vunpack.c.h.b16 %v4057
    %v4153 = vunpack.c.l.b16 %v4058
    %v4154 = vunpack.c.h.b16 %v4058
    %v4155 = vpack.c.b16 %v4095, %v4091
    %v4156 = vpack.c.b16 %v4096, %v4092
    %v4157 = vpack.c.b16 %v4097, %v4093
    %v4158 = vpack.c.b16 %v4098, %v4094
    %v4159 = vpack.c.b16 %v4103, %v4099
    %v4160 = vpack.c.b16 %v4104, %v4100
    %v4161 = vpack.c.b16 %v4105, %v4101
    %v4162 = vpack.c.b16 %v4106, %v4102
    %v4163 = vpack.c.b16 %v4111, %v4107
    %v4164 = vpack.c.b16 %v4112, %v4108
    %v4165 = vpack.c.b16 %v4113, %v4109
    %v4166 = vpack.c.b16 %v4114, %v4110
    %v4167 = vpack.c.b16 %v4119, %v4115
    %v4168 = vpack.c.b16 %v4120, %v4116
    %v4169 = vpack.c.b16 %v4121, %v4117
    %v4170 = vpack.c.b16 %v4122, %v4118
    %v4171 = vpack.c.b16 %v4127, %v4123
    %v4172 = vpack.c.b16 %v4128, %v4124
    %v4173 = vpack.c.b16 %v4129, %v4125
    %v4174 = vpack.c.b16 %v4130, %v4126
    %v4175 = vpack.c.b16 %v4135, %v4131
    %v4176 = vpack.c.b16 %v4136, %v4132
    %v4177 = vpack.c.b16 %v4137, %v4133
    %v4178 = vpack.c.b16 %v4138, %v4134
    %v4179 = vpack.c.b16 %v4143, %v4139
    %v4180 = vpack.c.b16 %v4144, %v4140
    %v4181 = vpack.c.b16 %v4145, %v4141
    %v4182 = vpack.c.b16 %v4146, %v4142
    %v4183 = vpack.c.b16 %v4151, %v4147
    %v4184 = vpack.c.b16 %v4152, %v4148
    %v4185 = vpack.c.b16 %v4153, %v4149
    %v4186 = vpack.c.b16 %v4154, %v4150
    %4219 = vmatprep.subr.bf16.mxu0 %v4156
    %4220 = vmatpush1.bf16.msra.mxu0 %v4155
    %4221 = vmatprep.subr.bf16.mxu0 %v4160
    %4222 = vmatpush1.bf16.msra.mxu0 %v4159
    %4223 = vmatprep.subr.bf16.mxu0 %v4164
    %4224 = vmatpush1.bf16.msra.mxu0 %v4163
    %4225 = vmatprep.subr.bf16.mxu0 %v4168
    %4226 = vmatpush1.bf16.msra.mxu0 %v4167
    %4227 = vmatprep.subr.bf16.mxu0 %v4172
    %4228 = vmatpush1.bf16.msra.mxu0 %v4171
    %4229 = vmatprep.subr.bf16.mxu0 %v4176
    %4230 = vmatpush1.bf16.msra.mxu0 %v4175
    %4231 = vmatprep.subr.bf16.mxu0 %v4180
    %4232 = vmatpush1.bf16.msra.mxu0 %v4179
    %4233 = vmatprep.subr.bf16.mxu0 %v4184
    %4234 = vmatpush1.bf16.msra.mxu0 %v4183
    %4235 = vmatprep.subr.bf16.mxu0 0
    %4236 = vmatpush1.bf16.msra.mxu0 0
    %4237 = vmatprep.subr.bf16.mxu0 0
    %4238 = vmatpush1.bf16.msra.mxu0 0
    %4239 = vmatprep.subr.bf16.mxu0 0
    %4240 = vmatpush1.bf16.msra.mxu0 0
    %4241 = vmatprep.subr.bf16.mxu0 0
    %4242 = vmatpush1.bf16.msra.mxu0 0
    %4243 = vmatprep.subr.bf16.mxu0 0
    %4244 = vmatpush1.bf16.msra.mxu0 0
    %4245 = vmatprep.subr.bf16.mxu0 0
    %4246 = vmatpush1.bf16.msra.mxu0 0
    %4247 = vmatprep.subr.bf16.mxu0 0
    %4248 = vmatpush1.bf16.msra.mxu0 0
    %4249 = vmatprep.subr.bf16.mxu0 0
    %4250 = vmatpush1.bf16.msra.mxu0 0
    %4251 = vmatprep.mubr.bf16.mxu0 0
    %4252 = vmatmul.mubr.bf16.gmra.mrb[0].mxu0 %v4026
    %v4253 = vpop.f32.mrb[0].mxu0
    %v4254 = vadd.f32 0.0, %v4253
    %v4255 = vpop.f32.mrb[0].mxu0
    %v4256 = vadd.f32 0.0, %v4255
    %v4257 = vpop.f32.mrb[0].mxu0
    %v4258 = vpop.f32.mrb[0].mxu0
    %4259 = vdwg.mxu0
    %4260 = vmatprep.subr.bf16.mxu0 %v4158
    %4261 = vmatpush1.bf16.msra.mxu0 %v4157
    %4262 = vmatprep.subr.bf16.mxu0 %v4162
    %4263 = vmatpush1.bf16.msra.mxu0 %v4161
    %4264 = vmatprep.subr.bf16.mxu0 %v4166
    %4265 = vmatpush1.bf16.msra.mxu0 %v4165
    %4266 = vmatprep.subr.bf16.mxu0 %v4170
    %4267 = vmatpush1.bf16.msra.mxu0 %v4169
    %4268 = vmatprep.subr.bf16.mxu0 %v4174
    %4269 = vmatpush1.bf16.msra.mxu0 %v4173
    %4270 = vmatprep.subr.bf16.mxu0 %v4178
    %4271 = vmatpush1.bf16.msra.mxu0 %v4177
    %4272 = vmatprep.subr.bf16.mxu0 %v4182
    %4273 = vmatpush1.bf16.msra.mxu0 %v4181
    %4274 = vmatprep.subr.bf16.mxu0 %v4186
    %4275 = vmatpush1.bf16.msra.mxu0 %v4185
    %4276 = vmatprep.subr.bf16.mxu0 0
    %4277 = vmatpush1.bf16.msra.mxu0 0
    %4278 = vmatprep.subr.bf16.mxu0 0
    %4279 = vmatpush1.bf16.msra.mxu0 0
    %4280 = vmatprep.subr.bf16.mxu0 0
    %4281 = vmatpush1.bf16.msra.mxu0 0
    %4282 = vmatprep.subr.bf16.mxu0 0
    %4283 = vmatpush1.bf16.msra.mxu0 0
    %4284 = vmatprep.subr.bf16.mxu0 0
    %4285 = vmatpush1.bf16.msra.mxu0 0
    %4286 = vmatprep.subr.bf16.mxu0 0
    %4287 = vmatpush1.bf16.msra.mxu0 0
    %4288 = vmatprep.subr.bf16.mxu0 0
    %4289 = vmatpush1.bf16.msra.mxu0 0
    %4290 = vmatprep.subr.bf16.mxu0 0
    %4291 = vmatpush1.bf16.msra.mxu0 0
    %4292 = vmatprep.mubr.bf16.mxu0 0
    %4293 = vmatmul.mubr.bf16.gmra.mrb[0].mxu0 %v4026
    %v4294 = vpop.f32.mrb[0].mxu0
    %v4295 = vadd.f32 0.0, %v4294
    %v4296 = vpop.f32.mrb[0].mxu0
    %v4297 = vadd.f32 0.0, %v4296
    %v4298 = vpop.f32.mrb[0].mxu0
    %v4299 = vpop.f32.mrb[0].mxu0
    %4300 = vdwg.mxu0
    %v4301 = vadd.f32 %v4022, %v4254
    %v4302 = vadd.f32 %v4023, %v4256
    %v4303 = vadd.f32 %v4024, %v4295
    %v4304 = vadd.f32 %v4025, %v4297
    %v4305 = vxor.u32 %v4301, 2147483648
    %v4306 = vmul.f32 %v4305, 1.442695
    %v4307 = vpow.pop %v4306
    %v4308 = vadd.f32 %v4307, 1.0
    %v4309 = vrcp.pop %v4308
    %v4310 = vmul.f32 1.0, %v4309
    %v4311 = vxor.u32 %v4302, 2147483648
    %v4312 = vmul.f32 %v4311, 1.442695
    %v4313 = vpow.pop %v4312
    %v4314 = vadd.f32 %v4313, 1.0
    %v4315 = vrcp.pop %v4314
    %v4316 = vmul.f32 1.0, %v4315
    %v4317 = vtanh.pop %v4303
    %v4318 = vxor.u32 %v4304, 2147483648
    %v4319 = vmul.f32 %v4318, 1.442695
    %v4320 = vpow.pop %v4319
    %v4321 = vadd.f32 %v4320, 1.0
    %v4322 = vrcp.pop %v4321
    %v4323 = vmul.f32 1.0, %v4322
    %v4324 = vmul.f32 %v4316, %v4018
    %v4325 = vmul.f32 %v4310, %v4317
    %v4326 = vadd.f32 %v4324, %v4325
    %v4327 = vtanh.pop %v4326
    %v4328 = vmul.f32 %v4323, %v4327
    %4329 = vst [vmem:[#allocation2 + $0x10] sm:$0xff] %v4328
    %v4330 = vld [vmem:[#allocation3 + $0x60] sm:$0xff]
    %v4331 = vld [vmem:[#allocation3 + $0x68] sm:$0xff]
    %v4332 = vld [vmem:[#allocation3 + $0x70] sm:$0xff]
    %v4333 = vld [vmem:[#allocation3 + $0x78] sm:$0xff]
    %v4334 = vpack.c.bf16 %v4328, %v4328
    %v4335 = vld [vmem:[#allocation12] sm:$0xff]
    %v4336 = vld [vmem:[#allocation12 + $0x8] sm:$0xff]
    %v4337 = vld [vmem:[#allocation12 + $0x10] sm:$0xff]
    %v4338 = vld [vmem:[#allocation12 + $0x18] sm:$0xff]
    %v4339 = vld [vmem:[#allocation12 + $0x20] sm:$0xff]
    %v4340 = vld [vmem:[#allocation12 + $0x28] sm:$0xff]
    %v4341 = vld [vmem:[#allocation12 + $0x30] sm:$0xff]
    %v4342 = vld [vmem:[#allocation12 + $0x38] sm:$0xff]
    %v4343 = vld [vmem:[#allocation12 + $0x40] sm:$0xff]
    %v4344 = vld [vmem:[#allocation12 + $0x48] sm:$0xff]
    %v4345 = vld [vmem:[#allocation12 + $0x50] sm:$0xff]
    %v4346 = vld [vmem:[#allocation12 + $0x58] sm:$0xff]
    %v4347 = vld [vmem:[#allocation12 + $0x60] sm:$0xff]
    %v4348 = vld [vmem:[#allocation12 + $0x68] sm:$0xff]
    %v4349 = vld [vmem:[#allocation12 + $0x70] sm:$0xff]
    %v4350 = vld [vmem:[#allocation12 + $0x78] sm:$0xff]
    %v4351 = vld [vmem:[#allocation12 + $0x80] sm:$0xff]
    %v4352 = vld [vmem:[#allocation12 + $0x88] sm:$0xff]
    %v4353 = vld [vmem:[#allocation12 + $0x90] sm:$0xff]
    %v4354 = vld [vmem:[#allocation12 + $0x98] sm:$0xff]
    %v4355 = vld [vmem:[#allocation12 + $0xa0] sm:$0xff]
    %v4356 = vld [vmem:[#allocation12 + $0xa8] sm:$0xff]
    %v4357 = vld [vmem:[#allocation12 + $0xb0] sm:$0xff]
    %v4358 = vld [vmem:[#allocation12 + $0xb8] sm:$0xff]
    %v4359 = vld [vmem:[#allocation12 + $0xc0] sm:$0xff]
    %v4360 = vld [vmem:[#allocation12 + $0xc8] sm:$0xff]
    %v4361 = vld [vmem:[#allocation12 + $0xd0] sm:$0xff]
    %v4362 = vld [vmem:[#allocation12 + $0xd8] sm:$0xff]
    %v4363 = vld [vmem:[#allocation12 + $0xe0] sm:$0xff]
    %v4364 = vld [vmem:[#allocation12 + $0xe8] sm:$0xff]
    %v4365 = vld [vmem:[#allocation12 + $0xf0] sm:$0xff]
    %v4366 = vld [vmem:[#allocation12 + $0xf8] sm:$0xff]
    %v4399 = vunpack.c.l.b16 %v4335
    %v4400 = vunpack.c.h.b16 %v4335
    %v4401 = vunpack.c.l.b16 %v4336
    %v4402 = vunpack.c.h.b16 %v4336
    %v4403 = vunpack.c.l.b16 %v4337
    %v4404 = vunpack.c.h.b16 %v4337
    %v4405 = vunpack.c.l.b16 %v4338
    %v4406 = vunpack.c.h.b16 %v4338
    %v4407 = vunpack.c.l.b16 %v4339
    %v4408 = vunpack.c.h.b16 %v4339
    %v4409 = vunpack.c.l.b16 %v4340
    %v4410 = vunpack.c.h.b16 %v4340
    %v4411 = vunpack.c.l.b16 %v4341
    %v4412 = vunpack.c.h.b16 %v4341
    %v4413 = vunpack.c.l.b16 %v4342
    %v4414 = vunpack.c.h.b16 %v4342
    %v4415 = vunpack.c.l.b16 %v4343
    %v4416 = vunpack.c.h.b16 %v4343
    %v4417 = vunpack.c.l.b16 %v4344
    %v4418 = vunpack.c.h.b16 %v4344
    %v4419 = vunpack.c.l.b16 %v4345
    %v4420 = vunpack.c.h.b16 %v4345
    %v4421 = vunpack.c.l.b16 %v4346
    %v4422 = vunpack.c.h.b16 %v4346
    %v4423 = vunpack.c.l.b16 %v4347
    %v4424 = vunpack.c.h.b16 %v4347
    %v4425 = vunpack.c.l.b16 %v4348
    %v4426 = vunpack.c.h.b16 %v4348
    %v4427 = vunpack.c.l.b16 %v4349
    %v4428 = vunpack.c.h.b16 %v4349
    %v4429 = vunpack.c.l.b16 %v4350
    %v4430 = vunpack.c.h.b16 %v4350
    %v4431 = vunpack.c.l.b16 %v4351
    %v4432 = vunpack.c.h.b16 %v4351
    %v4433 = vunpack.c.l.b16 %v4352
    %v4434 = vunpack.c.h.b16 %v4352
    %v4435 = vunpack.c.l.b16 %v4353
    %v4436 = vunpack.c.h.b16 %v4353
    %v4437 = vunpack.c.l.b16 %v4354
    %v4438 = vunpack.c.h.b16 %v4354
    %v4439 = vunpack.c.l.b16 %v4355
    %v4440 = vunpack.c.h.b16 %v4355
    %v4441 = vunpack.c.l.b16 %v4356
    %v4442 = vunpack.c.h.b16 %v4356
    %v4443 = vunpack.c.l.b16 %v4357
    %v4444 = vunpack.c.h.b16 %v4357
    %v4445 = vunpack.c.l.b16 %v4358
    %v4446 = vunpack.c.h.b16 %v4358
    %v4447 = vunpack.c.l.b16 %v4359
    %v4448 = vunpack.c.h.b16 %v4359
    %v4449 = vunpack.c.l.b16 %v4360
    %v4450 = vunpack.c.h.b16 %v4360
    %v4451 = vunpack.c.l.b16 %v4361
    %v4452 = vunpack.c.h.b16 %v4361
    %v4453 = vunpack.c.l.b16 %v4362
    %v4454 = vunpack.c.h.b16 %v4362
    %v4455 = vunpack.c.l.b16 %v4363
    %v4456 = vunpack.c.h.b16 %v4363
    %v4457 = vunpack.c.l.b16 %v4364
    %v4458 = vunpack.c.h.b16 %v4364
    %v4459 = vunpack.c.l.b16 %v4365
    %v4460 = vunpack.c.h.b16 %v4365
    %v4461 = vunpack.c.l.b16 %v4366
    %v4462 = vunpack.c.h.b16 %v4366
    %v4463 = vpack.c.b16 %v4403, %v4399
    %v4464 = vpack.c.b16 %v4404, %v4400
    %v4465 = vpack.c.b16 %v4405, %v4401
    %v4466 = vpack.c.b16 %v4406, %v4402
    %v4467 = vpack.c.b16 %v4411, %v4407
    %v4468 = vpack.c.b16 %v4412, %v4408
    %v4469 = vpack.c.b16 %v4413, %v4409
    %v4470 = vpack.c.b16 %v4414, %v4410
    %v4471 = vpack.c.b16 %v4419, %v4415
    %v4472 = vpack.c.b16 %v4420, %v4416
    %v4473 = vpack.c.b16 %v4421, %v4417
    %v4474 = vpack.c.b16 %v4422, %v4418
    %v4475 = vpack.c.b16 %v4427, %v4423
    %v4476 = vpack.c.b16 %v4428, %v4424
    %v4477 = vpack.c.b16 %v4429, %v4425
    %v4478 = vpack.c.b16 %v4430, %v4426
    %v4479 = vpack.c.b16 %v4435, %v4431
    %v4480 = vpack.c.b16 %v4436, %v4432
    %v4481 = vpack.c.b16 %v4437, %v4433
    %v4482 = vpack.c.b16 %v4438, %v4434
    %v4483 = vpack.c.b16 %v4443, %v4439
    %v4484 = vpack.c.b16 %v4444, %v4440
    %v4485 = vpack.c.b16 %v4445, %v4441
    %v4486 = vpack.c.b16 %v4446, %v4442
    %v4487 = vpack.c.b16 %v4451, %v4447
    %v4488 = vpack.c.b16 %v4452, %v4448
    %v4489 = vpack.c.b16 %v4453, %v4449
    %v4490 = vpack.c.b16 %v4454, %v4450
    %v4491 = vpack.c.b16 %v4459, %v4455
    %v4492 = vpack.c.b16 %v4460, %v4456
    %v4493 = vpack.c.b16 %v4461, %v4457
    %v4494 = vpack.c.b16 %v4462, %v4458
    %4527 = vmatprep.subr.bf16.mxu0 %v4464
    %4528 = vmatpush1.bf16.msra.mxu0 %v4463
    %4529 = vmatprep.subr.bf16.mxu0 %v4468
    %4530 = vmatpush1.bf16.msra.mxu0 %v4467
    %4531 = vmatprep.subr.bf16.mxu0 %v4472
    %4532 = vmatpush1.bf16.msra.mxu0 %v4471
    %4533 = vmatprep.subr.bf16.mxu0 %v4476
    %4534 = vmatpush1.bf16.msra.mxu0 %v4475
    %4535 = vmatprep.subr.bf16.mxu0 %v4480
    %4536 = vmatpush1.bf16.msra.mxu0 %v4479
    %4537 = vmatprep.subr.bf16.mxu0 %v4484
    %4538 = vmatpush1.bf16.msra.mxu0 %v4483
    %4539 = vmatprep.subr.bf16.mxu0 %v4488
    %4540 = vmatpush1.bf16.msra.mxu0 %v4487
    %4541 = vmatprep.subr.bf16.mxu0 %v4492
    %4542 = vmatpush1.bf16.msra.mxu0 %v4491
    %4543 = vmatprep.subr.bf16.mxu0 0
    %4544 = vmatpush1.bf16.msra.mxu0 0
    %4545 = vmatprep.subr.bf16.mxu0 0
    %4546 = vmatpush1.bf16.msra.mxu0 0
    %4547 = vmatprep.subr.bf16.mxu0 0
    %4548 = vmatpush1.bf16.msra.mxu0 0
    %4549 = vmatprep.subr.bf16.mxu0 0
    %4550 = vmatpush1.bf16.msra.mxu0 0
    %4551 = vmatprep.subr.bf16.mxu0 0
    %4552 = vmatpush1.bf16.msra.mxu0 0
    %4553 = vmatprep.subr.bf16.mxu0 0
    %4554 = vmatpush1.bf16.msra.mxu0 0
    %4555 = vmatprep.subr.bf16.mxu0 0
    %4556 = vmatpush1.bf16.msra.mxu0 0
    %4557 = vmatprep.subr.bf16.mxu0 0
    %4558 = vmatpush1.bf16.msra.mxu0 0
    %4559 = vmatprep.mubr.bf16.mxu0 0
    %4560 = vmatmul.mubr.bf16.gmra.mrb[0].mxu0 %v4334
    %v4561 = vpop.f32.mrb[0].mxu0
    %v4562 = vadd.f32 0.0, %v4561
    %v4563 = vpop.f32.mrb[0].mxu0
    %v4564 = vadd.f32 0.0, %v4563
    %v4565 = vpop.f32.mrb[0].mxu0
    %v4566 = vpop.f32.mrb[0].mxu0
    %4567 = vdwg.mxu0
    %4568 = vmatprep.subr.bf16.mxu0 %v4466
    %4569 = vmatpush1.bf16.msra.mxu0 %v4465
    %4570 = vmatprep.subr.bf16.mxu0 %v4470
    %4571 = vmatpush1.bf16.msra.mxu0 %v4469
    %4572 = vmatprep.subr.bf16.mxu0 %v4474
    %4573 = vmatpush1.bf16.msra.mxu0 %v4473
    %4574 = vmatprep.subr.bf16.mxu0 %v4478
    %4575 = vmatpush1.bf16.msra.mxu0 %v4477
    %4576 = vmatprep.subr.bf16.mxu0 %v4482
    %4577 = vmatpush1.bf16.msra.mxu0 %v4481
    %4578 = vmatprep.subr.bf16.mxu0 %v4486
    %4579 = vmatpush1.bf16.msra.mxu0 %v4485
    %4580 = vmatprep.subr.bf16.mxu0 %v4490
    %4581 = vmatpush1.bf16.msra.mxu0 %v4489
    %4582 = vmatprep.subr.bf16.mxu0 %v4494
    %4583 = vmatpush1.bf16.msra.mxu0 %v4493
    %4584 = vmatprep.subr.bf16.mxu0 0
    %4585 = vmatpush1.bf16.msra.mxu0 0
    %4586 = vmatprep.subr.bf16.mxu0 0
    %4587 = vmatpush1.bf16.msra.mxu0 0
    %4588 = vmatprep.subr.bf16.mxu0 0
    %4589 = vmatpush1.bf16.msra.mxu0 0
    %4590 = vmatprep.subr.bf16.mxu0 0
    %4591 = vmatpush1.bf16.msra.mxu0 0
    %4592 = vmatprep.subr.bf16.mxu0 0
    %4593 = vmatpush1.bf16.msra.mxu0 0
    %4594 = vmatprep.subr.bf16.mxu0 0
    %4595 = vmatpush1.bf16.msra.mxu0 0
    %4596 = vmatprep.subr.bf16.mxu0 0
    %4597 = vmatpush1.bf16.msra.mxu0 0
    %4598 = vmatprep.subr.bf16.mxu0 0
    %4599 = vmatpush1.bf16.msra.mxu0 0
    %4600 = vmatprep.mubr.bf16.mxu0 0
    %4601 = vmatmul.mubr.bf16.gmra.mrb[0].mxu0 %v4334
    %v4602 = vpop.f32.mrb[0].mxu0
    %v4603 = vadd.f32 0.0, %v4602
    %v4604 = vpop.f32.mrb[0].mxu0
    %v4605 = vadd.f32 0.0, %v4604
    %v4606 = vpop.f32.mrb[0].mxu0
    %v4607 = vpop.f32.mrb[0].mxu0
    %4608 = vdwg.mxu0
    %v4609 = vadd.f32 %v4330, %v4562
    %v4610 = vadd.f32 %v4331, %v4564
    %v4611 = vadd.f32 %v4332, %v4603
    %v4612 = vadd.f32 %v4333, %v4605
    %v4613 = vxor.u32 %v4609, 2147483648
    %v4614 = vmul.f32 %v4613, 1.442695
    %v4615 = vpow.pop %v4614
    %v4616 = vadd.f32 %v4615, 1.0
    %v4617 = vrcp.pop %v4616
    %v4618 = vmul.f32 1.0, %v4617
    %v4619 = vxor.u32 %v4610, 2147483648
    %v4620 = vmul.f32 %v4619, 1.442695
    %v4621 = vpow.pop %v4620
    %v4622 = vadd.f32 %v4621, 1.0
    %v4623 = vrcp.pop %v4622
    %v4624 = vmul.f32 1.0, %v4623
    %v4625 = vtanh.pop %v4611
    %v4626 = vxor.u32 %v4612, 2147483648
    %v4627 = vmul.f32 %v4626, 1.442695
    %v4628 = vpow.pop %v4627
    %v4629 = vadd.f32 %v4628, 1.0
    %v4630 = vrcp.pop %v4629
    %v4631 = vmul.f32 1.0, %v4630
    %v4632 = vmul.f32 %v4624, %v4326
    %v4633 = vmul.f32 %v4618, %v4625
    %v4634 = vadd.f32 %v4632, %v4633
    %v4635 = vtanh.pop %v4634
    %v4636 = vmul.f32 %v4631, %v4635
    %4637 = vst [vmem:[#allocation2 + $0x18] sm:$0xff] %v4636
    %v4638 = vld [vmem:[#allocation3 + $0x80] sm:$0xff]
    %v4639 = vld [vmem:[#allocation3 + $0x88] sm:$0xff]
    %v4640 = vld [vmem:[#allocation3 + $0x90] sm:$0xff]
    %v4641 = vld [vmem:[#allocation3 + $0x98] sm:$0xff]
    %v4642 = vpack.c.bf16 %v4636, %v4636
    %v4643 = vld [vmem:[#allocation12] sm:$0xff]
    %v4644 = vld [vmem:[#allocation12 + $0x8] sm:$0xff]
    %v4645 = vld [vmem:[#allocation12 + $0x10] sm:$0xff]
    %v4646 = vld [vmem:[#allocation12 + $0x18] sm:$0xff]
    %v4647 = vld [vmem:[#allocation12 + $0x20] sm:$0xff]
    %v4648 = vld [vmem:[#allocation12 + $0x28] sm:$0xff]
    %v4649 = vld [vmem:[#allocation12 + $0x30] sm:$0xff]
    %v4650 = vld [vmem:[#allocation12 + $0x38] sm:$0xff]
    %v4651 = vld [vmem:[#allocation12 + $0x40] sm:$0xff]
    %v4652 = vld [vmem:[#allocation12 + $0x48] sm:$0xff]
    %v4653 = vld [vmem:[#allocation12 + $0x50] sm:$0xff]
    %v4654 = vld [vmem:[#allocation12 + $0x58] sm:$0xff]
    %v4655 = vld [vmem:[#allocation12 + $0x60] sm:$0xff]
    %v4656 = vld [vmem:[#allocation12 + $0x68] sm:$0xff]
    %v4657 = vld [vmem:[#allocation12 + $0x70] sm:$0xff]
    %v4658 = vld [vmem:[#allocation12 + $0x78] sm:$0xff]
    %v4659 = vld [vmem:[#allocation12 + $0x80] sm:$0xff]
    %v4660 = vld [vmem:[#allocation12 + $0x88] sm:$0xff]
    %v4661 = vld [vmem:[#allocation12 + $0x90] sm:$0xff]
    %v4662 = vld [vmem:[#allocation12 + $0x98] sm:$0xff]
    %v4663 = vld [vmem:[#allocation12 + $0xa0] sm:$0xff]
    %v4664 = vld [vmem:[#allocation12 + $0xa8] sm:$0xff]
    %v4665 = vld [vmem:[#allocation12 + $0xb0] sm:$0xff]
    %v4666 = vld [vmem:[#allocation12 + $0xb8] sm:$0xff]
    %v4667 = vld [vmem:[#allocation12 + $0xc0] sm:$0xff]
    %v4668 = vld [vmem:[#allocation12 + $0xc8] sm:$0xff]
    %v4669 = vld [vmem:[#allocation12 + $0xd0] sm:$0xff]
    %v4670 = vld [vmem:[#allocation12 + $0xd8] sm:$0xff]
    %v4671 = vld [vmem:[#allocation12 + $0xe0] sm:$0xff]
    %v4672 = vld [vmem:[#allocation12 + $0xe8] sm:$0xff]
    %v4673 = vld [vmem:[#allocation12 + $0xf0] sm:$0xff]
    %v4674 = vld [vmem:[#allocation12 + $0xf8] sm:$0xff]
    %v4707 = vunpack.c.l.b16 %v4643
    %v4708 = vunpack.c.h.b16 %v4643
    %v4709 = vunpack.c.l.b16 %v4644
    %v4710 = vunpack.c.h.b16 %v4644
    %v4711 = vunpack.c.l.b16 %v4645
    %v4712 = vunpack.c.h.b16 %v4645
    %v4713 = vunpack.c.l.b16 %v4646
    %v4714 = vunpack.c.h.b16 %v4646
    %v4715 = vunpack.c.l.b16 %v4647
    %v4716 = vunpack.c.h.b16 %v4647
    %v4717 = vunpack.c.l.b16 %v4648
    %v4718 = vunpack.c.h.b16 %v4648
    %v4719 = vunpack.c.l.b16 %v4649
    %v4720 = vunpack.c.h.b16 %v4649
    %v4721 = vunpack.c.l.b16 %v4650
    %v4722 = vunpack.c.h.b16 %v4650
    %v4723 = vunpack.c.l.b16 %v4651
    %v4724 = vunpack.c.h.b16 %v4651
    %v4725 = vunpack.c.l.b16 %v4652
    %v4726 = vunpack.c.h.b16 %v4652
    %v4727 = vunpack.c.l.b16 %v4653
    %v4728 = vunpack.c.h.b16 %v4653
    %v4729 = vunpack.c.l.b16 %v4654
    %v4730 = vunpack.c.h.b16 %v4654
    %v4731 = vunpack.c.l.b16 %v4655
    %v4732 = vunpack.c.h.b16 %v4655
    %v4733 = vunpack.c.l.b16 %v4656
    %v4734 = vunpack.c.h.b16 %v4656
    %v4735 = vunpack.c.l.b16 %v4657
    %v4736 = vunpack.c.h.b16 %v4657
    %v4737 = vunpack.c.l.b16 %v4658
    %v4738 = vunpack.c.h.b16 %v4658
    %v4739 = vunpack.c.l.b16 %v4659
    %v4740 = vunpack.c.h.b16 %v4659
    %v4741 = vunpack.c.l.b16 %v4660
    %v4742 = vunpack.c.h.b16 %v4660
    %v4743 = vunpack.c.l.b16 %v4661
    %v4744 = vunpack.c.h.b16 %v4661
    %v4745 = vunpack.c.l.b16 %v4662
    %v4746 = vunpack.c.h.b16 %v4662
    %v4747 = vunpack.c.l.b16 %v4663
    %v4748 = vunpack.c.h.b16 %v4663
    %v4749 = vunpack.c.l.b16 %v4664
    %v4750 = vunpack.c.h.b16 %v4664
    %v4751 = vunpack.c.l.b16 %v4665
    %v4752 = vunpack.c.h.b16 %v4665
    %v4753 = vunpack.c.l.b16 %v4666
    %v4754 = vunpack.c.h.b16 %v4666
    %v4755 = vunpack.c.l.b16 %v4667
    %v4756 = vunpack.c.h.b16 %v4667
    %v4757 = vunpack.c.l.b16 %v4668
    %v4758 = vunpack.c.h.b16 %v4668
    %v4759 = vunpack.c.l.b16 %v4669
    %v4760 = vunpack.c.h.b16 %v4669
    %v4761 = vunpack.c.l.b16 %v4670
    %v4762 = vunpack.c.h.b16 %v4670
    %v4763 = vunpack.c.l.b16 %v4671
    %v4764 = vunpack.c.h.b16 %v4671
    %v4765 = vunpack.c.l.b16 %v4672
    %v4766 = vunpack.c.h.b16 %v4672
    %v4767 = vunpack.c.l.b16 %v4673
    %v4768 = vunpack.c.h.b16 %v4673
    %v4769 = vunpack.c.l.b16 %v4674
    %v4770 = vunpack.c.h.b16 %v4674
    %v4771 = vpack.c.b16 %v4711, %v4707
    %v4772 = vpack.c.b16 %v4712, %v4708
    %v4773 = vpack.c.b16 %v4713, %v4709
    %v4774 = vpack.c.b16 %v4714, %v4710
    %v4775 = vpack.c.b16 %v4719, %v4715
    %v4776 = vpack.c.b16 %v4720, %v4716
    %v4777 = vpack.c.b16 %v4721, %v4717
    %v4778 = vpack.c.b16 %v4722, %v4718
    %v4779 = vpack.c.b16 %v4727, %v4723
    %v4780 = vpack.c.b16 %v4728, %v4724
    %v4781 = vpack.c.b16 %v4729, %v4725
    %v4782 = vpack.c.b16 %v4730, %v4726
    %v4783 = vpack.c.b16 %v4735, %v4731
    %v4784 = vpack.c.b16 %v4736, %v4732
    %v4785 = vpack.c.b16 %v4737, %v4733
    %v4786 = vpack.c.b16 %v4738, %v4734
    %v4787 = vpack.c.b16 %v4743, %v4739
    %v4788 = vpack.c.b16 %v4744, %v4740
    %v4789 = vpack.c.b16 %v4745, %v4741
    %v4790 = vpack.c.b16 %v4746, %v4742
    %v4791 = vpack.c.b16 %v4751, %v4747
    %v4792 = vpack.c.b16 %v4752, %v4748
    %v4793 = vpack.c.b16 %v4753, %v4749
    %v4794 = vpack.c.b16 %v4754, %v4750
    %v4795 = vpack.c.b16 %v4759, %v4755
    %v4796 = vpack.c.b16 %v4760, %v4756
    %v4797 = vpack.c.b16 %v4761, %v4757
    %v4798 = vpack.c.b16 %v4762, %v4758
    %v4799 = vpack.c.b16 %v4767, %v4763
    %v4800 = vpack.c.b16 %v4768, %v4764
    %v4801 = vpack.c.b16 %v4769, %v4765
    %v4802 = vpack.c.b16 %v4770, %v4766
    %4835 = vmatprep.subr.bf16.mxu0 %v4772
    %4836 = vmatpush1.bf16.msra.mxu0 %v4771
    %4837 = vmatprep.subr.bf16.mxu0 %v4776
    %4838 = vmatpush1.bf16.msra.mxu0 %v4775
    %4839 = vmatprep.subr.bf16.mxu0 %v4780
    %4840 = vmatpush1.bf16.msra.mxu0 %v4779
    %4841 = vmatprep.subr.bf16.mxu0 %v4784
    %4842 = vmatpush1.bf16.msra.mxu0 %v4783
    %4843 = vmatprep.subr.bf16.mxu0 %v4788
    %4844 = vmatpush1.bf16.msra.mxu0 %v4787
    %4845 = vmatprep.subr.bf16.mxu0 %v4792
    %4846 = vmatpush1.bf16.msra.mxu0 %v4791
    %4847 = vmatprep.subr.bf16.mxu0 %v4796
    %4848 = vmatpush1.bf16.msra.mxu0 %v4795
    %4849 = vmatprep.subr.bf16.mxu0 %v4800
    %4850 = vmatpush1.bf16.msra.mxu0 %v4799
    %4851 = vmatprep.subr.bf16.mxu0 0
    %4852 = vmatpush1.bf16.msra.mxu0 0
    %4853 = vmatprep.subr.bf16.mxu0 0
    %4854 = vmatpush1.bf16.msra.mxu0 0
    %4855 = vmatprep.subr.bf16.mxu0 0
    %4856 = vmatpush1.bf16.msra.mxu0 0
    %4857 = vmatprep.subr.bf16.mxu0 0
    %4858 = vmatpush1.bf16.msra.mxu0 0
    %4859 = vmatprep.subr.bf16.mxu0 0
    %4860 = vmatpush1.bf16.msra.mxu0 0
    %4861 = vmatprep.subr.bf16.mxu0 0
    %4862 = vmatpush1.bf16.msra.mxu0 0
    %4863 = vmatprep.subr.bf16.mxu0 0
    %4864 = vmatpush1.bf16.msra.mxu0 0
    %4865 = vmatprep.subr.bf16.mxu0 0
    %4866 = vmatpush1.bf16.msra.mxu0 0
    %4867 = vmatprep.mubr.bf16.mxu0 0
    %4868 = vmatmul.mubr.bf16.gmra.mrb[0].mxu0 %v4642
    %v4869 = vpop.f32.mrb[0].mxu0
    %v4870 = vadd.f32 0.0, %v4869
    %v4871 = vpop.f32.mrb[0].mxu0
    %v4872 = vadd.f32 0.0, %v4871
    %v4873 = vpop.f32.mrb[0].mxu0
    %v4874 = vpop.f32.mrb[0].mxu0
    %4875 = vdwg.mxu0
    %4876 = vmatprep.subr.bf16.mxu0 %v4774
    %4877 = vmatpush1.bf16.msra.mxu0 %v4773
    %4878 = vmatprep.subr.bf16.mxu0 %v4778
    %4879 = vmatpush1.bf16.msra.mxu0 %v4777
    %4880 = vmatprep.subr.bf16.mxu0 %v4782
    %4881 = vmatpush1.bf16.msra.mxu0 %v4781
    %4882 = vmatprep.subr.bf16.mxu0 %v4786
    %4883 = vmatpush1.bf16.msra.mxu0 %v4785
    %4884 = vmatprep.subr.bf16.mxu0 %v4790
    %4885 = vmatpush1.bf16.msra.mxu0 %v4789
    %4886 = vmatprep.subr.bf16.mxu0 %v4794
    %4887 = vmatpush1.bf16.msra.mxu0 %v4793
    %4888 = vmatprep.subr.bf16.mxu0 %v4798
    %4889 = vmatpush1.bf16.msra.mxu0 %v4797
    %4890 = vmatprep.subr.bf16.mxu0 %v4802
    %4891 = vmatpush1.bf16.msra.mxu0 %v4801
    %4892 = vmatprep.subr.bf16.mxu0 0
    %4893 = vmatpush1.bf16.msra.mxu0 0
    %4894 = vmatprep.subr.bf16.mxu0 0
    %4895 = vmatpush1.bf16.msra.mxu0 0
    %4896 = vmatprep.subr.bf16.mxu0 0
    %4897 = vmatpush1.bf16.msra.mxu0 0
    %4898 = vmatprep.subr.bf16.mxu0 0
    %4899 = vmatpush1.bf16.msra.mxu0 0
    %4900 = vmatprep.subr.bf16.mxu0 0
    %4901 = vmatpush1.bf16.msra.mxu0 0
    %4902 = vmatprep.subr.bf16.mxu0 0
    %4903 = vmatpush1.bf16.msra.mxu0 0
    %4904 = vmatprep.subr.bf16.mxu0 0
    %4905 = vmatpush1.bf16.msra.mxu0 0
    %4906 = vmatprep.subr.bf16.mxu0 0
    %4907 = vmatpush1.bf16.msra.mxu0 0
    %4908 = vmatprep.mubr.bf16.mxu0 0
    %4909 = vmatmul.mubr.bf16.gmra.mrb[0].mxu0 %v4642
    %v4910 = vpop.f32.mrb[0].mxu0
    %v4911 = vadd.f32 0.0, %v4910
    %v4912 = vpop.f32.mrb[0].mxu0
    %v4913 = vadd.f32 0.0, %v4912
    %v4914 = vpop.f32.mrb[0].mxu0
    %v4915 = vpop.f32.mrb[0].mxu0
    %4916 = vdwg.mxu0
    %v4917 = vadd.f32 %v4638, %v4870
    %v4918 = vadd.f32 %v4639, %v4872
    %v4919 = vadd.f32 %v4640, %v4911
    %v4920 = vadd.f32 %v4641, %v4913
    %v4921 = vxor.u32 %v4917, 2147483648
    %v4922 = vmul.f32 %v4921, 1.442695
    %v4923 = vpow.pop %v4922
    %v4924 = vadd.f32 %v4923, 1.0
    %v4925 = vrcp.pop %v4924
    %v4926 = vmul.f32 1.0, %v4925
    %v4927 = vxor.u32 %v4918, 2147483648
    %v4928 = vmul.f32 %v4927, 1.442695
    %v4929 = vpow.pop %v4928
    %v4930 = vadd.f32 %v4929, 1.0
    %v4931 = vrcp.pop %v4930
    %v4932 = vmul.f32 1.0, %v4931
    %v4933 = vtanh.pop %v4919
    %v4934 = vxor.u32 %v4920, 2147483648
    %v4935 = vmul.f32 %v4934, 1.442695
    %v4936 = vpow.pop %v4935
    %v4937 = vadd.f32 %v4936, 1.0
    %v4938 = vrcp.pop %v4937
    %v4939 = vmul.f32 1.0, %v4938
    %v4940 = vmul.f32 %v4932, %v4634
    %v4941 = vmul.f32 %v4926, %v4933
    %v4942 = vadd.f32 %v4940, %v4941
    %v4943 = vtanh.pop %v4942
    %v4944 = vmul.f32 %v4939, %v4943
    %4945 = vst [vmem:[#allocation2 + $0x20] sm:$0xff] %v4944
    %v4946 = vld [vmem:[#allocation3 + $0xa0] sm:$0xff]
    %v4947 = vld [vmem:[#allocation3 + $0xa8] sm:$0xff]
    %v4948 = vld [vmem:[#allocation3 + $0xb0] sm:$0xff]
    %v4949 = vld [vmem:[#allocation3 + $0xb8] sm:$0xff]
    %v4950 = vpack.c.bf16 %v4944, %v4944
    %v4951 = vld [vmem:[#allocation12] sm:$0xff]
    %v4952 = vld [vmem:[#allocation12 + $0x8] sm:$0xff]
    %v4953 = vld [vmem:[#allocation12 + $0x10] sm:$0xff]
    %v4954 = vld [vmem:[#allocation12 + $0x18] sm:$0xff]
    %v4955 = vld [vmem:[#allocation12 + $0x20] sm:$0xff]
    %v4956 = vld [vmem:[#allocation12 + $0x28] sm:$0xff]
    %v4957 = vld [vmem:[#allocation12 + $0x30] sm:$0xff]
    %v4958 = vld [vmem:[#allocation12 + $0x38] sm:$0xff]
    %v4959 = vld [vmem:[#allocation12 + $0x40] sm:$0xff]
    %v4960 = vld [vmem:[#allocation12 + $0x48] sm:$0xff]
    %v4961 = vld [vmem:[#allocation12 + $0x50] sm:$0xff]
    %v4962 = vld [vmem:[#allocation12 + $0x58] sm:$0xff]
    %v4963 = vld [vmem:[#allocation12 + $0x60] sm:$0xff]
    %v4964 = vld [vmem:[#allocation12 + $0x68] sm:$0xff]
    %v4965 = vld [vmem:[#allocation12 + $0x70] sm:$0xff]
    %v4966 = vld [vmem:[#allocation12 + $0x78] sm:$0xff]
    %v4967 = vld [vmem:[#allocation12 + $0x80] sm:$0xff]
    %v4968 = vld [vmem:[#allocation12 + $0x88] sm:$0xff]
    %v4969 = vld [vmem:[#allocation12 + $0x90] sm:$0xff]
    %v4970 = vld [vmem:[#allocation12 + $0x98] sm:$0xff]
    %v4971 = vld [vmem:[#allocation12 + $0xa0] sm:$0xff]
    %v4972 = vld [vmem:[#allocation12 + $0xa8] sm:$0xff]
    %v4973 = vld [vmem:[#allocation12 + $0xb0] sm:$0xff]
    %v4974 = vld [vmem:[#allocation12 + $0xb8] sm:$0xff]
    %v4975 = vld [vmem:[#allocation12 + $0xc0] sm:$0xff]
    %v4976 = vld [vmem:[#allocation12 + $0xc8] sm:$0xff]
    %v4977 = vld [vmem:[#allocation12 + $0xd0] sm:$0xff]
    %v4978 = vld [vmem:[#allocation12 + $0xd8] sm:$0xff]
    %v4979 = vld [vmem:[#allocation12 + $0xe0] sm:$0xff]
    %v4980 = vld [vmem:[#allocation12 + $0xe8] sm:$0xff]
    %v4981 = vld [vmem:[#allocation12 + $0xf0] sm:$0xff]
    %v4982 = vld [vmem:[#allocation12 + $0xf8] sm:$0xff]
    %v5015 = vunpack.c.l.b16 %v4951
    %v5016 = vunpack.c.h.b16 %v4951
    %v5017 = vunpack.c.l.b16 %v4952
    %v5018 = vunpack.c.h.b16 %v4952
    %v5019 = vunpack.c.l.b16 %v4953
    %v5020 = vunpack.c.h.b16 %v4953
    %v5021 = vunpack.c.l.b16 %v4954
    %v5022 = vunpack.c.h.b16 %v4954
    %v5023 = vunpack.c.l.b16 %v4955
    %v5024 = vunpack.c.h.b16 %v4955
    %v5025 = vunpack.c.l.b16 %v4956
    %v5026 = vunpack.c.h.b16 %v4956
    %v5027 = vunpack.c.l.b16 %v4957
    %v5028 = vunpack.c.h.b16 %v4957
    %v5029 = vunpack.c.l.b16 %v4958
    %v5030 = vunpack.c.h.b16 %v4958
    %v5031 = vunpack.c.l.b16 %v4959
    %v5032 = vunpack.c.h.b16 %v4959
    %v5033 = vunpack.c.l.b16 %v4960
    %v5034 = vunpack.c.h.b16 %v4960
    %v5035 = vunpack.c.l.b16 %v4961
    %v5036 = vunpack.c.h.b16 %v4961
    %v5037 = vunpack.c.l.b16 %v4962
    %v5038 = vunpack.c.h.b16 %v4962
    %v5039 = vunpack.c.l.b16 %v4963
    %v5040 = vunpack.c.h.b16 %v4963
    %v5041 = vunpack.c.l.b16 %v4964
    %v5042 = vunpack.c.h.b16 %v4964
    %v5043 = vunpack.c.l.b16 %v4965
    %v5044 = vunpack.c.h.b16 %v4965
    %v5045 = vunpack.c.l.b16 %v4966
    %v5046 = vunpack.c.h.b16 %v4966
    %v5047 = vunpack.c.l.b16 %v4967
    %v5048 = vunpack.c.h.b16 %v4967
    %v5049 = vunpack.c.l.b16 %v4968
    %v5050 = vunpack.c.h.b16 %v4968
    %v5051 = vunpack.c.l.b16 %v4969
    %v5052 = vunpack.c.h.b16 %v4969
    %v5053 = vunpack.c.l.b16 %v4970
    %v5054 = vunpack.c.h.b16 %v4970
    %v5055 = vunpack.c.l.b16 %v4971
    %v5056 = vunpack.c.h.b16 %v4971
    %v5057 = vunpack.c.l.b16 %v4972
    %v5058 = vunpack.c.h.b16 %v4972
    %v5059 = vunpack.c.l.b16 %v4973
    %v5060 = vunpack.c.h.b16 %v4973
    %v5061 = vunpack.c.l.b16 %v4974
    %v5062 = vunpack.c.h.b16 %v4974
    %v5063 = vunpack.c.l.b16 %v4975
    %v5064 = vunpack.c.h.b16 %v4975
    %v5065 = vunpack.c.l.b16 %v4976
    %v5066 = vunpack.c.h.b16 %v4976
    %v5067 = vunpack.c.l.b16 %v4977
    %v5068 = vunpack.c.h.b16 %v4977
    %v5069 = vunpack.c.l.b16 %v4978
    %v5070 = vunpack.c.h.b16 %v4978
    %v5071 = vunpack.c.l.b16 %v4979
    %v5072 = vunpack.c.h.b16 %v4979
    %v5073 = vunpack.c.l.b16 %v4980
    %v5074 = vunpack.c.h.b16 %v4980
    %v5075 = vunpack.c.l.b16 %v4981
    %v5076 = vunpack.c.h.b16 %v4981
    %v5077 = vunpack.c.l.b16 %v4982
    %v5078 = vunpack.c.h.b16 %v4982
    %v5079 = vpack.c.b16 %v5019, %v5015
    %v5080 = vpack.c.b16 %v5020, %v5016
    %v5081 = vpack.c.b16 %v5021, %v5017
    %v5082 = vpack.c.b16 %v5022, %v5018
    %v5083 = vpack.c.b16 %v5027, %v5023
    %v5084 = vpack.c.b16 %v5028, %v5024
    %v5085 = vpack.c.b16 %v5029, %v5025
    %v5086 = vpack.c.b16 %v5030, %v5026
    %v5087 = vpack.c.b16 %v5035, %v5031
    %v5088 = vpack.c.b16 %v5036, %v5032
    %v5089 = vpack.c.b16 %v5037, %v5033
    %v5090 = vpack.c.b16 %v5038, %v5034
    %v5091 = vpack.c.b16 %v5043, %v5039
    %v5092 = vpack.c.b16 %v5044, %v5040
    %v5093 = vpack.c.b16 %v5045, %v5041
    %v5094 = vpack.c.b16 %v5046, %v5042
    %v5095 = vpack.c.b16 %v5051, %v5047
    %v5096 = vpack.c.b16 %v5052, %v5048
    %v5097 = vpack.c.b16 %v5053, %v5049
    %v5098 = vpack.c.b16 %v5054, %v5050
    %v5099 = vpack.c.b16 %v5059, %v5055
    %v5100 = vpack.c.b16 %v5060, %v5056
    %v5101 = vpack.c.b16 %v5061, %v5057
    %v5102 = vpack.c.b16 %v5062, %v5058
    %v5103 = vpack.c.b16 %v5067, %v5063
    %v5104 = vpack.c.b16 %v5068, %v5064
    %v5105 = vpack.c.b16 %v5069, %v5065
    %v5106 = vpack.c.b16 %v5070, %v5066
    %v5107 = vpack.c.b16 %v5075, %v5071
    %v5108 = vpack.c.b16 %v5076, %v5072
    %v5109 = vpack.c.b16 %v5077, %v5073
    %v5110 = vpack.c.b16 %v5078, %v5074
    %5143 = vmatprep.subr.bf16.mxu0 %v5080
    %5144 = vmatpush1.bf16.msra.mxu0 %v5079
    %5145 = vmatprep.subr.bf16.mxu0 %v5084
    %5146 = vmatpush1.bf16.msra.mxu0 %v5083
    %5147 = vmatprep.subr.bf16.mxu0 %v5088
    %5148 = vmatpush1.bf16.msra.mxu0 %v5087
    %5149 = vmatprep.subr.bf16.mxu0 %v5092
    %5150 = vmatpush1.bf16.msra.mxu0 %v5091
    %5151 = vmatprep.subr.bf16.mxu0 %v5096
    %5152 = vmatpush1.bf16.msra.mxu0 %v5095
    %5153 = vmatprep.subr.bf16.mxu0 %v5100
    %5154 = vmatpush1.bf16.msra.mxu0 %v5099
    %5155 = vmatprep.subr.bf16.mxu0 %v5104
    %5156 = vmatpush1.bf16.msra.mxu0 %v5103
    %5157 = vmatprep.subr.bf16.mxu0 %v5108
    %5158 = vmatpush1.bf16.msra.mxu0 %v5107
    %5159 = vmatprep.subr.bf16.mxu0 0
    %5160 = vmatpush1.bf16.msra.mxu0 0
    %5161 = vmatprep.subr.bf16.mxu0 0
    %5162 = vmatpush1.bf16.msra.mxu0 0
    %5163 = vmatprep.subr.bf16.mxu0 0
    %5164 = vmatpush1.bf16.msra.mxu0 0
    %5165 = vmatprep.subr.bf16.mxu0 0
    %5166 = vmatpush1.bf16.msra.mxu0 0
    %5167 = vmatprep.subr.bf16.mxu0 0
    %5168 = vmatpush1.bf16.msra.mxu0 0
    %5169 = vmatprep.subr.bf16.mxu0 0
    %5170 = vmatpush1.bf16.msra.mxu0 0
    %5171 = vmatprep.subr.bf16.mxu0 0
    %5172 = vmatpush1.bf16.msra.mxu0 0
    %5173 = vmatprep.subr.bf16.mxu0 0
    %5174 = vmatpush1.bf16.msra.mxu0 0
    %5175 = vmatprep.mubr.bf16.mxu0 0
    %5176 = vmatmul.mubr.bf16.gmra.mrb[0].mxu0 %v4950
    %v5177 = vpop.f32.mrb[0].mxu0
    %v5178 = vadd.f32 0.0, %v5177
    %v5179 = vpop.f32.mrb[0].mxu0
    %v5180 = vadd.f32 0.0, %v5179
    %v5181 = vpop.f32.mrb[0].mxu0
    %v5182 = vpop.f32.mrb[0].mxu0
    %5183 = vdwg.mxu0
    %5184 = vmatprep.subr.bf16.mxu0 %v5082
    %5185 = vmatpush1.bf16.msra.mxu0 %v5081
    %5186 = vmatprep.subr.bf16.mxu0 %v5086
    %5187 = vmatpush1.bf16.msra.mxu0 %v5085
    %5188 = vmatprep.subr.bf16.mxu0 %v5090
    %5189 = vmatpush1.bf16.msra.mxu0 %v5089
    %5190 = vmatprep.subr.bf16.mxu0 %v5094
    %5191 = vmatpush1.bf16.msra.mxu0 %v5093
    %5192 = vmatprep.subr.bf16.mxu0 %v5098
    %5193 = vmatpush1.bf16.msra.mxu0 %v5097
    %5194 = vmatprep.subr.bf16.mxu0 %v5102
    %5195 = vmatpush1.bf16.msra.mxu0 %v5101
    %5196 = vmatprep.subr.bf16.mxu0 %v5106
    %5197 = vmatpush1.bf16.msra.mxu0 %v5105
    %5198 = vmatprep.subr.bf16.mxu0 %v5110
    %5199 = vmatpush1.bf16.msra.mxu0 %v5109
    %5200 = vmatprep.subr.bf16.mxu0 0
    %5201 = vmatpush1.bf16.msra.mxu0 0
    %5202 = vmatprep.subr.bf16.mxu0 0
    %5203 = vmatpush1.bf16.msra.mxu0 0
    %5204 = vmatprep.subr.bf16.mxu0 0
    %5205 = vmatpush1.bf16.msra.mxu0 0
    %5206 = vmatprep.subr.bf16.mxu0 0
    %5207 = vmatpush1.bf16.msra.mxu0 0
    %5208 = vmatprep.subr.bf16.mxu0 0
    %5209 = vmatpush1.bf16.msra.mxu0 0
    %5210 = vmatprep.subr.bf16.mxu0 0
    %5211 = vmatpush1.bf16.msra.mxu0 0
    %5212 = vmatprep.subr.bf16.mxu0 0
    %5213 = vmatpush1.bf16.msra.mxu0 0
    %5214 = vmatprep.subr.bf16.mxu0 0
    %5215 = vmatpush1.bf16.msra.mxu0 0
    %5216 = vmatprep.mubr.bf16.mxu0 0
    %5217 = vmatmul.mubr.bf16.gmra.mrb[0].mxu0 %v4950
    %v5218 = vpop.f32.mrb[0].mxu0
    %v5219 = vadd.f32 0.0, %v5218
    %v5220 = vpop.f32.mrb[0].mxu0
    %v5221 = vadd.f32 0.0, %v5220
    %v5222 = vpop.f32.mrb[0].mxu0
    %v5223 = vpop.f32.mrb[0].mxu0
    %5224 = vdwg.mxu0
    %v5225 = vadd.f32 %v4946, %v5178
    %v5226 = vadd.f32 %v4947, %v5180
    %v5227 = vadd.f32 %v4948, %v5219
    %v5228 = vadd.f32 %v4949, %v5221
    %v5229 = vxor.u32 %v5225, 2147483648
    %v5230 = vmul.f32 %v5229, 1.442695
    %v5231 = vpow.pop %v5230
    %v5232 = vadd.f32 %v5231, 1.0
    %v5233 = vrcp.pop %v5232
    %v5234 = vmul.f32 1.0, %v5233
    %v5235 = vxor.u32 %v5226, 2147483648
    %v5236 = vmul.f32 %v5235, 1.442695
    %v5237 = vpow.pop %v5236
    %v5238 = vadd.f32 %v5237, 1.0
    %v5239 = vrcp.pop %v5238
    %v5240 = vmul.f32 1.0, %v5239
    %v5241 = vtanh.pop %v5227
    %v5242 = vxor.u32 %v5228, 2147483648
    %v5243 = vmul.f32 %v5242, 1.442695
    %v5244 = vpow.pop %v5243
    %v5245 = vadd.f32 %v5244, 1.0
    %v5246 = vrcp.pop %v5245
    %v5247 = vmul.f32 1.0, %v5246
    %v5248 = vmul.f32 %v5240, %v4942
    %v5249 = vmul.f32 %v5234, %v5241
    %v5250 = vadd.f32 %v5248, %v5249
    %v5251 = vtanh.pop %v5250
    %v5252 = vmul.f32 %v5247, %v5251
    %5253 = vst [vmem:[#allocation2 + $0x28] sm:$0xff] %v5252
    %v5254 = vld [vmem:[#allocation3 + $0xc0] sm:$0xff]
    %v5255 = vld [vmem:[#allocation3 + $0xc8] sm:$0xff]
    %v5256 = vld [vmem:[#allocation3 + $0xd0] sm:$0xff]
    %v5257 = vld [vmem:[#allocation3 + $0xd8] sm:$0xff]
    %v5258 = vpack.c.bf16 %v5252, %v5252
    %v5259 = vld [vmem:[#allocation12] sm:$0xff]
    %v5260 = vld [vmem:[#allocation12 + $0x8] sm:$0xff]
    %v5261 = vld [vmem:[#allocation12 + $0x10] sm:$0xff]
    %v5262 = vld [vmem:[#allocation12 + $0x18] sm:$0xff]
    %v5263 = vld [vmem:[#allocation12 + $0x20] sm:$0xff]
    %v5264 = vld [vmem:[#allocation12 + $0x28] sm:$0xff]
    %v5265 = vld [vmem:[#allocation12 + $0x30] sm:$0xff]
    %v5266 = vld [vmem:[#allocation12 + $0x38] sm:$0xff]
    %v5267 = vld [vmem:[#allocation12 + $0x40] sm:$0xff]
    %v5268 = vld [vmem:[#allocation12 + $0x48] sm:$0xff]
    %v5269 = vld [vmem:[#allocation12 + $0x50] sm:$0xff]
    %v5270 = vld [vmem:[#allocation12 + $0x58] sm:$0xff]
    %v5271 = vld [vmem:[#allocation12 + $0x60] sm:$0xff]
    %v5272 = vld [vmem:[#allocation12 + $0x68] sm:$0xff]
    %v5273 = vld [vmem:[#allocation12 + $0x70] sm:$0xff]
    %v5274 = vld [vmem:[#allocation12 + $0x78] sm:$0xff]
    %v5275 = vld [vmem:[#allocation12 + $0x80] sm:$0xff]
    %v5276 = vld [vmem:[#allocation12 + $0x88] sm:$0xff]
    %v5277 = vld [vmem:[#allocation12 + $0x90] sm:$0xff]
    %v5278 = vld [vmem:[#allocation12 + $0x98] sm:$0xff]
    %v5279 = vld [vmem:[#allocation12 + $0xa0] sm:$0xff]
    %v5280 = vld [vmem:[#allocation12 + $0xa8] sm:$0xff]
    %v5281 = vld [vmem:[#allocation12 + $0xb0] sm:$0xff]
    %v5282 = vld [vmem:[#allocation12 + $0xb8] sm:$0xff]
    %v5283 = vld [vmem:[#allocation12 + $0xc0] sm:$0xff]
    %v5284 = vld [vmem:[#allocation12 + $0xc8] sm:$0xff]
    %v5285 = vld [vmem:[#allocation12 + $0xd0] sm:$0xff]
    %v5286 = vld [vmem:[#allocation12 + $0xd8] sm:$0xff]
    %v5287 = vld [vmem:[#allocation12 + $0xe0] sm:$0xff]
    %v5288 = vld [vmem:[#allocation12 + $0xe8] sm:$0xff]
    %v5289 = vld [vmem:[#allocation12 + $0xf0] sm:$0xff]
    %v5290 = vld [vmem:[#allocation12 + $0xf8] sm:$0xff]
    %v5323 = vunpack.c.l.b16 %v5259
    %v5324 = vunpack.c.h.b16 %v5259
    %v5325 = vunpack.c.l.b16 %v5260
    %v5326 = vunpack.c.h.b16 %v5260
    %v5327 = vunpack.c.l.b16 %v5261
    %v5328 = vunpack.c.h.b16 %v5261
    %v5329 = vunpack.c.l.b16 %v5262
    %v5330 = vunpack.c.h.b16 %v5262
    %v5331 = vunpack.c.l.b16 %v5263
    %v5332 = vunpack.c.h.b16 %v5263
    %v5333 = vunpack.c.l.b16 %v5264
    %v5334 = vunpack.c.h.b16 %v5264
    %v5335 = vunpack.c.l.b16 %v5265
    %v5336 = vunpack.c.h.b16 %v5265
    %v5337 = vunpack.c.l.b16 %v5266
    %v5338 = vunpack.c.h.b16 %v5266
    %v5339 = vunpack.c.l.b16 %v5267
    %v5340 = vunpack.c.h.b16 %v5267
    %v5341 = vunpack.c.l.b16 %v5268
    %v5342 = vunpack.c.h.b16 %v5268
    %v5343 = vunpack.c.l.b16 %v5269
    %v5344 = vunpack.c.h.b16 %v5269
    %v5345 = vunpack.c.l.b16 %v5270
    %v5346 = vunpack.c.h.b16 %v5270
    %v5347 = vunpack.c.l.b16 %v5271
    %v5348 = vunpack.c.h.b16 %v5271
    %v5349 = vunpack.c.l.b16 %v5272
    %v5350 = vunpack.c.h.b16 %v5272
    %v5351 = vunpack.c.l.b16 %v5273
    %v5352 = vunpack.c.h.b16 %v5273
    %v5353 = vunpack.c.l.b16 %v5274
    %v5354 = vunpack.c.h.b16 %v5274
    %v5355 = vunpack.c.l.b16 %v5275
    %v5356 = vunpack.c.h.b16 %v5275
    %v5357 = vunpack.c.l.b16 %v5276
    %v5358 = vunpack.c.h.b16 %v5276
    %v5359 = vunpack.c.l.b16 %v5277
    %v5360 = vunpack.c.h.b16 %v5277
    %v5361 = vunpack.c.l.b16 %v5278
    %v5362 = vunpack.c.h.b16 %v5278
    %v5363 = vunpack.c.l.b16 %v5279
    %v5364 = vunpack.c.h.b16 %v5279
    %v5365 = vunpack.c.l.b16 %v5280
    %v5366 = vunpack.c.h.b16 %v5280
    %v5367 = vunpack.c.l.b16 %v5281
    %v5368 = vunpack.c.h.b16 %v5281
    %v5369 = vunpack.c.l.b16 %v5282
    %v5370 = vunpack.c.h.b16 %v5282
    %v5371 = vunpack.c.l.b16 %v5283
    %v5372 = vunpack.c.h.b16 %v5283
    %v5373 = vunpack.c.l.b16 %v5284
    %v5374 = vunpack.c.h.b16 %v5284
    %v5375 = vunpack.c.l.b16 %v5285
    %v5376 = vunpack.c.h.b16 %v5285
    %v5377 = vunpack.c.l.b16 %v5286
    %v5378 = vunpack.c.h.b16 %v5286
    %v5379 = vunpack.c.l.b16 %v5287
    %v5380 = vunpack.c.h.b16 %v5287
    %v5381 = vunpack.c.l.b16 %v5288
    %v5382 = vunpack.c.h.b16 %v5288
    %v5383 = vunpack.c.l.b16 %v5289
    %v5384 = vunpack.c.h.b16 %v5289
    %v5385 = vunpack.c.l.b16 %v5290
    %v5386 = vunpack.c.h.b16 %v5290
    %v5387 = vpack.c.b16 %v5327, %v5323
    %v5388 = vpack.c.b16 %v5328, %v5324
    %v5389 = vpack.c.b16 %v5329, %v5325
    %v5390 = vpack.c.b16 %v5330, %v5326
    %v5391 = vpack.c.b16 %v5335, %v5331
    %v5392 = vpack.c.b16 %v5336, %v5332
    %v5393 = vpack.c.b16 %v5337, %v5333
    %v5394 = vpack.c.b16 %v5338, %v5334
    %v5395 = vpack.c.b16 %v5343, %v5339
    %v5396 = vpack.c.b16 %v5344, %v5340
    %v5397 = vpack.c.b16 %v5345, %v5341
    %v5398 = vpack.c.b16 %v5346, %v5342
    %v5399 = vpack.c.b16 %v5351, %v5347
    %v5400 = vpack.c.b16 %v5352, %v5348
    %v5401 = vpack.c.b16 %v5353, %v5349
    %v5402 = vpack.c.b16 %v5354, %v5350
    %v5403 = vpack.c.b16 %v5359, %v5355
    %v5404 = vpack.c.b16 %v5360, %v5356
    %v5405 = vpack.c.b16 %v5361, %v5357
    %v5406 = vpack.c.b16 %v5362, %v5358
    %v5407 = vpack.c.b16 %v5367, %v5363
    %v5408 = vpack.c.b16 %v5368, %v5364
    %v5409 = vpack.c.b16 %v5369, %v5365
    %v5410 = vpack.c.b16 %v5370, %v5366
    %v5411 = vpack.c.b16 %v5375, %v5371
    %v5412 = vpack.c.b16 %v5376, %v5372
    %v5413 = vpack.c.b16 %v5377, %v5373
    %v5414 = vpack.c.b16 %v5378, %v5374
    %v5415 = vpack.c.b16 %v5383, %v5379
    %v5416 = vpack.c.b16 %v5384, %v5380
    %v5417 = vpack.c.b16 %v5385, %v5381
    %v5418 = vpack.c.b16 %v5386, %v5382
    %5451 = vmatprep.subr.bf16.mxu0 %v5388
    %5452 = vmatpush1.bf16.msra.mxu0 %v5387
    %5453 = vmatprep.subr.bf16.mxu0 %v5392
    %5454 = vmatpush1.bf16.msra.mxu0 %v5391
    %5455 = vmatprep.subr.bf16.mxu0 %v5396
    %5456 = vmatpush1.bf16.msra.mxu0 %v5395
    %5457 = vmatprep.subr.bf16.mxu0 %v5400
    %5458 = vmatpush1.bf16.msra.mxu0 %v5399
    %5459 = vmatprep.subr.bf16.mxu0 %v5404
    %5460 = vmatpush1.bf16.msra.mxu0 %v5403
    %5461 = vmatprep.subr.bf16.mxu0 %v5408
    %5462 = vmatpush1.bf16.msra.mxu0 %v5407
    %5463 = vmatprep.subr.bf16.mxu0 %v5412
    %5464 = vmatpush1.bf16.msra.mxu0 %v5411
    %5465 = vmatprep.subr.bf16.mxu0 %v5416
    %5466 = vmatpush1.bf16.msra.mxu0 %v5415
    %5467 = vmatprep.subr.bf16.mxu0 0
    %5468 = vmatpush1.bf16.msra.mxu0 0
    %5469 = vmatprep.subr.bf16.mxu0 0
    %5470 = vmatpush1.bf16.msra.mxu0 0
    %5471 = vmatprep.subr.bf16.mxu0 0
    %5472 = vmatpush1.bf16.msra.mxu0 0
    %5473 = vmatprep.subr.bf16.mxu0 0
    %5474 = vmatpush1.bf16.msra.mxu0 0
    %5475 = vmatprep.subr.bf16.mxu0 0
    %5476 = vmatpush1.bf16.msra.mxu0 0
    %5477 = vmatprep.subr.bf16.mxu0 0
    %5478 = vmatpush1.bf16.msra.mxu0 0
    %5479 = vmatprep.subr.bf16.mxu0 0
    %5480 = vmatpush1.bf16.msra.mxu0 0
    %5481 = vmatprep.subr.bf16.mxu0 0
    %5482 = vmatpush1.bf16.msra.mxu0 0
    %5483 = vmatprep.mubr.bf16.mxu0 0
    %5484 = vmatmul.mubr.bf16.gmra.mrb[0].mxu0 %v5258
    %v5485 = vpop.f32.mrb[0].mxu0
    %v5486 = vadd.f32 0.0, %v5485
    %v5487 = vpop.f32.mrb[0].mxu0
    %v5488 = vadd.f32 0.0, %v5487
    %v5489 = vpop.f32.mrb[0].mxu0
    %v5490 = vpop.f32.mrb[0].mxu0
    %5491 = vdwg.mxu0
    %5492 = vmatprep.subr.bf16.mxu0 %v5390
    %5493 = vmatpush1.bf16.msra.mxu0 %v5389
    %5494 = vmatprep.subr.bf16.mxu0 %v5394
    %5495 = vmatpush1.bf16.msra.mxu0 %v5393
    %5496 = vmatprep.subr.bf16.mxu0 %v5398
    %5497 = vmatpush1.bf16.msra.mxu0 %v5397
    %5498 = vmatprep.subr.bf16.mxu0 %v5402
    %5499 = vmatpush1.bf16.msra.mxu0 %v5401
    %5500 = vmatprep.subr.bf16.mxu0 %v5406
    %5501 = vmatpush1.bf16.msra.mxu0 %v5405
    %5502 = vmatprep.subr.bf16.mxu0 %v5410
    %5503 = vmatpush1.bf16.msra.mxu0 %v5409
    %5504 = vmatprep.subr.bf16.mxu0 %v5414
    %5505 = vmatpush1.bf16.msra.mxu0 %v5413
    %5506 = vmatprep.subr.bf16.mxu0 %v5418
    %5507 = vmatpush1.bf16.msra.mxu0 %v5417
    %5508 = vmatprep.subr.bf16.mxu0 0
    %5509 = vmatpush1.bf16.msra.mxu0 0
    %5510 = vmatprep.subr.bf16.mxu0 0
    %5511 = vmatpush1.bf16.msra.mxu0 0
    %5512 = vmatprep.subr.bf16.mxu0 0
    %5513 = vmatpush1.bf16.msra.mxu0 0
    %5514 = vmatprep.subr.bf16.mxu0 0
    %5515 = vmatpush1.bf16.msra.mxu0 0
    %5516 = vmatprep.subr.bf16.mxu0 0
    %5517 = vmatpush1.bf16.msra.mxu0 0
    %5518 = vmatprep.subr.bf16.mxu0 0
    %5519 = vmatpush1.bf16.msra.mxu0 0
    %5520 = vmatprep.subr.bf16.mxu0 0
    %5521 = vmatpush1.bf16.msra.mxu0 0
    %5522 = vmatprep.subr.bf16.mxu0 0
    %5523 = vmatpush1.bf16.msra.mxu0 0
    %5524 = vmatprep.mubr.bf16.mxu0 0
    %5525 = vmatmul.mubr.bf16.gmra.mrb[0].mxu0 %v5258
    %v5526 = vpop.f32.mrb[0].mxu0
    %v5527 = vadd.f32 0.0, %v5526
    %v5528 = vpop.f32.mrb[0].mxu0
    %v5529 = vadd.f32 0.0, %v5528
    %v5530 = vpop.f32.mrb[0].mxu0
    %v5531 = vpop.f32.mrb[0].mxu0
    %5532 = vdwg.mxu0
    %v5533 = vadd.f32 %v5254, %v5486
    %v5534 = vadd.f32 %v5255, %v5488
    %v5535 = vadd.f32 %v5256, %v5527
    %v5536 = vadd.f32 %v5257, %v5529
    %v5537 = vxor.u32 %v5533, 2147483648
    %v5538 = vmul.f32 %v5537, 1.442695
    %v5539 = vpow.pop %v5538
    %v5540 = vadd.f32 %v5539, 1.0
    %v5541 = vrcp.pop %v5540
    %v5542 = vmul.f32 1.0, %v5541
    %v5543 = vxor.u32 %v5534, 2147483648
    %v5544 = vmul.f32 %v5543, 1.442695
    %v5545 = vpow.pop %v5544
    %v5546 = vadd.f32 %v5545, 1.0
    %v5547 = vrcp.pop %v5546
    %v5548 = vmul.f32 1.0, %v5547
    %v5549 = vtanh.pop %v5535
    %v5550 = vxor.u32 %v5536, 2147483648
    %v5551 = vmul.f32 %v5550, 1.442695
    %v5552 = vpow.pop %v5551
    %v5553 = vadd.f32 %v5552, 1.0
    %v5554 = vrcp.pop %v5553
    %v5555 = vmul.f32 1.0, %v5554
    %v5556 = vmul.f32 %v5548, %v5250
    %v5557 = vmul.f32 %v5542, %v5549
    %v5558 = vadd.f32 %v5556, %v5557
    %v5559 = vtanh.pop %v5558
    %v5560 = vmul.f32 %v5555, %v5559
    %5561 = vst [vmem:[#allocation2 + $0x30] sm:$0xff] %v5560
    %v5562 = vld [vmem:[#allocation3 + $0xe0] sm:$0xff]
    %v5563 = vld [vmem:[#allocation3 + $0xe8] sm:$0xff]
    %v5564 = vld [vmem:[#allocation3 + $0xf0] sm:$0xff]
    %v5565 = vld [vmem:[#allocation3 + $0xf8] sm:$0xff]
    %v5566 = vpack.c.bf16 %v5560, %v5560
    %v5567 = vld [vmem:[#allocation12] sm:$0xff]
    %v5568 = vld [vmem:[#allocation12 + $0x8] sm:$0xff]
    %v5569 = vld [vmem:[#allocation12 + $0x10] sm:$0xff]
    %v5570 = vld [vmem:[#allocation12 + $0x18] sm:$0xff]
    %v5571 = vld [vmem:[#allocation12 + $0x20] sm:$0xff]
    %v5572 = vld [vmem:[#allocation12 + $0x28] sm:$0xff]
    %v5573 = vld [vmem:[#allocation12 + $0x30] sm:$0xff]
    %v5574 = vld [vmem:[#allocation12 + $0x38] sm:$0xff]
    %v5575 = vld [vmem:[#allocation12 + $0x40] sm:$0xff]
    %v5576 = vld [vmem:[#allocation12 + $0x48] sm:$0xff]
    %v5577 = vld [vmem:[#allocation12 + $0x50] sm:$0xff]
    %v5578 = vld [vmem:[#allocation12 + $0x58] sm:$0xff]
    %v5579 = vld [vmem:[#allocation12 + $0x60] sm:$0xff]
    %v5580 = vld [vmem:[#allocation12 + $0x68] sm:$0xff]
    %v5581 = vld [vmem:[#allocation12 + $0x70] sm:$0xff]
    %v5582 = vld [vmem:[#allocation12 + $0x78] sm:$0xff]
    %v5583 = vld [vmem:[#allocation12 + $0x80] sm:$0xff]
    %v5584 = vld [vmem:[#allocation12 + $0x88] sm:$0xff]
    %v5585 = vld [vmem:[#allocation12 + $0x90] sm:$0xff]
    %v5586 = vld [vmem:[#allocation12 + $0x98] sm:$0xff]
    %v5587 = vld [vmem:[#allocation12 + $0xa0] sm:$0xff]
    %v5588 = vld [vmem:[#allocation12 + $0xa8] sm:$0xff]
    %v5589 = vld [vmem:[#allocation12 + $0xb0] sm:$0xff]
    %v5590 = vld [vmem:[#allocation12 + $0xb8] sm:$0xff]
    %v5591 = vld [vmem:[#allocation12 + $0xc0] sm:$0xff]
    %v5592 = vld [vmem:[#allocation12 + $0xc8] sm:$0xff]
    %v5593 = vld [vmem:[#allocation12 + $0xd0] sm:$0xff]
    %v5594 = vld [vmem:[#allocation12 + $0xd8] sm:$0xff]
    %v5595 = vld [vmem:[#allocation12 + $0xe0] sm:$0xff]
    %v5596 = vld [vmem:[#allocation12 + $0xe8] sm:$0xff]
    %v5597 = vld [vmem:[#allocation12 + $0xf0] sm:$0xff]
    %v5598 = vld [vmem:[#allocation12 + $0xf8] sm:$0xff]
    %v5631 = vunpack.c.l.b16 %v5567
    %v5632 = vunpack.c.h.b16 %v5567
    %v5633 = vunpack.c.l.b16 %v5568
    %v5634 = vunpack.c.h.b16 %v5568
    %v5635 = vunpack.c.l.b16 %v5569
    %v5636 = vunpack.c.h.b16 %v5569
    %v5637 = vunpack.c.l.b16 %v5570
    %v5638 = vunpack.c.h.b16 %v5570
    %v5639 = vunpack.c.l.b16 %v5571
    %v5640 = vunpack.c.h.b16 %v5571
    %v5641 = vunpack.c.l.b16 %v5572
    %v5642 = vunpack.c.h.b16 %v5572
    %v5643 = vunpack.c.l.b16 %v5573
    %v5644 = vunpack.c.h.b16 %v5573
    %v5645 = vunpack.c.l.b16 %v5574
    %v5646 = vunpack.c.h.b16 %v5574
    %v5647 = vunpack.c.l.b16 %v5575
    %v5648 = vunpack.c.h.b16 %v5575
    %v5649 = vunpack.c.l.b16 %v5576
    %v5650 = vunpack.c.h.b16 %v5576
    %v5651 = vunpack.c.l.b16 %v5577
    %v5652 = vunpack.c.h.b16 %v5577
    %v5653 = vunpack.c.l.b16 %v5578
    %v5654 = vunpack.c.h.b16 %v5578
    %v5655 = vunpack.c.l.b16 %v5579
    %v5656 = vunpack.c.h.b16 %v5579
    %v5657 = vunpack.c.l.b16 %v5580
    %v5658 = vunpack.c.h.b16 %v5580
    %v5659 = vunpack.c.l.b16 %v5581
    %v5660 = vunpack.c.h.b16 %v5581
    %v5661 = vunpack.c.l.b16 %v5582
    %v5662 = vunpack.c.h.b16 %v5582
    %v5663 = vunpack.c.l.b16 %v5583
    %v5664 = vunpack.c.h.b16 %v5583
    %v5665 = vunpack.c.l.b16 %v5584
    %v5666 = vunpack.c.h.b16 %v5584
    %v5667 = vunpack.c.l.b16 %v5585
    %v5668 = vunpack.c.h.b16 %v5585
    %v5669 = vunpack.c.l.b16 %v5586
    %v5670 = vunpack.c.h.b16 %v5586
    %v5671 = vunpack.c.l.b16 %v5587
    %v5672 = vunpack.c.h.b16 %v5587
    %v5673 = vunpack.c.l.b16 %v5588
    %v5674 = vunpack.c.h.b16 %v5588
    %v5675 = vunpack.c.l.b16 %v5589
    %v5676 = vunpack.c.h.b16 %v5589
    %v5677 = vunpack.c.l.b16 %v5590
    %v5678 = vunpack.c.h.b16 %v5590
    %v5679 = vunpack.c.l.b16 %v5591
    %v5680 = vunpack.c.h.b16 %v5591
    %v5681 = vunpack.c.l.b16 %v5592
    %v5682 = vunpack.c.h.b16 %v5592
    %v5683 = vunpack.c.l.b16 %v5593
    %v5684 = vunpack.c.h.b16 %v5593
    %v5685 = vunpack.c.l.b16 %v5594
    %v5686 = vunpack.c.h.b16 %v5594
    %v5687 = vunpack.c.l.b16 %v5595
    %v5688 = vunpack.c.h.b16 %v5595
    %v5689 = vunpack.c.l.b16 %v5596
    %v5690 = vunpack.c.h.b16 %v5596
    %v5691 = vunpack.c.l.b16 %v5597
    %v5692 = vunpack.c.h.b16 %v5597
    %v5693 = vunpack.c.l.b16 %v5598
    %v5694 = vunpack.c.h.b16 %v5598
    %v5695 = vpack.c.b16 %v5635, %v5631
    %v5696 = vpack.c.b16 %v5636, %v5632
    %v5697 = vpack.c.b16 %v5637, %v5633
    %v5698 = vpack.c.b16 %v5638, %v5634
    %v5699 = vpack.c.b16 %v5643, %v5639
    %v5700 = vpack.c.b16 %v5644, %v5640
    %v5701 = vpack.c.b16 %v5645, %v5641
    %v5702 = vpack.c.b16 %v5646, %v5642
    %v5703 = vpack.c.b16 %v5651, %v5647
    %v5704 = vpack.c.b16 %v5652, %v5648
    %v5705 = vpack.c.b16 %v5653, %v5649
    %v5706 = vpack.c.b16 %v5654, %v5650
    %v5707 = vpack.c.b16 %v5659, %v5655
    %v5708 = vpack.c.b16 %v5660, %v5656
    %v5709 = vpack.c.b16 %v5661, %v5657
    %v5710 = vpack.c.b16 %v5662, %v5658
    %v5711 = vpack.c.b16 %v5667, %v5663
    %v5712 = vpack.c.b16 %v5668, %v5664
    %v5713 = vpack.c.b16 %v5669, %v5665
    %v5714 = vpack.c.b16 %v5670, %v5666
    %v5715 = vpack.c.b16 %v5675, %v5671
    %v5716 = vpack.c.b16 %v5676, %v5672
    %v5717 = vpack.c.b16 %v5677, %v5673
    %v5718 = vpack.c.b16 %v5678, %v5674
    %v5719 = vpack.c.b16 %v5683, %v5679
    %v5720 = vpack.c.b16 %v5684, %v5680
    %v5721 = vpack.c.b16 %v5685, %v5681
    %v5722 = vpack.c.b16 %v5686, %v5682
    %v5723 = vpack.c.b16 %v5691, %v5687
    %v5724 = vpack.c.b16 %v5692, %v5688
    %v5725 = vpack.c.b16 %v5693, %v5689
    %v5726 = vpack.c.b16 %v5694, %v5690
    %5759 = vmatprep.subr.bf16.mxu0 %v5696
    %5760 = vmatpush1.bf16.msra.mxu0 %v5695
    %5761 = vmatprep.subr.bf16.mxu0 %v5700
    %5762 = vmatpush1.bf16.msra.mxu0 %v5699
    %5763 = vmatprep.subr.bf16.mxu0 %v5704
    %5764 = vmatpush1.bf16.msra.mxu0 %v5703
    %5765 = vmatprep.subr.bf16.mxu0 %v5708
    %5766 = vmatpush1.bf16.msra.mxu0 %v5707
    %5767 = vmatprep.subr.bf16.mxu0 %v5712
    %5768 = vmatpush1.bf16.msra.mxu0 %v5711
    %5769 = vmatprep.subr.bf16.mxu0 %v5716
    %5770 = vmatpush1.bf16.msra.mxu0 %v5715
    %5771 = vmatprep.subr.bf16.mxu0 %v5720
    %5772 = vmatpush1.bf16.msra.mxu0 %v5719
    %5773 = vmatprep.subr.bf16.mxu0 %v5724
    %5774 = vmatpush1.bf16.msra.mxu0 %v5723
    %5775 = vmatprep.subr.bf16.mxu0 0
    %5776 = vmatpush1.bf16.msra.mxu0 0
    %5777 = vmatprep.subr.bf16.mxu0 0
    %5778 = vmatpush1.bf16.msra.mxu0 0
    %5779 = vmatprep.subr.bf16.mxu0 0
    %5780 = vmatpush1.bf16.msra.mxu0 0
    %5781 = vmatprep.subr.bf16.mxu0 0
    %5782 = vmatpush1.bf16.msra.mxu0 0
    %5783 = vmatprep.subr.bf16.mxu0 0
    %5784 = vmatpush1.bf16.msra.mxu0 0
    %5785 = vmatprep.subr.bf16.mxu0 0
    %5786 = vmatpush1.bf16.msra.mxu0 0
    %5787 = vmatprep.subr.bf16.mxu0 0
    %5788 = vmatpush1.bf16.msra.mxu0 0
    %5789 = vmatprep.subr.bf16.mxu0 0
    %5790 = vmatpush1.bf16.msra.mxu0 0
    %5791 = vmatprep.mubr.bf16.mxu0 0
    %5792 = vmatmul.mubr.bf16.gmra.mrb[0].mxu0 %v5566
    %v5793 = vpop.f32.mrb[0].mxu0
    %v5794 = vadd.f32 0.0, %v5793
    %v5795 = vpop.f32.mrb[0].mxu0
    %v5796 = vadd.f32 0.0, %v5795
    %v5797 = vpop.f32.mrb[0].mxu0
    %v5798 = vpop.f32.mrb[0].mxu0
    %5799 = vdwg.mxu0
    %5800 = vmatprep.subr.bf16.mxu0 %v5698
    %5801 = vmatpush1.bf16.msra.mxu0 %v5697
    %5802 = vmatprep.subr.bf16.mxu0 %v5702
    %5803 = vmatpush1.bf16.msra.mxu0 %v5701
    %5804 = vmatprep.subr.bf16.mxu0 %v5706
    %5805 = vmatpush1.bf16.msra.mxu0 %v5705
    %5806 = vmatprep.subr.bf16.mxu0 %v5710
    %5807 = vmatpush1.bf16.msra.mxu0 %v5709
    %5808 = vmatprep.subr.bf16.mxu0 %v5714
    %5809 = vmatpush1.bf16.msra.mxu0 %v5713
    %5810 = vmatprep.subr.bf16.mxu0 %v5718
    %5811 = vmatpush1.bf16.msra.mxu0 %v5717
    %5812 = vmatprep.subr.bf16.mxu0 %v5722
    %5813 = vmatpush1.bf16.msra.mxu0 %v5721
    %5814 = vmatprep.subr.bf16.mxu0 %v5726
    %5815 = vmatpush1.bf16.msra.mxu0 %v5725
    %5816 = vmatprep.subr.bf16.mxu0 0
    %5817 = vmatpush1.bf16.msra.mxu0 0
    %5818 = vmatprep.subr.bf16.mxu0 0
    %5819 = vmatpush1.bf16.msra.mxu0 0
    %5820 = vmatprep.subr.bf16.mxu0 0
    %5821 = vmatpush1.bf16.msra.mxu0 0
    %5822 = vmatprep.subr.bf16.mxu0 0
    %5823 = vmatpush1.bf16.msra.mxu0 0
    %5824 = vmatprep.subr.bf16.mxu0 0
    %5825 = vmatpush1.bf16.msra.mxu0 0
    %5826 = vmatprep.subr.bf16.mxu0 0
    %5827 = vmatpush1.bf16.msra.mxu0 0
    %5828 = vmatprep.subr.bf16.mxu0 0
    %5829 = vmatpush1.bf16.msra.mxu0 0
    %5830 = vmatprep.subr.bf16.mxu0 0
    %5831 = vmatpush1.bf16.msra.mxu0 0
    %5832 = vmatprep.mubr.bf16.mxu0 0
    %5833 = vmatmul.mubr.bf16.gmra.mrb[0].mxu0 %v5566
    %v5834 = vpop.f32.mrb[0].mxu0
    %v5835 = vadd.f32 0.0, %v5834
    %v5836 = vpop.f32.mrb[0].mxu0
    %v5837 = vadd.f32 0.0, %v5836
    %v5838 = vpop.f32.mrb[0].mxu0
    %v5839 = vpop.f32.mrb[0].mxu0
    %5840 = vdwg.mxu0
    %v5841 = vadd.f32 %v5562, %v5794
    %v5842 = vadd.f32 %v5563, %v5796
    %v5843 = vadd.f32 %v5564, %v5835
    %v5844 = vadd.f32 %v5565, %v5837
    %v5845 = vxor.u32 %v5841, 2147483648
    %v5846 = vmul.f32 %v5845, 1.442695
    %v5847 = vpow.pop %v5846
    %v5848 = vadd.f32 %v5847, 1.0
    %v5849 = vrcp.pop %v5848
    %v5850 = vmul.f32 1.0, %v5849
    %v5851 = vxor.u32 %v5842, 2147483648
    %v5852 = vmul.f32 %v5851, 1.442695
    %v5853 = vpow.pop %v5852
    %v5854 = vadd.f32 %v5853, 1.0
    %v5855 = vrcp.pop %v5854
    %v5856 = vmul.f32 1.0, %v5855
    %v5857 = vtanh.pop %v5843
    %v5858 = vxor.u32 %v5844, 2147483648
    %v5859 = vmul.f32 %v5858, 1.442695
    %v5860 = vpow.pop %v5859
    %v5861 = vadd.f32 %v5860, 1.0
    %v5862 = vrcp.pop %v5861
    %v5863 = vmul.f32 1.0, %v5862
    %v5864 = vmul.f32 %v5856, %v5558
    %v5865 = vmul.f32 %v5850, %v5857
    %v5866 = vadd.f32 %v5864, %v5865
    %v5867 = vtanh.pop %v5866
    %v5868 = vmul.f32 %v5863, %v5867
    %5869 = vst [vmem:[#allocation2 + $0x38] sm:$0xff] %v5868
    %v5870 = vld [vmem:[#allocation2] sm:$0xff]
    %v5871 = vld [vmem:[#allocation2 + $0x8] sm:$0xff]
    %v5872 = vld [vmem:[#allocation2 + $0x10] sm:$0xff]
    %v5873 = vld [vmem:[#allocation2 + $0x18] sm:$0xff]
    %v5874 = vld [vmem:[#allocation2 + $0x20] sm:$0xff]
    %v5875 = vld [vmem:[#allocation2 + $0x28] sm:$0xff]
    %v5876 = vld [vmem:[#allocation2 + $0x30] sm:$0xff]
    %v5877 = vld [vmem:[#allocation2 + $0x38] sm:$0xff]
    %v5878 = vpack.c.bf16 %v5871, %v5870
    %v5879 = vpack.c.bf16 %v5873, %v5872
    %v5880 = vpack.c.bf16 %v5875, %v5874
    %v5881 = vpack.c.bf16 %v5877, %v5876
    %v5882 = vld [vmem:[#allocation13] sm:$0xf]
    %v5883 = vld [vmem:[#allocation13 + $0x4] sm:$0xf]
    %v5884 = vld [vmem:[#allocation13 + $0x8] sm:$0xf]
    %v5885 = vld [vmem:[#allocation13 + $0xc] sm:$0xf]
    %v5886 = vld [vmem:[#allocation13 + $0x10] sm:$0xf]
    %v5887 = vld [vmem:[#allocation13 + $0x14] sm:$0xf]
    %v5888 = vld [vmem:[#allocation13 + $0x18] sm:$0xf]
    %v5889 = vld [vmem:[#allocation13 + $0x1c] sm:$0xf]
    %v5890 = vld [vmem:[#allocation13 + $0x20] sm:$0xf]
    %v5891 = vld [vmem:[#allocation13 + $0x24] sm:$0xf]
    %v5892 = vld [vmem:[#allocation13 + $0x28] sm:$0xf]
    %v5893 = vld [vmem:[#allocation13 + $0x2c] sm:$0xf]
    %v5894 = vld [vmem:[#allocation13 + $0x30] sm:$0xf]
    %v5895 = vld [vmem:[#allocation13 + $0x34] sm:$0xf]
    %v5896 = vld [vmem:[#allocation13 + $0x38] sm:$0xf]
    %v5897 = vld [vmem:[#allocation13 + $0x3c] sm:$0xf]
    %v5898 = vld [vmem:[%s8] sm:$0x1]
    %v5900 = vlaneseq
    %v5901 = vshrl.u32 %v5900, 7
    %v5902 = vsub.s32 0, %v5901
    %v5903 = vrot.slane %v5898, %v5902
    %v5921 = vunpack.c.l.b16 %v5882
    %v5922 = vunpack.c.l.b16 %v5883
    %v5923 = vunpack.c.l.b16 %v5884
    %v5924 = vunpack.c.l.b16 %v5885
    %v5925 = vunpack.c.l.b16 %v5886
    %v5926 = vunpack.c.l.b16 %v5887
    %v5927 = vunpack.c.l.b16 %v5888
    %v5928 = vunpack.c.l.b16 %v5889
    %v5929 = vunpack.c.l.b16 %v5890
    %v5930 = vunpack.c.l.b16 %v5891
    %v5931 = vunpack.c.l.b16 %v5892
    %v5932 = vunpack.c.l.b16 %v5893
    %v5933 = vunpack.c.l.b16 %v5894
    %v5934 = vunpack.c.l.b16 %v5895
    %v5935 = vunpack.c.l.b16 %v5896
    %v5936 = vunpack.c.l.b16 %v5897
    %v5937 = vpack.c.b16 %v5922, %v5921
    %v5938 = vpack.c.b16 %v5924, %v5923
    %v5939 = vpack.c.b16 %v5926, %v5925
    %v5940 = vpack.c.b16 %v5928, %v5927
    %v5941 = vpack.c.b16 %v5930, %v5929
    %v5942 = vpack.c.b16 %v5932, %v5931
    %v5943 = vpack.c.b16 %v5934, %v5933
    %v5944 = vpack.c.b16 %v5936, %v5935
    %5953 = vmatprep.subr.bf16.mxu0 0
    %5954 = vmatpush1.bf16.msra.mxu0 %v5937
    %5955 = vmatprep.subr.bf16.mxu0 0
    %5956 = vmatpush1.bf16.msra.mxu0 %v5938
    %5957 = vmatprep.subr.bf16.mxu0 0
    %5958 = vmatpush1.bf16.msra.mxu0 %v5939
    %5959 = vmatprep.subr.bf16.mxu0 0
    %5960 = vmatpush1.bf16.msra.mxu0 %v5940
    %5961 = vmatprep.subr.bf16.mxu0 0
    %5962 = vmatpush1.bf16.msra.mxu0 %v5941
    %5963 = vmatprep.subr.bf16.mxu0 0
    %5964 = vmatpush1.bf16.msra.mxu0 %v5942
    %5965 = vmatprep.subr.bf16.mxu0 0
    %5966 = vmatpush1.bf16.msra.mxu0 %v5943
    %5967 = vmatprep.subr.bf16.mxu0 0
    %5968 = vmatpush1.bf16.msra.mxu0 %v5944
    %5969 = vmatprep.subr.bf16.mxu0 0
    %5970 = vmatpush1.bf16.msra.mxu0 0
    %5971 = vmatprep.subr.bf16.mxu0 0
    %5972 = vmatpush1.bf16.msra.mxu0 0
    %5973 = vmatprep.subr.bf16.mxu0 0
    %5974 = vmatpush1.bf16.msra.mxu0 0
    %5975 = vmatprep.subr.bf16.mxu0 0
    %5976 = vmatpush1.bf16.msra.mxu0 0
    %5977 = vmatprep.subr.bf16.mxu0 0
    %5978 = vmatpush1.bf16.msra.mxu0 0
    %5979 = vmatprep.subr.bf16.mxu0 0
    %5980 = vmatpush1.bf16.msra.mxu0 0
    %5981 = vmatprep.subr.bf16.mxu0 0
    %5982 = vmatpush1.bf16.msra.mxu0 0
    %5983 = vmatprep.subr.bf16.mxu0 0
    %5984 = vmatpush1.bf16.msra.mxu0 0
    %5985 = vmatprep.mubr.bf16.mxu0 0
    %5986 = vmatmul.mubr.bf16.gmra.mrb[0].mxu0 %v5878
    %v5987 = vpop.f32.mrb[0].mxu0
    %v5988 = vadd.f32 %v5903, %v5987
    %v5989 = vpop.f32.mrb[0].mxu0
    %v5990 = vpop.f32.mrb[0].mxu0
    %v5991 = vadd.f32 %v5903, %v5990
    %v5992 = vpop.f32.mrb[0].mxu0
    %5993 = vmatprep.mubr.bf16.mxu0 0
    %5994 = vmatmul.mubr.bf16.gmra.mrb[0].mxu0 %v5879
    %v5995 = vpop.f32.mrb[0].mxu0
    %v5996 = vadd.f32 %v5903, %v5995
    %v5997 = vpop.f32.mrb[0].mxu0
    %v5998 = vpop.f32.mrb[0].mxu0
    %v5999 = vadd.f32 %v5903, %v5998
    %v6000 = vpop.f32.mrb[0].mxu0
    %6001 = vmatprep.mubr.bf16.mxu0 0
    %6002 = vmatmul.mubr.bf16.gmra.mrb[0].mxu0 %v5880
    %v6003 = vpop.f32.mrb[0].mxu0
    %v6004 = vadd.f32 %v5903, %v6003
    %v6005 = vpop.f32.mrb[0].mxu0
    %v6006 = vpop.f32.mrb[0].mxu0
    %v6007 = vadd.f32 %v5903, %v6006
    %v6008 = vpop.f32.mrb[0].mxu0
    %6009 = vmatprep.mubr.bf16.mxu0 0
    %6010 = vmatmul.mubr.bf16.gmra.mrb[0].mxu0 %v5881
    %v6011 = vpop.f32.mrb[0].mxu0
    %v6012 = vadd.f32 %v5903, %v6011
    %v6013 = vpop.f32.mrb[0].mxu0
    %v6014 = vpop.f32.mrb[0].mxu0
    %v6015 = vadd.f32 %v5903, %v6014
    %v6016 = vpop.f32.mrb[0].mxu0
    %6017 = vdwg.mxu0
    %6018 = vst [vmem:[#allocation15] sm:$0xff] %v5988
    %6019 = vst [vmem:[#allocation15 + $0x8] sm:$0xff] %v5991
    %6020 = vst [vmem:[#allocation15 + $0x10] sm:$0xff] %v5996
    %6021 = vst [vmem:[#allocation15 + $0x18] sm:$0xff] %v5999
    %6022 = vst [vmem:[#allocation15 + $0x20] sm:$0xff] %v6004
    %6023 = vst [vmem:[#allocation15 + $0x28] sm:$0xff] %v6007
    %6024 = vst [vmem:[#allocation15 + $0x30] sm:$0xff] %v6012
    %6025 = vst [vmem:[#allocation15 + $0x38] sm:$0xff] %v6015
    // Predicated region
    $region62: #{tpu_custom_call.1} parent=1 // pred_check
      _
    $region63: #{tpu_custom_call.1} parent=1 // pred_check_branch
      %6027 = sbr.rel (0) target = $region65
    $region64: #{tpu_custom_call.1} parent=1 // pred_region
      %s6029 = ssub.s32 1024, 1024
      %6030 = vsyncadd [#allocation6], %s6029
      %s6031 = sshll.u32 [#allocation15], 4
      %s6032 = int_to_ptr.vmem [resolvable:$true] %s6031
      %6037 = dma.vmem_to_hbm [thread:$0]  %s6032, 1024, %s9, [#allocation6], 128, 128, 8
    $region65: #{tpu_custom_call.1} parent=1 // pred_fallthru
      _
    // Predicated region
    $region66: #{tpu_custom_call.1} parent=1 // pred_check
      _
    $region67: #{tpu_custom_call.1} parent=1 // pred_check_branch
      %6039 = sbr.rel (0) target = $region69
    $region68: #{tpu_custom_call.1} parent=1 // pred_region
      %6040 = dma.done [#allocation6], 1024
    $region69: #{tpu_custom_call.1} parent=1 // pred_fallthru
      _
    %6041 = vsyncpa [#allocation5], 1
    %6042 = vsyncpa [#allocation8], 1
    %6043 = vsyncpa [#allocation11], 1
    %6044 = vsyncpa [#allocation14], 1
    %6045 = vsyncpa [#allocation6], 1

</llo_original>
